<compile_context>
chip_gen: v7x
topology: tpu7x:2x2x1
jax: 0.10.0
libtpu: 0.0.40
codegen_flags: <defaults>
</compile_context>

<pallas_src>
import math

import jax
import jax.numpy as jnp
from jax.experimental import pallas as pl
from jax.experimental.pallas import tpu as pltpu


# ----------------------------- model hyper-params ---------------------------
B = 2            # batch
N = 8            # tokens (sequence length)
C = 32           # embedding dim
NUM_HEADS = 4
HEAD_DIM = C // NUM_HEADS
MLP_RATIO = 4.0
HIDDEN = int(C * MLP_RATIO)          # 128 -> lane-dense MLP hidden
LN_EPS = 1e-5
SCALE = HEAD_DIM ** (-0.5)           # qk_scale=None -> head_dim ** -0.5
BH = B * NUM_HEADS


# ------------------------------- kernel helpers -----------------------------
def _layernorm(x, gamma, beta):
    # x: (R, C), gamma/beta: (1, C)
    mu = jnp.mean(x, axis=-1, keepdims=True)
    xc = x - mu
    var = jnp.mean(xc * xc, axis=-1, keepdims=True)
    inv = jax.lax.rsqrt(var + LN_EPS)
    return xc * inv * gamma + beta


def _gelu_exact(x):
    # PyTorch nn.GELU() default is the exact erf formulation.
    return 0.5 * x * (1.0 + jax.lax.erf(x * (1.0 / math.sqrt(2.0))))


# --------------------------------- the kernel -------------------------------
def block_kernel(x_ref,
                 g1_ref, b1_ref,                 # norm1 affine (1, C)
                 wq_ref, wk_ref, wv_ref,         # (BH, C, hd)  (scale folded into wq)
                 wp_ref, bp_ref,                 # (BH, hd, C), (1, C)
                 g2_ref, b2_ref,                 # norm2 affine (1, C)
                 w1_ref, bf1_ref,                # (C, HIDDEN), (1, HIDDEN)
                 w2_ref, bf2_ref,                # (HIDDEN, C), (1, C)
                 o_ref):                         # (B*N, C)
    x = x_ref[...]                               # (B*N, C)

    # ---- norm1 ----
    h = _layernorm(x, g1_ref[...], b1_ref[...])  # (B*N, C)

    # Head-batched view of the normalized activations.  Only LEADING dims are
    # touched (minor (N, C) tile layout unchanged) -> pure tile bookkeeping,
    # no lane/sublane relayout.
    hb = jnp.broadcast_to(h.reshape(B, 1, N, C), (B, NUM_HEADS, N, C))
    hb = hb.reshape(BH, N, C)                    # (BH, N, C)

    # ---- attention: one batched dot_general per stage (batch dim = B*H) ----
    q = jnp.einsum('xnc,xcd->xnd', hb, wq_ref[...],
                   preferred_element_type=jnp.float32)          # (BH, N, hd)
    k = jnp.einsum('xnc,xcd->xnd', hb, wk_ref[...],
                   preferred_element_type=jnp.float32)          # (BH, N, hd)
    v = jnp.einsum('xnc,xcd->xnd', hb, wv_ref[...],
                   preferred_element_type=jnp.float32)          # (BH, N, hd)

    s = jnp.einsum('xnd,xmd->xnm', q, k,
                   preferred_element_type=jnp.float32)          # (BH, N, N), pre-scaled
    m = jnp.max(s, axis=-1, keepdims=True)
    e = jnp.exp(s - m)
    p = e * pl.reciprocal(jnp.sum(e, axis=-1, keepdims=True), approx=True)

    ctx = jnp.einsum('xnm,xmd->xnd', p, v,
                     preferred_element_type=jnp.float32)        # (BH, N, hd)
    op = jnp.einsum('xnd,xdc->xnc', ctx, wp_ref[...],
                    preferred_element_type=jnp.float32)         # (BH, N, C)

    # Sum the per-head projections over the (leading) head axis: pure VALU adds,
    # no lane concatenation.
    attn = jnp.sum(op.reshape(B, NUM_HEADS, N, C), axis=1)      # (B, N, C)
    attn = attn.reshape(B * N, C) + bp_ref[...]                 # (B*N, C)

    x1 = x + attn                                               # residual 1

    # ---- norm2 + MLP ----
    h2 = _layernorm(x1, g2_ref[...], b2_ref[...])
    z = jnp.dot(h2, w1_ref[...],
                preferred_element_type=jnp.float32) + bf1_ref[...]   # (B*N, 128)
    z = _gelu_exact(z)
    z = jnp.dot(z, w2_ref[...],
                preferred_element_type=jnp.float32) + bf2_ref[...]   # (B*N, C)
    o_ref[...] = x1 + z                                         # residual 2


# --------------------------------- wrapper ----------------------------------
def block_forward(x, params):
    (g1, b1, wqkv, wproj, bproj, g2, b2, w1, bf1, w2, bf2) = params

    # Host-side weight restructuring: per-head weight slabs with heads on the
    # leading dim, softmax scale folded into Wq.  Done once, outside the kernel.
    def per_head_in(wcol):                                  # (C, C) -> (H, C, hd)
        return wcol.reshape(C, NUM_HEADS, HEAD_DIM).transpose(1, 0, 2)

    wq = per_head_in(wqkv[:, 0 * C:1 * C]) * SCALE
    wk = per_head_in(wqkv[:, 1 * C:2 * C])
    wv = per_head_in(wqkv[:, 2 * C:3 * C])
    wp = wproj.reshape(NUM_HEADS, HEAD_DIM, C)              # (H, hd, C)

    # Tile per-head weights across the batch so attention einsums are plain
    # batched matmuls with a common (B*H) batch dim (a few KB at these sizes).
    def tile_b(w):
        return jnp.broadcast_to(w[None], (B,) + w.shape).reshape((BH,) + w.shape[1:])

    wq_x, wk_x, wv_x, wp_x = tile_b(wq), tile_b(wk), tile_b(wv), tile_b(wp)

    x2d = x.reshape(B * N, C)                               # fold batch into rows

    args = (x2d, g1, b1, wq_x, wk_x, wv_x, wp_x, bproj, g2, b2, w1, bf1, w2, bf2)

    def full_spec(a):
        nd = a.ndim
        return pl.BlockSpec(a.shape, lambda i, _nd=nd: (0,) * _nd)

    out2d = pl.pallas_call(
        block_kernel,
        out_shape=jax.ShapeDtypeStruct((B * N, C), jnp.float32),
        grid_spec=pltpu.PrefetchScalarGridSpec(
            num_scalar_prefetch=0,
            grid=(1,),                                      # single fused invocation
            in_specs=[full_spec(a) for a in args],
            out_specs=pl.BlockSpec((B * N, C), lambda i: (0, 0)),
        ),
        compiler_params=pltpu.CompilerParams(
            dimension_semantics=("arbitrary",)),
    )(*args)
    return out2d.reshape(B, N, C)


# ----------------------------- pure-JAX reference ----------------------------
def block_reference(x, params):
    (g1, b1, wqkv, wproj, bproj, g2, b2, w1, bf1, w2, bf2) = params

    def ln(x, g, b):
        mu = jnp.mean(x, axis=-1, keepdims=True)
        var = jnp.mean((x - mu) ** 2, axis=-1, keepdims=True)
        return (x - mu) / jnp.sqrt(var + LN_EPS) * g + b

    h = ln(x, g1, b1)
    qkv = h @ wqkv                                   # (B, N, 3C)
    qkv = qkv.reshape(B, N, 3, NUM_HEADS, HEAD_DIM).transpose(2, 0, 3, 1, 4)
    q, k, v = qkv[0], qkv[1], qkv[2]                 # (B, H, N, hd)
    attn = jnp.einsum("bhnd,bhmd->bhnm", q, k) * SCALE
    attn = jax.nn.softmax(attn, axis=-1)
    ao = jnp.einsum("bhnm,bhmd->bhnd", attn, v)      # (B, H, N, hd)
    ao = ao.transpose(0, 2, 1, 3).reshape(B, N, C)
    x1 = x + (ao @ wproj + bproj)

    h2 = ln(x1, g2, b2)
    z = jax.nn.gelu(h2 @ w1 + bf1, approximate=False) @ w2 + bf2
    return x1 + z


# ------------------------------------ main -----------------------------------
if __name__ == "__main__":
    key = jax.random.PRNGKey(0)
    ks = jax.random.split(key, 8)

    x = jax.random.normal(ks[0], (B, N, C), dtype=jnp.float32)

    # deterministic synthetic parameters
    g1 = jnp.ones((1, C), jnp.float32)
    b1 = jnp.zeros((1, C), jnp.float32)
    wqkv = 0.05 * jax.random.normal(ks[1], (C, 3 * C), jnp.float32)
    wproj = 0.05 * jax.random.normal(ks[2], (C, C), jnp.float32)
    bproj = 0.01 * jax.random.normal(ks[3], (1, C), jnp.float32)
    g2 = jnp.ones((1, C), jnp.float32)
    b2 = jnp.zeros((1, C), jnp.float32)
    w1 = 0.05 * jax.random.normal(ks[4], (C, HIDDEN), jnp.float32)
    bf1 = 0.01 * jax.random.normal(ks[5], (1, HIDDEN), jnp.float32)
    w2 = 0.05 * jax.random.normal(ks[6], (HIDDEN, C), jnp.float32)
    bf2 = 0.01 * jax.random.normal(ks[7], (1, C), jnp.float32)

    params = (g1, b1, wqkv, wproj, bproj, g2, b2, w1, bf1, w2, bf2)

    out = block_forward(x, params)
    out = jax.block_until_ready(out)

    ref = block_reference(x, params)
    assert out.shape == (B, N, C)
    # tolerance loosened slightly vs exact-division version: softmax denominator
    # uses the approximate EUP reciprocal.
    assert jnp.allclose(out, ref, atol=1e-3, rtol=1e-3), (
        f"max abs err = {jnp.max(jnp.abs(out - ref))}")

    print("KERNEL_OK")
</pallas_src>

<mosaic_0001>
module attributes {stable_mosaic.version = 11 : i64} {
  func.func @block_kernel(%arg0: i32, %arg1: memref<16x32xf32, #tpu.memory_space<vmem>>, %arg2: memref<1x32xf32, #tpu.memory_space<vmem>>, %arg3: memref<1x32xf32, #tpu.memory_space<vmem>>, %arg4: memref<8x32x8xf32, #tpu.memory_space<vmem>>, %arg5: memref<8x32x8xf32, #tpu.memory_space<vmem>>, %arg6: memref<8x32x8xf32, #tpu.memory_space<vmem>>, %arg7: memref<8x8x32xf32, #tpu.memory_space<vmem>>, %arg8: memref<1x32xf32, #tpu.memory_space<vmem>>, %arg9: memref<1x32xf32, #tpu.memory_space<vmem>>, %arg10: memref<1x32xf32, #tpu.memory_space<vmem>>, %arg11: memref<32x128xf32, #tpu.memory_space<vmem>>, %arg12: memref<1x128xf32, #tpu.memory_space<vmem>>, %arg13: memref<128x32xf32, #tpu.memory_space<vmem>>, %arg14: memref<1x32xf32, #tpu.memory_space<vmem>>, %arg15: memref<16x32xf32, #tpu.memory_space<vmem>>) attributes {dimension_semantics = [#tpu.dimension_semantics<arbitrary>], iteration_bounds = array<i64: 1>, scalar_prefetch = 0 : i64, scratch_operands = 0 : i64, tpu.core_type = #tpu.core_type<tc>, window_params = [{pipeline_mode = #tpu.pipeline_mode<synchronous>, transform_indices = @transform_0, window_bounds = array<i64: 16, 32>}, {pipeline_mode = #tpu.pipeline_mode<synchronous>, transform_indices = @transform_1, window_bounds = array<i64: 1, 32>}, {pipeline_mode = #tpu.pipeline_mode<synchronous>, transform_indices = @transform_2, window_bounds = array<i64: 1, 32>}, {pipeline_mode = #tpu.pipeline_mode<synchronous>, transform_indices = @transform_3, window_bounds = array<i64: 8, 32, 8>}, {pipeline_mode = #tpu.pipeline_mode<synchronous>, transform_indices = @transform_4, window_bounds = array<i64: 8, 32, 8>}, {pipeline_mode = #tpu.pipeline_mode<synchronous>, transform_indices = @transform_5, window_bounds = array<i64: 8, 32, 8>}, {pipeline_mode = #tpu.pipeline_mode<synchronous>, transform_indices = @transform_6, window_bounds = array<i64: 8, 8, 32>}, {pipeline_mode = #tpu.pipeline_mode<synchronous>, transform_indices = @transform_7, window_bounds = array<i64: 1, 32>}, {pipeline_mode = #tpu.pipeline_mode<synchronous>, transform_indices = @transform_8, window_bounds = array<i64: 1, 32>}, {pipeline_mode = #tpu.pipeline_mode<synchronous>, transform_indices = @transform_9, window_bounds = array<i64: 1, 32>}, {pipeline_mode = #tpu.pipeline_mode<synchronous>, transform_indices = @transform_10, window_bounds = array<i64: 32, 128>}, {pipeline_mode = #tpu.pipeline_mode<synchronous>, transform_indices = @transform_11, window_bounds = array<i64: 1, 128>}, {pipeline_mode = #tpu.pipeline_mode<synchronous>, transform_indices = @transform_12, window_bounds = array<i64: 128, 32>}, {pipeline_mode = #tpu.pipeline_mode<synchronous>, transform_indices = @transform_13, window_bounds = array<i64: 1, 32>}, {pipeline_mode = #tpu.pipeline_mode<synchronous>, transform_indices = @transform_14, window_bounds = array<i64: 16, 32>}]} {
    %c0 = arith.constant 0 : index
    %c0_0 = arith.constant 0 : index
    %0 = vector.load %arg1[%c0, %c0_0] : memref<16x32xf32, #tpu.memory_space<vmem>>, vector<16x32xf32>
    %c0_1 = arith.constant 0 : index
    %c0_2 = arith.constant 0 : index
    %1 = vector.load %arg2[%c0_1, %c0_2] : memref<1x32xf32, #tpu.memory_space<vmem>>, vector<1x32xf32>
    %c0_3 = arith.constant 0 : index
    %c0_4 = arith.constant 0 : index
    %2 = vector.load %arg3[%c0_3, %c0_4] : memref<1x32xf32, #tpu.memory_space<vmem>>, vector<1x32xf32>
    %cst = arith.constant dense<0.000000e+00> : vector<16xf32>
    %3 = vector.multi_reduction <add>, %0, %cst [1] : vector<16x32xf32> to vector<16xf32>
    %4 = vector.shape_cast %3 : vector<16xf32> to vector<16x1xf32>
    %cst_5 = arith.constant 3.200000e+01 : f32
    %5 = vector.broadcast %cst_5 : f32 to vector<16x1xf32>
    %6 = arith.divf %4, %5 : vector<16x1xf32>
    %7 = vector.broadcast %6 : vector<16x1xf32> to vector<16x32xf32>
    %8 = arith.subf %0, %7 : vector<16x32xf32>
    %9 = arith.mulf %8, %8 : vector<16x32xf32>
    %cst_6 = arith.constant dense<0.000000e+00> : vector<16xf32>
    %10 = vector.multi_reduction <add>, %9, %cst_6 [1] : vector<16x32xf32> to vector<16xf32>
    %11 = vector.shape_cast %10 : vector<16xf32> to vector<16x1xf32>
    %cst_7 = arith.constant 3.200000e+01 : f32
    %12 = vector.broadcast %cst_7 : f32 to vector<16x1xf32>
    %13 = arith.divf %11, %12 : vector<16x1xf32>
    %cst_8 = arith.constant 9.99999974E-6 : f32
    %14 = vector.broadcast %cst_8 : f32 to vector<16x1xf32>
    %15 = arith.addf %13, %14 : vector<16x1xf32>
    %16 = math.rsqrt %15 : vector<16x1xf32>
    %17 = vector.broadcast %16 : vector<16x1xf32> to vector<16x32xf32>
    %18 = arith.mulf %8, %17 : vector<16x32xf32>
    %19 = vector.broadcast %1 : vector<1x32xf32> to vector<16x32xf32>
    %20 = arith.mulf %18, %19 : vector<16x32xf32>
    %21 = vector.broadcast %2 : vector<1x32xf32> to vector<16x32xf32>
    %22 = arith.addf %20, %21 : vector<16x32xf32>
    %23 = vector.shape_cast %22 : vector<16x32xf32> to vector<2x1x8x32xf32>
    %24 = vector.shape_cast %23 : vector<2x1x8x32xf32> to vector<2x1x8x32xf32>
    %25 = vector.broadcast %24 : vector<2x1x8x32xf32> to vector<2x4x8x32xf32>
    %26 = vector.shape_cast %25 : vector<2x4x8x32xf32> to vector<8x8x32xf32>
    %c0_9 = arith.constant 0 : index
    %c0_10 = arith.constant 0 : index
    %c0_11 = arith.constant 0 : index
    %27 = vector.load %arg4[%c0_9, %c0_10, %c0_11] : memref<8x32x8xf32, #tpu.memory_space<vmem>>, vector<8x32x8xf32>
    "tpu.trace_start"() <{level = 10 : i32, message = "xnc,xcd->xnd"}> : () -> ()
    %cst_12 = arith.constant dense<0.000000e+00> : vector<8x8x8xf32>
    %28 = tpu.matmul %26, %27, %cst_12 {dimension_numbers = #tpu.dot_dimension_numbers<[2], [1], [1], [2], [0, 0, 0, 1, 1, 2], [0], [0]>} : vector<8x8x32xf32>, vector<8x32x8xf32>, vector<8x8x8xf32> -> vector<8x8x8xf32>
    "tpu.trace_stop"() : () -> ()
    %c0_13 = arith.constant 0 : index
    %c0_14 = arith.constant 0 : index
    %c0_15 = arith.constant 0 : index
    %29 = vector.load %arg5[%c0_13, %c0_14, %c0_15] : memref<8x32x8xf32, #tpu.memory_space<vmem>>, vector<8x32x8xf32>
    "tpu.trace_start"() <{level = 10 : i32, message = "xnc,xcd->xnd"}> : () -> ()
    %cst_16 = arith.constant dense<0.000000e+00> : vector<8x8x8xf32>
    %30 = tpu.matmul %26, %29, %cst_16 {dimension_numbers = #tpu.dot_dimension_numbers<[2], [1], [1], [2], [0, 0, 0, 1, 1, 2], [0], [0]>} : vector<8x8x32xf32>, vector<8x32x8xf32>, vector<8x8x8xf32> -> vector<8x8x8xf32>
    "tpu.trace_stop"() : () -> ()
    %c0_17 = arith.constant 0 : index
    %c0_18 = arith.constant 0 : index
    %c0_19 = arith.constant 0 : index
    %31 = vector.load %arg6[%c0_17, %c0_18, %c0_19] : memref<8x32x8xf32, #tpu.memory_space<vmem>>, vector<8x32x8xf32>
    "tpu.trace_start"() <{level = 10 : i32, message = "xnc,xcd->xnd"}> : () -> ()
    %cst_20 = arith.constant dense<0.000000e+00> : vector<8x8x8xf32>
    %32 = tpu.matmul %26, %31, %cst_20 {dimension_numbers = #tpu.dot_dimension_numbers<[2], [1], [1], [2], [0, 0, 0, 1, 1, 2], [0], [0]>} : vector<8x8x32xf32>, vector<8x32x8xf32>, vector<8x8x8xf32> -> vector<8x8x8xf32>
    "tpu.trace_stop"() : () -> ()
    "tpu.trace_start"() <{level = 10 : i32, message = "xnd,xmd->xnm"}> : () -> ()
    %cst_21 = arith.constant dense<0.000000e+00> : vector<8x8x8xf32>
    %33 = tpu.matmul %28, %30, %cst_21 {dimension_numbers = #tpu.dot_dimension_numbers<[2], [2], [1], [1], [0, 0, 0, 1, 1, 1], [0], [0]>} : vector<8x8x8xf32>, vector<8x8x8xf32>, vector<8x8x8xf32> -> vector<8x8x8xf32>
    "tpu.trace_stop"() : () -> ()
    %cst_22 = arith.constant dense<0xFF800000> : vector<8x8xf32>
    %34 = vector.multi_reduction <maximumf>, %33, %cst_22 [2] : vector<8x8x8xf32> to vector<8x8xf32>
    %35 = vector.shape_cast %34 : vector<8x8xf32> to vector<8x8x1xf32>
    %36 = vector.broadcast %35 : vector<8x8x1xf32> to vector<8x8x8xf32>
    %37 = arith.subf %33, %36 : vector<8x8x8xf32>
    %38 = math.exp %37 : vector<8x8x8xf32>
    %cst_23 = arith.constant dense<0.000000e+00> : vector<8x8xf32>
    %39 = vector.multi_reduction <add>, %38, %cst_23 [2] : vector<8x8x8xf32> to vector<8x8xf32>
    %40 = vector.shape_cast %39 : vector<8x8xf32> to vector<8x8x1xf32>
    %41 = tpu.reciprocal %40 {approx = true} : vector<8x8x1xf32> -> vector<8x8x1xf32>
    %42 = vector.broadcast %41 : vector<8x8x1xf32> to vector<8x8x8xf32>
    %43 = arith.mulf %38, %42 : vector<8x8x8xf32>
    "tpu.trace_start"() <{level = 10 : i32, message = "xnm,xmd->xnd"}> : () -> ()
    %cst_24 = arith.constant dense<0.000000e+00> : vector<8x8x8xf32>
    %44 = tpu.matmul %43, %32, %cst_24 {dimension_numbers = #tpu.dot_dimension_numbers<[2], [1], [1], [2], [0, 0, 0, 1, 1, 2], [0], [0]>} : vector<8x8x8xf32>, vector<8x8x8xf32>, vector<8x8x8xf32> -> vector<8x8x8xf32>
    "tpu.trace_stop"() : () -> ()
    %c0_25 = arith.constant 0 : index
    %c0_26 = arith.constant 0 : index
    %c0_27 = arith.constant 0 : index
    %45 = vector.load %arg7[%c0_25, %c0_26, %c0_27] : memref<8x8x32xf32, #tpu.memory_space<vmem>>, vector<8x8x32xf32>
    "tpu.trace_start"() <{level = 10 : i32, message = "xnd,xdc->xnc"}> : () -> ()
    %cst_28 = arith.constant dense<0.000000e+00> : vector<8x8x32xf32>
    %46 = tpu.matmul %44, %45, %cst_28 {dimension_numbers = #tpu.dot_dimension_numbers<[2], [1], [1], [2], [0, 0, 0, 1, 1, 2], [0], [0]>} : vector<8x8x8xf32>, vector<8x8x32xf32>, vector<8x8x32xf32> -> vector<8x8x32xf32>
    "tpu.trace_stop"() : () -> ()
    %47 = vector.shape_cast %46 : vector<8x8x32xf32> to vector<2x4x8x32xf32>
    %cst_29 = arith.constant dense<0.000000e+00> : vector<2x8x32xf32>
    %48 = vector.multi_reduction <add>, %47, %cst_29 [1] : vector<2x4x8x32xf32> to vector<2x8x32xf32>
    %49 = vector.shape_cast %48 : vector<2x8x32xf32> to vector<16x32xf32>
    %c0_30 = arith.constant 0 : index
    %c0_31 = arith.constant 0 : index
    %50 = vector.load %arg8[%c0_30, %c0_31] : memref<1x32xf32, #tpu.memory_space<vmem>>, vector<1x32xf32>
    %51 = vector.broadcast %50 : vector<1x32xf32> to vector<16x32xf32>
    %52 = arith.addf %49, %51 : vector<16x32xf32>
    %53 = arith.addf %0, %52 : vector<16x32xf32>
    %c0_32 = arith.constant 0 : index
    %c0_33 = arith.constant 0 : index
    %54 = vector.load %arg9[%c0_32, %c0_33] : memref<1x32xf32, #tpu.memory_space<vmem>>, vector<1x32xf32>
    %c0_34 = arith.constant 0 : index
    %c0_35 = arith.constant 0 : index
    %55 = vector.load %arg10[%c0_34, %c0_35] : memref<1x32xf32, #tpu.memory_space<vmem>>, vector<1x32xf32>
    %cst_36 = arith.constant dense<0.000000e+00> : vector<16xf32>
    %56 = vector.multi_reduction <add>, %53, %cst_36 [1] : vector<16x32xf32> to vector<16xf32>
    %57 = vector.shape_cast %56 : vector<16xf32> to vector<16x1xf32>
    %cst_37 = arith.constant 3.200000e+01 : f32
    %58 = vector.broadcast %cst_37 : f32 to vector<16x1xf32>
    %59 = arith.divf %57, %58 : vector<16x1xf32>
    %60 = vector.broadcast %59 : vector<16x1xf32> to vector<16x32xf32>
    %61 = arith.subf %53, %60 : vector<16x32xf32>
    %62 = arith.mulf %61, %61 : vector<16x32xf32>
    %cst_38 = arith.constant dense<0.000000e+00> : vector<16xf32>
    %63 = vector.multi_reduction <add>, %62, %cst_38 [1] : vector<16x32xf32> to vector<16xf32>
    %64 = vector.shape_cast %63 : vector<16xf32> to vector<16x1xf32>
    %cst_39 = arith.constant 3.200000e+01 : f32
    %65 = vector.broadcast %cst_39 : f32 to vector<16x1xf32>
    %66 = arith.divf %64, %65 : vector<16x1xf32>
    %cst_40 = arith.constant 9.99999974E-6 : f32
    %67 = vector.broadcast %cst_40 : f32 to vector<16x1xf32>
    %68 = arith.addf %66, %67 : vector<16x1xf32>
    %69 = math.rsqrt %68 : vector<16x1xf32>
    %70 = vector.broadcast %69 : vector<16x1xf32> to vector<16x32xf32>
    %71 = arith.mulf %61, %70 : vector<16x32xf32>
    %72 = vector.broadcast %54 : vector<1x32xf32> to vector<16x32xf32>
    %73 = arith.mulf %71, %72 : vector<16x32xf32>
    %74 = vector.broadcast %55 : vector<1x32xf32> to vector<16x32xf32>
    %75 = arith.addf %73, %74 : vector<16x32xf32>
    %c0_41 = arith.constant 0 : index
    %c0_42 = arith.constant 0 : index
    %76 = vector.load %arg11[%c0_41, %c0_42] : memref<32x128xf32, #tpu.memory_space<vmem>>, vector<32x128xf32>
    %cst_43 = arith.constant dense<0.000000e+00> : vector<16x128xf32>
    %77 = tpu.matmul %75, %76, %cst_43 {dimension_numbers = #tpu.dot_dimension_numbers<[1], [0], [0], [1], [0, 0, 1, 1], [], []>} : vector<16x32xf32>, vector<32x128xf32>, vector<16x128xf32> -> vector<16x128xf32>
    %c0_44 = arith.constant 0 : index
    %c0_45 = arith.constant 0 : index
    %78 = vector.load %arg12[%c0_44, %c0_45] : memref<1x128xf32, #tpu.memory_space<vmem>>, vector<1x128xf32>
    %79 = vector.broadcast %78 : vector<1x128xf32> to vector<16x128xf32>
    %80 = arith.addf %77, %79 : vector<16x128xf32>
    %cst_46 = arith.constant 5.000000e-01 : f32
    %81 = vector.broadcast %cst_46 : f32 to vector<16x128xf32>
    %82 = arith.mulf %81, %80 : vector<16x128xf32>
    %cst_47 = arith.constant 0.707106769 : f32
    %83 = vector.broadcast %cst_47 : f32 to vector<16x128xf32>
    %84 = arith.mulf %80, %83 : vector<16x128xf32>
    %85 = math.erf %84 : vector<16x128xf32>
    %cst_48 = arith.constant 1.000000e+00 : f32
    %86 = vector.broadcast %cst_48 : f32 to vector<16x128xf32>
    %87 = arith.addf %86, %85 : vector<16x128xf32>
    %88 = arith.mulf %82, %87 : vector<16x128xf32>
    %c0_49 = arith.constant 0 : index
    %c0_50 = arith.constant 0 : index
    %89 = vector.load %arg13[%c0_49, %c0_50] : memref<128x32xf32, #tpu.memory_space<vmem>>, vector<128x32xf32>
    %cst_51 = arith.constant dense<0.000000e+00> : vector<16x32xf32>
    %90 = tpu.matmul %88, %89, %cst_51 {dimension_numbers = #tpu.dot_dimension_numbers<[1], [0], [0], [1], [0, 0, 1, 1], [], []>} : vector<16x128xf32>, vector<128x32xf32>, vector<16x32xf32> -> vector<16x32xf32>
    %c0_52 = arith.constant 0 : index
    %c0_53 = arith.constant 0 : index
    %91 = vector.load %arg14[%c0_52, %c0_53] : memref<1x32xf32, #tpu.memory_space<vmem>>, vector<1x32xf32>
    %92 = vector.broadcast %91 : vector<1x32xf32> to vector<16x32xf32>
    %93 = arith.addf %90, %92 : vector<16x32xf32>
    %94 = arith.addf %53, %93 : vector<16x32xf32>
    %c0_54 = arith.constant 0 : index
    %c0_55 = arith.constant 0 : index
    %95 = vector.load %arg15[%c0_54, %c0_55] : memref<16x32xf32, #tpu.memory_space<vmem>>, vector<16x32xf32>
    tpu.vector_store %arg15[%c0_54, %c0_55], %94 {strides = array<i32>} : memref<16x32xf32, #tpu.memory_space<vmem>>, vector<16x32xf32>,
    return
  }
  func.func @transform_0(%arg0: i32) -> (i32, i32) {
    %c0_i32 = arith.constant 0 : i32
    %c0_i32_0 = arith.constant 0 : i32
    %c0_i32_1 = arith.constant 0 : i32
    return %c0_i32, %c0_i32_0 : i32, i32
  }
  func.func @transform_1(%arg0: i32) -> (i32, i32) {
    %c0_i32 = arith.constant 0 : i32
    %c0_i32_0 = arith.constant 0 : i32
    %c0_i32_1 = arith.constant 0 : i32
    return %c0_i32, %c0_i32_0 : i32, i32
  }
  func.func @transform_2(%arg0: i32) -> (i32, i32) {
    %c0_i32 = arith.constant 0 : i32
    %c0_i32_0 = arith.constant 0 : i32
    %c0_i32_1 = arith.constant 0 : i32
    return %c0_i32, %c0_i32_0 : i32, i32
  }
  func.func @transform_3(%arg0: i32) -> (i32, i32, i32) {
    %c0_i32 = arith.constant 0 : i32
    %c0_i32_0 = arith.constant 0 : i32
    %c0_i32_1 = arith.constant 0 : i32
    %c0_i32_2 = arith.constant 0 : i32
    return %c0_i32, %c0_i32_0, %c0_i32_1 : i32, i32, i32
  }
  func.func @transform_4(%arg0: i32) -> (i32, i32, i32) {
    %c0_i32 = arith.constant 0 : i32
    %c0_i32_0 = arith.constant 0 : i32
    %c0_i32_1 = arith.constant 0 : i32
    %c0_i32_2 = arith.constant 0 : i32
    return %c0_i32, %c0_i32_0, %c0_i32_1 : i32, i32, i32
  }
  func.func @transform_5(%arg0: i32) -> (i32, i32, i32) {
    %c0_i32 = arith.constant 0 : i32
    %c0_i32_0 = arith.constant 0 : i32
    %c0_i32_1 = arith.constant 0 : i32
    %c0_i32_2 = arith.constant 0 : i32
    return %c0_i32, %c0_i32_0, %c0_i32_1 : i32, i32, i32
  }
  func.func @transform_6(%arg0: i32) -> (i32, i32, i32) {
    %c0_i32 = arith.constant 0 : i32
    %c0_i32_0 = arith.constant 0 : i32
    %c0_i32_1 = arith.constant 0 : i32
    %c0_i32_2 = arith.constant 0 : i32
    return %c0_i32, %c0_i32_0, %c0_i32_1 : i32, i32, i32
  }
  func.func @transform_7(%arg0: i32) -> (i32, i32) {
    %c0_i32 = arith.constant 0 : i32
    %c0_i32_0 = arith.constant 0 : i32
    %c0_i32_1 = arith.constant 0 : i32
    return %c0_i32, %c0_i32_0 : i32, i32
  }
  func.func @transform_8(%arg0: i32) -> (i32, i32) {
    %c0_i32 = arith.constant 0 : i32
    %c0_i32_0 = arith.constant 0 : i32
    %c0_i32_1 = arith.constant 0 : i32
    return %c0_i32, %c0_i32_0 : i32, i32
  }
  func.func @transform_9(%arg0: i32) -> (i32, i32) {
    %c0_i32 = arith.constant 0 : i32
    %c0_i32_0 = arith.constant 0 : i32
    %c0_i32_1 = arith.constant 0 : i32
    return %c0_i32, %c0_i32_0 : i32, i32
  }
  func.func @transform_10(%arg0: i32) -> (i32, i32) {
    %c0_i32 = arith.constant 0 : i32
    %c0_i32_0 = arith.constant 0 : i32
    %c0_i32_1 = arith.constant 0 : i32
    return %c0_i32, %c0_i32_0 : i32, i32
  }
  func.func @transform_11(%arg0: i32) -> (i32, i32) {
    %c0_i32 = arith.constant 0 : i32
    %c0_i32_0 = arith.constant 0 : i32
    %c0_i32_1 = arith.constant 0 : i32
    return %c0_i32, %c0_i32_0 : i32, i32
  }
  func.func @transform_12(%arg0: i32) -> (i32, i32) {
    %c0_i32 = arith.constant 0 : i32
    %c0_i32_0 = arith.constant 0 : i32
    %c0_i32_1 = arith.constant 0 : i32
    return %c0_i32, %c0_i32_0 : i32, i32
  }
  func.func @transform_13(%arg0: i32) -> (i32, i32) {
    %c0_i32 = arith.constant 0 : i32
    %c0_i32_0 = arith.constant 0 : i32
    %c0_i32_1 = arith.constant 0 : i32
    return %c0_i32, %c0_i32_0 : i32, i32
  }
  func.func @transform_14(%arg0: i32) -> (i32, i32) {
    %c0_i32 = arith.constant 0 : i32
    %c0_i32_0 = arith.constant 0 : i32
    %c0_i32_1 = arith.constant 0 : i32
    return %c0_i32, %c0_i32_0 : i32, i32
  }
}

</mosaic_0001>

<llo_original>
// kernel: tpu_custom_call.1
$region0: #{tpu_custom_call.1}
  #allocation0 [shape = 'u32[]', space=smem, size = 0x4, offset = 0x4, fixed_abs, tag = 'smem constant byte address 0x4 - core index']
  #allocation1 [shape = 'u32[144,128]{1,0:T(1,128)}', space=vmem, size = 0x12000, scoped, tag = 'internal scratch']
  %s0 = inlined_call_operand.vmem [shape: f32[16,32], index: 0, kind: input, shape index: {}]
  %s1 = inlined_call_operand.vmem [shape: f32[1,32], index: 1, kind: input, shape index: {}]
  %s2 = inlined_call_operand.vmem [shape: f32[1,32], index: 2, kind: input, shape index: {}]
  %s3 = inlined_call_operand.vmem [shape: f32[8,32,8], index: 3, kind: input, shape index: {}]
  %s4 = inlined_call_operand.vmem [shape: f32[8,32,8], index: 4, kind: input, shape index: {}]
  %s5 = inlined_call_operand.vmem [shape: f32[8,32,8], index: 5, kind: input, shape index: {}]
  %s6 = inlined_call_operand.vmem [shape: f32[8,8,32], index: 6, kind: input, shape index: {}]
  %s7 = inlined_call_operand.vmem [shape: f32[1,32], index: 7, kind: input, shape index: {}]
  %s8 = inlined_call_operand.vmem [shape: f32[1,32], index: 8, kind: input, shape index: {}]
  %s9 = inlined_call_operand.vmem [shape: f32[1,32], index: 9, kind: input, shape index: {}]
  %s10 = inlined_call_operand.vmem [shape: f32[32,128], index: 10, kind: input, shape index: {}]
  %s11 = inlined_call_operand.vmem [shape: f32[1,128], index: 11, kind: input, shape index: {}]
  %s12 = inlined_call_operand.vmem [shape: f32[128,32], index: 12, kind: input, shape index: {}]
  %s13 = inlined_call_operand.vmem [shape: f32[1,32], index: 13, kind: input, shape index: {}]
  %s14 = inlined_call_operand.hbm [shape: f32[16,32], index: 14, kind: output, shape index: {}]
  %s15 = sld [smem:[#allocation0]]
  $region66: #{tpu_custom_call.1} parent=0
    _
  %s17 = ssub.s32 1, %s15
  %s18 = scalar_select 0, %s17, %s15
  $region1: #{tpu_custom_call.1} parent=0
    #allocation2 [shape = 'u8[8192]{0}', space=vmem, size = 0x2000, scoped, tag = 'output window, operand 0, single buffered']
    #allocation3 [shape = 's32[1]{0}', space=sflag, size = 0x4, scoped, tag = 'scoped memory for tpu_custom_call.1']
    %19 = vsyncpa [#allocation3], 0
    // Predicated region
    $region2: #{tpu_custom_call.1} parent=1 // pred_check
      _
    $region3: #{tpu_custom_call.1} parent=1 // pred_check_branch
      %21 = sbr.rel (0) target = $region5
    $region4: #{tpu_custom_call.1} parent=1 // pred_region
      _
    $region5: #{tpu_custom_call.1} parent=1 // pred_fallthru
      _
    // Predicated region
    $region6: #{tpu_custom_call.1} parent=1 // pred_check
      _
    $region7: #{tpu_custom_call.1} parent=1 // pred_check_branch
      %23 = sbr.rel (0) target = $region9
    $region8: #{tpu_custom_call.1} parent=1 // pred_region
      _
    $region9: #{tpu_custom_call.1} parent=1 // pred_fallthru
      _
    // Predicated region
    $region10: #{tpu_custom_call.1} parent=1 // pred_check
      _
    $region11: #{tpu_custom_call.1} parent=1 // pred_check_branch
      %25 = sbr.rel (0) target = $region13
    $region12: #{tpu_custom_call.1} parent=1 // pred_region
      _
    $region13: #{tpu_custom_call.1} parent=1 // pred_fallthru
      _
    // Predicated region
    $region14: #{tpu_custom_call.1} parent=1 // pred_check
      _
    $region15: #{tpu_custom_call.1} parent=1 // pred_check_branch
      %27 = sbr.rel (0) target = $region17
    $region16: #{tpu_custom_call.1} parent=1 // pred_region
      _
    $region17: #{tpu_custom_call.1} parent=1 // pred_fallthru
      _
    // Predicated region
    $region18: #{tpu_custom_call.1} parent=1 // pred_check
      _
    $region19: #{tpu_custom_call.1} parent=1 // pred_check_branch
      %29 = sbr.rel (0) target = $region21
    $region20: #{tpu_custom_call.1} parent=1 // pred_region
      _
    $region21: #{tpu_custom_call.1} parent=1 // pred_fallthru
      _
    // Predicated region
    $region22: #{tpu_custom_call.1} parent=1 // pred_check
      _
    $region23: #{tpu_custom_call.1} parent=1 // pred_check_branch
      %31 = sbr.rel (0) target = $region25
    $region24: #{tpu_custom_call.1} parent=1 // pred_region
      _
    $region25: #{tpu_custom_call.1} parent=1 // pred_fallthru
      _
    // Predicated region
    $region26: #{tpu_custom_call.1} parent=1 // pred_check
      _
    $region27: #{tpu_custom_call.1} parent=1 // pred_check_branch
      %33 = sbr.rel (0) target = $region29
    $region28: #{tpu_custom_call.1} parent=1 // pred_region
      _
    $region29: #{tpu_custom_call.1} parent=1 // pred_fallthru
      _
    // Predicated region
    $region30: #{tpu_custom_call.1} parent=1 // pred_check
      _
    $region31: #{tpu_custom_call.1} parent=1 // pred_check_branch
      %35 = sbr.rel (0) target = $region33
    $region32: #{tpu_custom_call.1} parent=1 // pred_region
      _
    $region33: #{tpu_custom_call.1} parent=1 // pred_fallthru
      _
    // Predicated region
    $region34: #{tpu_custom_call.1} parent=1 // pred_check
      _
    $region35: #{tpu_custom_call.1} parent=1 // pred_check_branch
      %37 = sbr.rel (0) target = $region37
    $region36: #{tpu_custom_call.1} parent=1 // pred_region
      _
    $region37: #{tpu_custom_call.1} parent=1 // pred_fallthru
      _
    // Predicated region
    $region38: #{tpu_custom_call.1} parent=1 // pred_check
      _
    $region39: #{tpu_custom_call.1} parent=1 // pred_check_branch
      %39 = sbr.rel (0) target = $region41
    $region40: #{tpu_custom_call.1} parent=1 // pred_region
      _
    $region41: #{tpu_custom_call.1} parent=1 // pred_fallthru
      _
    // Predicated region
    $region42: #{tpu_custom_call.1} parent=1 // pred_check
      _
    $region43: #{tpu_custom_call.1} parent=1 // pred_check_branch
      %41 = sbr.rel (0) target = $region45
    $region44: #{tpu_custom_call.1} parent=1 // pred_region
      _
    $region45: #{tpu_custom_call.1} parent=1 // pred_fallthru
      _
    // Predicated region
    $region46: #{tpu_custom_call.1} parent=1 // pred_check
      _
    $region47: #{tpu_custom_call.1} parent=1 // pred_check_branch
      %43 = sbr.rel (0) target = $region49
    $region48: #{tpu_custom_call.1} parent=1 // pred_region
      _
    $region49: #{tpu_custom_call.1} parent=1 // pred_fallthru
      _
    // Predicated region
    $region50: #{tpu_custom_call.1} parent=1 // pred_check
      _
    $region51: #{tpu_custom_call.1} parent=1 // pred_check_branch
      %45 = sbr.rel (0) target = $region53
    $region52: #{tpu_custom_call.1} parent=1 // pred_region
      _
    $region53: #{tpu_custom_call.1} parent=1 // pred_fallthru
      _
    // Predicated region
    $region54: #{tpu_custom_call.1} parent=1 // pred_check
      _
    $region55: #{tpu_custom_call.1} parent=1 // pred_check_branch
      %47 = sbr.rel (0) target = $region57
    $region56: #{tpu_custom_call.1} parent=1 // pred_region
      _
    $region57: #{tpu_custom_call.1} parent=1 // pred_fallthru
      _
    %v48 = vld [vmem:[%s0] sm:$0xff]
    %v49 = vld [vmem:[%s0 + $0x8] sm:$0xff]
    %v50 = vld [vmem:[%s1] sm:$0x1]
    %v51 = vld [vmem:[%s2] sm:$0x1]
    %vm52 = vcmask 261120
    %v53 = vsel %vm52, %v48, 0.0
    %54 = vadd.xlane.f32.xlu0 %v53
    %v55 = vpop.xlane.xlu0 %54
    %v56 = vsel %vm52, %v49, 0.0
    %57 = vadd.xlane.f32.xlu0 %v56
    %v58 = vpop.xlane.xlu0 %57
    %v59 = vrcp.pop 32.0
    %v60 = vmul.f32 %v55, %v59
    %v61 = vmul.f32 %v58, %v59
    %v62 = vsub.f32 %v48, %v60
    %v63 = vsub.f32 %v49, %v61
    %v64 = vmul.f32 %v62, %v62
    %v65 = vmul.f32 %v63, %v63
    %v66 = vsel %vm52, %v64, 0.0
    %67 = vadd.xlane.f32.xlu0 %v66
    %v68 = vpop.xlane.xlu0 %67
    %v69 = vsel %vm52, %v65, 0.0
    %70 = vadd.xlane.f32.xlu0 %v69
    %v71 = vpop.xlane.xlu0 %70
    %v72 = vmul.f32 %v68, %v59
    %v73 = vmul.f32 %v71, %v59
    %v74 = vadd.f32 %v72, 1e-05
    %v75 = vadd.f32 %v73, 1e-05
    %v76 = vrsqrt.pop %v74
    %v77 = vrsqrt.pop %v75
    %v78 = vmul.f32 %v62, %v76
    %v79 = vmul.f32 %v63, %v77
    %v81 = vlaneseq
    %v82 = vshrl.u32 %v81, 7
    %v83 = vsub.s32 0, %v82
    %v84 = vrot.slane %v50, %v83
    %v86 = vmul.f32 %v78, %v84
    %v87 = vmul.f32 %v79, %v84
    %v89 = vlaneseq
    %v90 = vshrl.u32 %v89, 7
    %v91 = vsub.s32 0, %v90
    %v92 = vrot.slane %v51, %v91
    %v94 = vadd.f32 %v86, %v92
    %v95 = vadd.f32 %v87, %v92
    %v96 = vld [vmem:[%s3] sm:$0xff]
    %v97 = vld [vmem:[%s3 + $0x8] sm:$0xff]
    %v98 = vld [vmem:[%s3 + $0x10] sm:$0xff]
    %v99 = vld [vmem:[%s3 + $0x18] sm:$0xff]
    %v100 = vld [vmem:[%s3 + $0x20] sm:$0xff]
    %v101 = vld [vmem:[%s3 + $0x28] sm:$0xff]
    %v102 = vld [vmem:[%s3 + $0x30] sm:$0xff]
    %v103 = vld [vmem:[%s3 + $0x38] sm:$0xff]
    %v104 = vld [vmem:[%s3 + $0x40] sm:$0xff]
    %v105 = vld [vmem:[%s3 + $0x48] sm:$0xff]
    %v106 = vld [vmem:[%s3 + $0x50] sm:$0xff]
    %v107 = vld [vmem:[%s3 + $0x58] sm:$0xff]
    %v108 = vld [vmem:[%s3 + $0x60] sm:$0xff]
    %v109 = vld [vmem:[%s3 + $0x68] sm:$0xff]
    %v110 = vld [vmem:[%s3 + $0x70] sm:$0xff]
    %v111 = vld [vmem:[%s3 + $0x78] sm:$0xff]
    %v112 = vld [vmem:[%s3 + $0x80] sm:$0xff]
    %v113 = vld [vmem:[%s3 + $0x88] sm:$0xff]
    %v114 = vld [vmem:[%s3 + $0x90] sm:$0xff]
    %v115 = vld [vmem:[%s3 + $0x98] sm:$0xff]
    %v116 = vld [vmem:[%s3 + $0xa0] sm:$0xff]
    %v117 = vld [vmem:[%s3 + $0xa8] sm:$0xff]
    %v118 = vld [vmem:[%s3 + $0xb0] sm:$0xff]
    %v119 = vld [vmem:[%s3 + $0xb8] sm:$0xff]
    %v120 = vld [vmem:[%s3 + $0xc0] sm:$0xff]
    %v121 = vld [vmem:[%s3 + $0xc8] sm:$0xff]
    %v122 = vld [vmem:[%s3 + $0xd0] sm:$0xff]
    %v123 = vld [vmem:[%s3 + $0xd8] sm:$0xff]
    %v124 = vld [vmem:[%s3 + $0xe0] sm:$0xff]
    %v125 = vld [vmem:[%s3 + $0xe8] sm:$0xff]
    %v126 = vld [vmem:[%s3 + $0xf0] sm:$0xff]
    %v127 = vld [vmem:[%s3 + $0xf8] sm:$0xff]
    %v129 = vsel %vm52, %v94, 0
    %131 = vmatprep.subr.mxu0 0.0
    %132 = vmatpush1.msra.mxu0 %v96
    %133 = vmatprep.subr.mxu0 0.0
    %134 = vmatpush1.msra.mxu0 %v97
    %135 = vmatprep.subr.mxu0 0.0
    %136 = vmatpush1.msra.mxu0 %v98
    %137 = vmatprep.subr.mxu0 0.0
    %138 = vmatpush1.msra.mxu0 %v99
    %139 = vmatprep.subr.mxu0 0.0
    %140 = vmatpush1.msra.mxu0 0.0
    %141 = vmatprep.subr.mxu0 0.0
    %142 = vmatpush1.msra.mxu0 0.0
    %143 = vmatprep.subr.mxu0 0.0
    %144 = vmatpush1.msra.mxu0 0.0
    %145 = vmatprep.subr.mxu0 0.0
    %146 = vmatpush1.msra.mxu0 0.0
    %147 = vmatprep.subr.mxu0 0.0
    %148 = vmatpush1.msra.mxu0 0.0
    %149 = vmatprep.subr.mxu0 0.0
    %150 = vmatpush1.msra.mxu0 0.0
    %151 = vmatprep.subr.mxu0 0.0
    %152 = vmatpush1.msra.mxu0 0.0
    %153 = vmatprep.subr.mxu0 0.0
    %154 = vmatpush1.msra.mxu0 0.0
    %155 = vmatprep.subr.mxu0 0.0
    %156 = vmatpush1.msra.mxu0 0.0
    %157 = vmatprep.subr.mxu0 0.0
    %158 = vmatpush1.msra.mxu0 0.0
    %159 = vmatprep.subr.mxu0 0.0
    %160 = vmatpush1.msra.mxu0 0.0
    %161 = vmatprep.subr.mxu0 0.0
    %162 = vmatpush1.msra.mxu0 0.0
    %163 = vmatprep.subr.mxu0 0.0
    %164 = vmatpush1.msra.mxu0 0.0
    %165 = vmatprep.subr.mxu0 0.0
    %166 = vmatpush1.msra.mxu0 0.0
    %167 = vmatprep.subr.mxu0 0.0
    %168 = vmatpush1.msra.mxu0 0.0
    %169 = vmatprep.subr.mxu0 0.0
    %170 = vmatpush1.msra.mxu0 0.0
    %171 = vmatprep.subr.mxu0 0.0
    %172 = vmatpush1.msra.mxu0 0.0
    %173 = vmatprep.subr.mxu0 0.0
    %174 = vmatpush1.msra.mxu0 0.0
    %175 = vmatprep.subr.mxu0 0.0
    %176 = vmatpush1.msra.mxu0 0.0
    %177 = vmatprep.subr.mxu0 0.0
    %178 = vmatpush1.msra.mxu0 0.0
    %179 = vmatprep.subr.mxu0 0.0
    %180 = vmatpush1.msra.mxu0 0.0
    %181 = vmatprep.subr.mxu0 0.0
    %182 = vmatpush1.msra.mxu0 0.0
    %183 = vmatprep.subr.mxu0 0.0
    %184 = vmatpush1.msra.mxu0 0.0
    %185 = vmatprep.subr.mxu0 0.0
    %186 = vmatpush1.msra.mxu0 0.0
    %187 = vmatprep.subr.mxu0 0.0
    %188 = vmatpush1.msra.mxu0 0.0
    %189 = vmatprep.subr.mxu0 0.0
    %190 = vmatpush1.msra.mxu0 0.0
    %191 = vmatprep.subr.mxu0 0.0
    %192 = vmatpush1.msra.mxu0 0.0
    %193 = vmatprep.subr.mxu0 0.0
    %194 = vmatpush1.msra.mxu0 0.0
    %195 = vmatprep.mubr.f32.mxu0 0.0
    %196 = vmatmul.mubr.f32.gmra.mrb[0].mxu0 %v129
    %v197 = vpop.f32.mrb[0].mxu0
    %v198 = vadd.f32 0.0, %v197
    %v199 = vpop.f32.mrb[0].mxu0
    %200 = vdwg.mxu0
    %201 = vmatprep.subr.mxu0 0.0
    %202 = vmatpush1.msra.mxu0 %v100
    %203 = vmatprep.subr.mxu0 0.0
    %204 = vmatpush1.msra.mxu0 %v101
    %205 = vmatprep.subr.mxu0 0.0
    %206 = vmatpush1.msra.mxu0 %v102
    %207 = vmatprep.subr.mxu0 0.0
    %208 = vmatpush1.msra.mxu0 %v103
    %209 = vmatprep.subr.mxu0 0.0
    %210 = vmatpush1.msra.mxu0 0.0
    %211 = vmatprep.subr.mxu0 0.0
    %212 = vmatpush1.msra.mxu0 0.0
    %213 = vmatprep.subr.mxu0 0.0
    %214 = vmatpush1.msra.mxu0 0.0
    %215 = vmatprep.subr.mxu0 0.0
    %216 = vmatpush1.msra.mxu0 0.0
    %217 = vmatprep.subr.mxu0 0.0
    %218 = vmatpush1.msra.mxu0 0.0
    %219 = vmatprep.subr.mxu0 0.0
    %220 = vmatpush1.msra.mxu0 0.0
    %221 = vmatprep.subr.mxu0 0.0
    %222 = vmatpush1.msra.mxu0 0.0
    %223 = vmatprep.subr.mxu0 0.0
    %224 = vmatpush1.msra.mxu0 0.0
    %225 = vmatprep.subr.mxu0 0.0
    %226 = vmatpush1.msra.mxu0 0.0
    %227 = vmatprep.subr.mxu0 0.0
    %228 = vmatpush1.msra.mxu0 0.0
    %229 = vmatprep.subr.mxu0 0.0
    %230 = vmatpush1.msra.mxu0 0.0
    %231 = vmatprep.subr.mxu0 0.0
    %232 = vmatpush1.msra.mxu0 0.0
    %233 = vmatprep.subr.mxu0 0.0
    %234 = vmatpush1.msra.mxu0 0.0
    %235 = vmatprep.subr.mxu0 0.0
    %236 = vmatpush1.msra.mxu0 0.0
    %237 = vmatprep.subr.mxu0 0.0
    %238 = vmatpush1.msra.mxu0 0.0
    %239 = vmatprep.subr.mxu0 0.0
    %240 = vmatpush1.msra.mxu0 0.0
    %241 = vmatprep.subr.mxu0 0.0
    %242 = vmatpush1.msra.mxu0 0.0
    %243 = vmatprep.subr.mxu0 0.0
    %244 = vmatpush1.msra.mxu0 0.0
    %245 = vmatprep.subr.mxu0 0.0
    %246 = vmatpush1.msra.mxu0 0.0
    %247 = vmatprep.subr.mxu0 0.0
    %248 = vmatpush1.msra.mxu0 0.0
    %249 = vmatprep.subr.mxu0 0.0
    %250 = vmatpush1.msra.mxu0 0.0
    %251 = vmatprep.subr.mxu0 0.0
    %252 = vmatpush1.msra.mxu0 0.0
    %253 = vmatprep.subr.mxu0 0.0
    %254 = vmatpush1.msra.mxu0 0.0
    %255 = vmatprep.subr.mxu0 0.0
    %256 = vmatpush1.msra.mxu0 0.0
    %257 = vmatprep.subr.mxu0 0.0
    %258 = vmatpush1.msra.mxu0 0.0
    %259 = vmatprep.subr.mxu0 0.0
    %260 = vmatpush1.msra.mxu0 0.0
    %261 = vmatprep.subr.mxu0 0.0
    %262 = vmatpush1.msra.mxu0 0.0
    %263 = vmatprep.subr.mxu0 0.0
    %264 = vmatpush1.msra.mxu0 0.0
    %265 = vmatprep.mubr.f32.mxu0 0.0
    %266 = vmatmul.mubr.f32.gmra.mrb[0].mxu0 %v129
    %v267 = vpop.f32.mrb[0].mxu0
    %v268 = vadd.f32 0.0, %v267
    %v269 = vpop.f32.mrb[0].mxu0
    %270 = vdwg.mxu0
    %271 = vmatprep.subr.mxu0 0.0
    %272 = vmatpush1.msra.mxu0 %v104
    %273 = vmatprep.subr.mxu0 0.0
    %274 = vmatpush1.msra.mxu0 %v105
    %275 = vmatprep.subr.mxu0 0.0
    %276 = vmatpush1.msra.mxu0 %v106
    %277 = vmatprep.subr.mxu0 0.0
    %278 = vmatpush1.msra.mxu0 %v107
    %279 = vmatprep.subr.mxu0 0.0
    %280 = vmatpush1.msra.mxu0 0.0
    %281 = vmatprep.subr.mxu0 0.0
    %282 = vmatpush1.msra.mxu0 0.0
    %283 = vmatprep.subr.mxu0 0.0
    %284 = vmatpush1.msra.mxu0 0.0
    %285 = vmatprep.subr.mxu0 0.0
    %286 = vmatpush1.msra.mxu0 0.0
    %287 = vmatprep.subr.mxu0 0.0
    %288 = vmatpush1.msra.mxu0 0.0
    %289 = vmatprep.subr.mxu0 0.0
    %290 = vmatpush1.msra.mxu0 0.0
    %291 = vmatprep.subr.mxu0 0.0
    %292 = vmatpush1.msra.mxu0 0.0
    %293 = vmatprep.subr.mxu0 0.0
    %294 = vmatpush1.msra.mxu0 0.0
    %295 = vmatprep.subr.mxu0 0.0
    %296 = vmatpush1.msra.mxu0 0.0
    %297 = vmatprep.subr.mxu0 0.0
    %298 = vmatpush1.msra.mxu0 0.0
    %299 = vmatprep.subr.mxu0 0.0
    %300 = vmatpush1.msra.mxu0 0.0
    %301 = vmatprep.subr.mxu0 0.0
    %302 = vmatpush1.msra.mxu0 0.0
    %303 = vmatprep.subr.mxu0 0.0
    %304 = vmatpush1.msra.mxu0 0.0
    %305 = vmatprep.subr.mxu0 0.0
    %306 = vmatpush1.msra.mxu0 0.0
    %307 = vmatprep.subr.mxu0 0.0
    %308 = vmatpush1.msra.mxu0 0.0
    %309 = vmatprep.subr.mxu0 0.0
    %310 = vmatpush1.msra.mxu0 0.0
    %311 = vmatprep.subr.mxu0 0.0
    %312 = vmatpush1.msra.mxu0 0.0
    %313 = vmatprep.subr.mxu0 0.0
    %314 = vmatpush1.msra.mxu0 0.0
    %315 = vmatprep.subr.mxu0 0.0
    %316 = vmatpush1.msra.mxu0 0.0
    %317 = vmatprep.subr.mxu0 0.0
    %318 = vmatpush1.msra.mxu0 0.0
    %319 = vmatprep.subr.mxu0 0.0
    %320 = vmatpush1.msra.mxu0 0.0
    %321 = vmatprep.subr.mxu0 0.0
    %322 = vmatpush1.msra.mxu0 0.0
    %323 = vmatprep.subr.mxu0 0.0
    %324 = vmatpush1.msra.mxu0 0.0
    %325 = vmatprep.subr.mxu0 0.0
    %326 = vmatpush1.msra.mxu0 0.0
    %327 = vmatprep.subr.mxu0 0.0
    %328 = vmatpush1.msra.mxu0 0.0
    %329 = vmatprep.subr.mxu0 0.0
    %330 = vmatpush1.msra.mxu0 0.0
    %331 = vmatprep.subr.mxu0 0.0
    %332 = vmatpush1.msra.mxu0 0.0
    %333 = vmatprep.subr.mxu0 0.0
    %334 = vmatpush1.msra.mxu0 0.0
    %335 = vmatprep.mubr.f32.mxu0 0.0
    %336 = vmatmul.mubr.f32.gmra.mrb[0].mxu0 %v129
    %v337 = vpop.f32.mrb[0].mxu0
    %v338 = vadd.f32 0.0, %v337
    %v339 = vpop.f32.mrb[0].mxu0
    %340 = vdwg.mxu0
    %341 = vmatprep.subr.mxu0 0.0
    %342 = vmatpush1.msra.mxu0 %v108
    %343 = vmatprep.subr.mxu0 0.0
    %344 = vmatpush1.msra.mxu0 %v109
    %345 = vmatprep.subr.mxu0 0.0
    %346 = vmatpush1.msra.mxu0 %v110
    %347 = vmatprep.subr.mxu0 0.0
    %348 = vmatpush1.msra.mxu0 %v111
    %349 = vmatprep.subr.mxu0 0.0
    %350 = vmatpush1.msra.mxu0 0.0
    %351 = vmatprep.subr.mxu0 0.0
    %352 = vmatpush1.msra.mxu0 0.0
    %353 = vmatprep.subr.mxu0 0.0
    %354 = vmatpush1.msra.mxu0 0.0
    %355 = vmatprep.subr.mxu0 0.0
    %356 = vmatpush1.msra.mxu0 0.0
    %357 = vmatprep.subr.mxu0 0.0
    %358 = vmatpush1.msra.mxu0 0.0
    %359 = vmatprep.subr.mxu0 0.0
    %360 = vmatpush1.msra.mxu0 0.0
    %361 = vmatprep.subr.mxu0 0.0
    %362 = vmatpush1.msra.mxu0 0.0
    %363 = vmatprep.subr.mxu0 0.0
    %364 = vmatpush1.msra.mxu0 0.0
    %365 = vmatprep.subr.mxu0 0.0
    %366 = vmatpush1.msra.mxu0 0.0
    %367 = vmatprep.subr.mxu0 0.0
    %368 = vmatpush1.msra.mxu0 0.0
    %369 = vmatprep.subr.mxu0 0.0
    %370 = vmatpush1.msra.mxu0 0.0
    %371 = vmatprep.subr.mxu0 0.0
    %372 = vmatpush1.msra.mxu0 0.0
    %373 = vmatprep.subr.mxu0 0.0
    %374 = vmatpush1.msra.mxu0 0.0
    %375 = vmatprep.subr.mxu0 0.0
    %376 = vmatpush1.msra.mxu0 0.0
    %377 = vmatprep.subr.mxu0 0.0
    %378 = vmatpush1.msra.mxu0 0.0
    %379 = vmatprep.subr.mxu0 0.0
    %380 = vmatpush1.msra.mxu0 0.0
    %381 = vmatprep.subr.mxu0 0.0
    %382 = vmatpush1.msra.mxu0 0.0
    %383 = vmatprep.subr.mxu0 0.0
    %384 = vmatpush1.msra.mxu0 0.0
    %385 = vmatprep.subr.mxu0 0.0
    %386 = vmatpush1.msra.mxu0 0.0
    %387 = vmatprep.subr.mxu0 0.0
    %388 = vmatpush1.msra.mxu0 0.0
    %389 = vmatprep.subr.mxu0 0.0
    %390 = vmatpush1.msra.mxu0 0.0
    %391 = vmatprep.subr.mxu0 0.0
    %392 = vmatpush1.msra.mxu0 0.0
    %393 = vmatprep.subr.mxu0 0.0
    %394 = vmatpush1.msra.mxu0 0.0
    %395 = vmatprep.subr.mxu0 0.0
    %396 = vmatpush1.msra.mxu0 0.0
    %397 = vmatprep.subr.mxu0 0.0
    %398 = vmatpush1.msra.mxu0 0.0
    %399 = vmatprep.subr.mxu0 0.0
    %400 = vmatpush1.msra.mxu0 0.0
    %401 = vmatprep.subr.mxu0 0.0
    %402 = vmatpush1.msra.mxu0 0.0
    %403 = vmatprep.subr.mxu0 0.0
    %404 = vmatpush1.msra.mxu0 0.0
    %405 = vmatprep.mubr.f32.mxu0 0.0
    %406 = vmatmul.mubr.f32.gmra.mrb[0].mxu0 %v129
    %v407 = vpop.f32.mrb[0].mxu0
    %v408 = vadd.f32 0.0, %v407
    %v409 = vpop.f32.mrb[0].mxu0
    %410 = vdwg.mxu0
    %v412 = vsel %vm52, %v95, 0
    %414 = vmatprep.subr.mxu0 0.0
    %415 = vmatpush1.msra.mxu0 %v112
    %416 = vmatprep.subr.mxu0 0.0
    %417 = vmatpush1.msra.mxu0 %v113
    %418 = vmatprep.subr.mxu0 0.0
    %419 = vmatpush1.msra.mxu0 %v114
    %420 = vmatprep.subr.mxu0 0.0
    %421 = vmatpush1.msra.mxu0 %v115
    %422 = vmatprep.subr.mxu0 0.0
    %423 = vmatpush1.msra.mxu0 0.0
    %424 = vmatprep.subr.mxu0 0.0
    %425 = vmatpush1.msra.mxu0 0.0
    %426 = vmatprep.subr.mxu0 0.0
    %427 = vmatpush1.msra.mxu0 0.0
    %428 = vmatprep.subr.mxu0 0.0
    %429 = vmatpush1.msra.mxu0 0.0
    %430 = vmatprep.subr.mxu0 0.0
    %431 = vmatpush1.msra.mxu0 0.0
    %432 = vmatprep.subr.mxu0 0.0
    %433 = vmatpush1.msra.mxu0 0.0
    %434 = vmatprep.subr.mxu0 0.0
    %435 = vmatpush1.msra.mxu0 0.0
    %436 = vmatprep.subr.mxu0 0.0
    %437 = vmatpush1.msra.mxu0 0.0
    %438 = vmatprep.subr.mxu0 0.0
    %439 = vmatpush1.msra.mxu0 0.0
    %440 = vmatprep.subr.mxu0 0.0
    %441 = vmatpush1.msra.mxu0 0.0
    %442 = vmatprep.subr.mxu0 0.0
    %443 = vmatpush1.msra.mxu0 0.0
    %444 = vmatprep.subr.mxu0 0.0
    %445 = vmatpush1.msra.mxu0 0.0
    %446 = vmatprep.subr.mxu0 0.0
    %447 = vmatpush1.msra.mxu0 0.0
    %448 = vmatprep.subr.mxu0 0.0
    %449 = vmatpush1.msra.mxu0 0.0
    %450 = vmatprep.subr.mxu0 0.0
    %451 = vmatpush1.msra.mxu0 0.0
    %452 = vmatprep.subr.mxu0 0.0
    %453 = vmatpush1.msra.mxu0 0.0
    %454 = vmatprep.subr.mxu0 0.0
    %455 = vmatpush1.msra.mxu0 0.0
    %456 = vmatprep.subr.mxu0 0.0
    %457 = vmatpush1.msra.mxu0 0.0
    %458 = vmatprep.subr.mxu0 0.0
    %459 = vmatpush1.msra.mxu0 0.0
    %460 = vmatprep.subr.mxu0 0.0
    %461 = vmatpush1.msra.mxu0 0.0
    %462 = vmatprep.subr.mxu0 0.0
    %463 = vmatpush1.msra.mxu0 0.0
    %464 = vmatprep.subr.mxu0 0.0
    %465 = vmatpush1.msra.mxu0 0.0
    %466 = vmatprep.subr.mxu0 0.0
    %467 = vmatpush1.msra.mxu0 0.0
    %468 = vmatprep.subr.mxu0 0.0
    %469 = vmatpush1.msra.mxu0 0.0
    %470 = vmatprep.subr.mxu0 0.0
    %471 = vmatpush1.msra.mxu0 0.0
    %472 = vmatprep.subr.mxu0 0.0
    %473 = vmatpush1.msra.mxu0 0.0
    %474 = vmatprep.subr.mxu0 0.0
    %475 = vmatpush1.msra.mxu0 0.0
    %476 = vmatprep.subr.mxu0 0.0
    %477 = vmatpush1.msra.mxu0 0.0
    %478 = vmatprep.mubr.f32.mxu0 0.0
    %479 = vmatmul.mubr.f32.gmra.mrb[0].mxu0 %v412
    %v480 = vpop.f32.mrb[0].mxu0
    %v481 = vadd.f32 0.0, %v480
    %v482 = vpop.f32.mrb[0].mxu0
    %483 = vdwg.mxu0
    %484 = vmatprep.subr.mxu0 0.0
    %485 = vmatpush1.msra.mxu0 %v116
    %486 = vmatprep.subr.mxu0 0.0
    %487 = vmatpush1.msra.mxu0 %v117
    %488 = vmatprep.subr.mxu0 0.0
    %489 = vmatpush1.msra.mxu0 %v118
    %490 = vmatprep.subr.mxu0 0.0
    %491 = vmatpush1.msra.mxu0 %v119
    %492 = vmatprep.subr.mxu0 0.0
    %493 = vmatpush1.msra.mxu0 0.0
    %494 = vmatprep.subr.mxu0 0.0
    %495 = vmatpush1.msra.mxu0 0.0
    %496 = vmatprep.subr.mxu0 0.0
    %497 = vmatpush1.msra.mxu0 0.0
    %498 = vmatprep.subr.mxu0 0.0
    %499 = vmatpush1.msra.mxu0 0.0
    %500 = vmatprep.subr.mxu0 0.0
    %501 = vmatpush1.msra.mxu0 0.0
    %502 = vmatprep.subr.mxu0 0.0
    %503 = vmatpush1.msra.mxu0 0.0
    %504 = vmatprep.subr.mxu0 0.0
    %505 = vmatpush1.msra.mxu0 0.0
    %506 = vmatprep.subr.mxu0 0.0
    %507 = vmatpush1.msra.mxu0 0.0
    %508 = vmatprep.subr.mxu0 0.0
    %509 = vmatpush1.msra.mxu0 0.0
    %510 = vmatprep.subr.mxu0 0.0
    %511 = vmatpush1.msra.mxu0 0.0
    %512 = vmatprep.subr.mxu0 0.0
    %513 = vmatpush1.msra.mxu0 0.0
    %514 = vmatprep.subr.mxu0 0.0
    %515 = vmatpush1.msra.mxu0 0.0
    %516 = vmatprep.subr.mxu0 0.0
    %517 = vmatpush1.msra.mxu0 0.0
    %518 = vmatprep.subr.mxu0 0.0
    %519 = vmatpush1.msra.mxu0 0.0
    %520 = vmatprep.subr.mxu0 0.0
    %521 = vmatpush1.msra.mxu0 0.0
    %522 = vmatprep.subr.mxu0 0.0
    %523 = vmatpush1.msra.mxu0 0.0
    %524 = vmatprep.subr.mxu0 0.0
    %525 = vmatpush1.msra.mxu0 0.0
    %526 = vmatprep.subr.mxu0 0.0
    %527 = vmatpush1.msra.mxu0 0.0
    %528 = vmatprep.subr.mxu0 0.0
    %529 = vmatpush1.msra.mxu0 0.0
    %530 = vmatprep.subr.mxu0 0.0
    %531 = vmatpush1.msra.mxu0 0.0
    %532 = vmatprep.subr.mxu0 0.0
    %533 = vmatpush1.msra.mxu0 0.0
    %534 = vmatprep.subr.mxu0 0.0
    %535 = vmatpush1.msra.mxu0 0.0
    %536 = vmatprep.subr.mxu0 0.0
    %537 = vmatpush1.msra.mxu0 0.0
    %538 = vmatprep.subr.mxu0 0.0
    %539 = vmatpush1.msra.mxu0 0.0
    %540 = vmatprep.subr.mxu0 0.0
    %541 = vmatpush1.msra.mxu0 0.0
    %542 = vmatprep.subr.mxu0 0.0
    %543 = vmatpush1.msra.mxu0 0.0
    %544 = vmatprep.subr.mxu0 0.0
    %545 = vmatpush1.msra.mxu0 0.0
    %546 = vmatprep.subr.mxu0 0.0
    %547 = vmatpush1.msra.mxu0 0.0
    %548 = vmatprep.mubr.f32.mxu0 0.0
    %549 = vmatmul.mubr.f32.gmra.mrb[0].mxu0 %v412
    %v550 = vpop.f32.mrb[0].mxu0
    %v551 = vadd.f32 0.0, %v550
    %v552 = vpop.f32.mrb[0].mxu0
    %553 = vdwg.mxu0
    %554 = vmatprep.subr.mxu0 0.0
    %555 = vmatpush1.msra.mxu0 %v120
    %556 = vmatprep.subr.mxu0 0.0
    %557 = vmatpush1.msra.mxu0 %v121
    %558 = vmatprep.subr.mxu0 0.0
    %559 = vmatpush1.msra.mxu0 %v122
    %560 = vmatprep.subr.mxu0 0.0
    %561 = vmatpush1.msra.mxu0 %v123
    %562 = vmatprep.subr.mxu0 0.0
    %563 = vmatpush1.msra.mxu0 0.0
    %564 = vmatprep.subr.mxu0 0.0
    %565 = vmatpush1.msra.mxu0 0.0
    %566 = vmatprep.subr.mxu0 0.0
    %567 = vmatpush1.msra.mxu0 0.0
    %568 = vmatprep.subr.mxu0 0.0
    %569 = vmatpush1.msra.mxu0 0.0
    %570 = vmatprep.subr.mxu0 0.0
    %571 = vmatpush1.msra.mxu0 0.0
    %572 = vmatprep.subr.mxu0 0.0
    %573 = vmatpush1.msra.mxu0 0.0
    %574 = vmatprep.subr.mxu0 0.0
    %575 = vmatpush1.msra.mxu0 0.0
    %576 = vmatprep.subr.mxu0 0.0
    %577 = vmatpush1.msra.mxu0 0.0
    %578 = vmatprep.subr.mxu0 0.0
    %579 = vmatpush1.msra.mxu0 0.0
    %580 = vmatprep.subr.mxu0 0.0
    %581 = vmatpush1.msra.mxu0 0.0
    %582 = vmatprep.subr.mxu0 0.0
    %583 = vmatpush1.msra.mxu0 0.0
    %584 = vmatprep.subr.mxu0 0.0
    %585 = vmatpush1.msra.mxu0 0.0
    %586 = vmatprep.subr.mxu0 0.0
    %587 = vmatpush1.msra.mxu0 0.0
    %588 = vmatprep.subr.mxu0 0.0
    %589 = vmatpush1.msra.mxu0 0.0
    %590 = vmatprep.subr.mxu0 0.0
    %591 = vmatpush1.msra.mxu0 0.0
    %592 = vmatprep.subr.mxu0 0.0
    %593 = vmatpush1.msra.mxu0 0.0
    %594 = vmatprep.subr.mxu0 0.0
    %595 = vmatpush1.msra.mxu0 0.0
    %596 = vmatprep.subr.mxu0 0.0
    %597 = vmatpush1.msra.mxu0 0.0
    %598 = vmatprep.subr.mxu0 0.0
    %599 = vmatpush1.msra.mxu0 0.0
    %600 = vmatprep.subr.mxu0 0.0
    %601 = vmatpush1.msra.mxu0 0.0
    %602 = vmatprep.subr.mxu0 0.0
    %603 = vmatpush1.msra.mxu0 0.0
    %604 = vmatprep.subr.mxu0 0.0
    %605 = vmatpush1.msra.mxu0 0.0
    %606 = vmatprep.subr.mxu0 0.0
    %607 = vmatpush1.msra.mxu0 0.0
    %608 = vmatprep.subr.mxu0 0.0
    %609 = vmatpush1.msra.mxu0 0.0
    %610 = vmatprep.subr.mxu0 0.0
    %611 = vmatpush1.msra.mxu0 0.0
    %612 = vmatprep.subr.mxu0 0.0
    %613 = vmatpush1.msra.mxu0 0.0
    %614 = vmatprep.subr.mxu0 0.0
    %615 = vmatpush1.msra.mxu0 0.0
    %616 = vmatprep.subr.mxu0 0.0
    %617 = vmatpush1.msra.mxu0 0.0
    %618 = vmatprep.mubr.f32.mxu0 0.0
    %619 = vmatmul.mubr.f32.gmra.mrb[0].mxu0 %v412
    %v620 = vpop.f32.mrb[0].mxu0
    %v621 = vadd.f32 0.0, %v620
    %v622 = vpop.f32.mrb[0].mxu0
    %623 = vdwg.mxu0
    %624 = vmatprep.subr.mxu0 0.0
    %625 = vmatpush1.msra.mxu0 %v124
    %626 = vmatprep.subr.mxu0 0.0
    %627 = vmatpush1.msra.mxu0 %v125
    %628 = vmatprep.subr.mxu0 0.0
    %629 = vmatpush1.msra.mxu0 %v126
    %630 = vmatprep.subr.mxu0 0.0
    %631 = vmatpush1.msra.mxu0 %v127
    %632 = vmatprep.subr.mxu0 0.0
    %633 = vmatpush1.msra.mxu0 0.0
    %634 = vmatprep.subr.mxu0 0.0
    %635 = vmatpush1.msra.mxu0 0.0
    %636 = vmatprep.subr.mxu0 0.0
    %637 = vmatpush1.msra.mxu0 0.0
    %638 = vmatprep.subr.mxu0 0.0
    %639 = vmatpush1.msra.mxu0 0.0
    %640 = vmatprep.subr.mxu0 0.0
    %641 = vmatpush1.msra.mxu0 0.0
    %642 = vmatprep.subr.mxu0 0.0
    %643 = vmatpush1.msra.mxu0 0.0
    %644 = vmatprep.subr.mxu0 0.0
    %645 = vmatpush1.msra.mxu0 0.0
    %646 = vmatprep.subr.mxu0 0.0
    %647 = vmatpush1.msra.mxu0 0.0
    %648 = vmatprep.subr.mxu0 0.0
    %649 = vmatpush1.msra.mxu0 0.0
    %650 = vmatprep.subr.mxu0 0.0
    %651 = vmatpush1.msra.mxu0 0.0
    %652 = vmatprep.subr.mxu0 0.0
    %653 = vmatpush1.msra.mxu0 0.0
    %654 = vmatprep.subr.mxu0 0.0
    %655 = vmatpush1.msra.mxu0 0.0
    %656 = vmatprep.subr.mxu0 0.0
    %657 = vmatpush1.msra.mxu0 0.0
    %658 = vmatprep.subr.mxu0 0.0
    %659 = vmatpush1.msra.mxu0 0.0
    %660 = vmatprep.subr.mxu0 0.0
    %661 = vmatpush1.msra.mxu0 0.0
    %662 = vmatprep.subr.mxu0 0.0
    %663 = vmatpush1.msra.mxu0 0.0
    %664 = vmatprep.subr.mxu0 0.0
    %665 = vmatpush1.msra.mxu0 0.0
    %666 = vmatprep.subr.mxu0 0.0
    %667 = vmatpush1.msra.mxu0 0.0
    %668 = vmatprep.subr.mxu0 0.0
    %669 = vmatpush1.msra.mxu0 0.0
    %670 = vmatprep.subr.mxu0 0.0
    %671 = vmatpush1.msra.mxu0 0.0
    %672 = vmatprep.subr.mxu0 0.0
    %673 = vmatpush1.msra.mxu0 0.0
    %674 = vmatprep.subr.mxu0 0.0
    %675 = vmatpush1.msra.mxu0 0.0
    %676 = vmatprep.subr.mxu0 0.0
    %677 = vmatpush1.msra.mxu0 0.0
    %678 = vmatprep.subr.mxu0 0.0
    %679 = vmatpush1.msra.mxu0 0.0
    %680 = vmatprep.subr.mxu0 0.0
    %681 = vmatpush1.msra.mxu0 0.0
    %682 = vmatprep.subr.mxu0 0.0
    %683 = vmatpush1.msra.mxu0 0.0
    %684 = vmatprep.subr.mxu0 0.0
    %685 = vmatpush1.msra.mxu0 0.0
    %686 = vmatprep.subr.mxu0 0.0
    %687 = vmatpush1.msra.mxu0 0.0
    %688 = vmatprep.mubr.f32.mxu0 0.0
    %689 = vmatmul.mubr.f32.gmra.mrb[0].mxu0 %v412
    %v690 = vpop.f32.mrb[0].mxu0
    %v691 = vadd.f32 0.0, %v690
    %v692 = vpop.f32.mrb[0].mxu0
    %693 = vdwg.mxu0
    %v694 = vld [vmem:[%s4] sm:$0xff]
    %v695 = vld [vmem:[%s4 + $0x8] sm:$0xff]
    %v696 = vld [vmem:[%s4 + $0x10] sm:$0xff]
    %v697 = vld [vmem:[%s4 + $0x18] sm:$0xff]
    %v698 = vld [vmem:[%s4 + $0x20] sm:$0xff]
    %v699 = vld [vmem:[%s4 + $0x28] sm:$0xff]
    %v700 = vld [vmem:[%s4 + $0x30] sm:$0xff]
    %v701 = vld [vmem:[%s4 + $0x38] sm:$0xff]
    %v702 = vld [vmem:[%s4 + $0x40] sm:$0xff]
    %v703 = vld [vmem:[%s4 + $0x48] sm:$0xff]
    %v704 = vld [vmem:[%s4 + $0x50] sm:$0xff]
    %v705 = vld [vmem:[%s4 + $0x58] sm:$0xff]
    %v706 = vld [vmem:[%s4 + $0x60] sm:$0xff]
    %v707 = vld [vmem:[%s4 + $0x68] sm:$0xff]
    %v708 = vld [vmem:[%s4 + $0x70] sm:$0xff]
    %v709 = vld [vmem:[%s4 + $0x78] sm:$0xff]
    %v710 = vld [vmem:[%s4 + $0x80] sm:$0xff]
    %v711 = vld [vmem:[%s4 + $0x88] sm:$0xff]
    %v712 = vld [vmem:[%s4 + $0x90] sm:$0xff]
    %v713 = vld [vmem:[%s4 + $0x98] sm:$0xff]
    %v714 = vld [vmem:[%s4 + $0xa0] sm:$0xff]
    %v715 = vld [vmem:[%s4 + $0xa8] sm:$0xff]
    %v716 = vld [vmem:[%s4 + $0xb0] sm:$0xff]
    %v717 = vld [vmem:[%s4 + $0xb8] sm:$0xff]
    %v718 = vld [vmem:[%s4 + $0xc0] sm:$0xff]
    %v719 = vld [vmem:[%s4 + $0xc8] sm:$0xff]
    %v720 = vld [vmem:[%s4 + $0xd0] sm:$0xff]
    %v721 = vld [vmem:[%s4 + $0xd8] sm:$0xff]
    %v722 = vld [vmem:[%s4 + $0xe0] sm:$0xff]
    %v723 = vld [vmem:[%s4 + $0xe8] sm:$0xff]
    %v724 = vld [vmem:[%s4 + $0xf0] sm:$0xff]
    %v725 = vld [vmem:[%s4 + $0xf8] sm:$0xff]
    %726 = vmatprep.subr.mxu0 0.0
    %727 = vmatpush1.msra.mxu0 %v694
    %728 = vmatprep.subr.mxu0 0.0
    %729 = vmatpush1.msra.mxu0 %v695
    %730 = vmatprep.subr.mxu0 0.0
    %731 = vmatpush1.msra.mxu0 %v696
    %732 = vmatprep.subr.mxu0 0.0
    %733 = vmatpush1.msra.mxu0 %v697
    %734 = vmatprep.subr.mxu0 0.0
    %735 = vmatpush1.msra.mxu0 0.0
    %736 = vmatprep.subr.mxu0 0.0
    %737 = vmatpush1.msra.mxu0 0.0
    %738 = vmatprep.subr.mxu0 0.0
    %739 = vmatpush1.msra.mxu0 0.0
    %740 = vmatprep.subr.mxu0 0.0
    %741 = vmatpush1.msra.mxu0 0.0
    %742 = vmatprep.subr.mxu0 0.0
    %743 = vmatpush1.msra.mxu0 0.0
    %744 = vmatprep.subr.mxu0 0.0
    %745 = vmatpush1.msra.mxu0 0.0
    %746 = vmatprep.subr.mxu0 0.0
    %747 = vmatpush1.msra.mxu0 0.0
    %748 = vmatprep.subr.mxu0 0.0
    %749 = vmatpush1.msra.mxu0 0.0
    %750 = vmatprep.subr.mxu0 0.0
    %751 = vmatpush1.msra.mxu0 0.0
    %752 = vmatprep.subr.mxu0 0.0
    %753 = vmatpush1.msra.mxu0 0.0
    %754 = vmatprep.subr.mxu0 0.0
    %755 = vmatpush1.msra.mxu0 0.0
    %756 = vmatprep.subr.mxu0 0.0
    %757 = vmatpush1.msra.mxu0 0.0
    %758 = vmatprep.subr.mxu0 0.0
    %759 = vmatpush1.msra.mxu0 0.0
    %760 = vmatprep.subr.mxu0 0.0
    %761 = vmatpush1.msra.mxu0 0.0
    %762 = vmatprep.subr.mxu0 0.0
    %763 = vmatpush1.msra.mxu0 0.0
    %764 = vmatprep.subr.mxu0 0.0
    %765 = vmatpush1.msra.mxu0 0.0
    %766 = vmatprep.subr.mxu0 0.0
    %767 = vmatpush1.msra.mxu0 0.0
    %768 = vmatprep.subr.mxu0 0.0
    %769 = vmatpush1.msra.mxu0 0.0
    %770 = vmatprep.subr.mxu0 0.0
    %771 = vmatpush1.msra.mxu0 0.0
    %772 = vmatprep.subr.mxu0 0.0
    %773 = vmatpush1.msra.mxu0 0.0
    %774 = vmatprep.subr.mxu0 0.0
    %775 = vmatpush1.msra.mxu0 0.0
    %776 = vmatprep.subr.mxu0 0.0
    %777 = vmatpush1.msra.mxu0 0.0
    %778 = vmatprep.subr.mxu0 0.0
    %779 = vmatpush1.msra.mxu0 0.0
    %780 = vmatprep.subr.mxu0 0.0
    %781 = vmatpush1.msra.mxu0 0.0
    %782 = vmatprep.subr.mxu0 0.0
    %783 = vmatpush1.msra.mxu0 0.0
    %784 = vmatprep.subr.mxu0 0.0
    %785 = vmatpush1.msra.mxu0 0.0
    %786 = vmatprep.subr.mxu0 0.0
    %787 = vmatpush1.msra.mxu0 0.0
    %788 = vmatprep.subr.mxu0 0.0
    %789 = vmatpush1.msra.mxu0 0.0
    %790 = vmatprep.mubr.f32.mxu0 0.0
    %791 = vmatmul.mubr.f32.gmra.mrb[0].mxu0 %v129
    %v792 = vpop.f32.mrb[0].mxu0
    %v793 = vadd.f32 0.0, %v792
    %v794 = vpop.f32.mrb[0].mxu0
    %795 = vdwg.mxu0
    %796 = vmatprep.subr.mxu0 0.0
    %797 = vmatpush1.msra.mxu0 %v698
    %798 = vmatprep.subr.mxu0 0.0
    %799 = vmatpush1.msra.mxu0 %v699
    %800 = vmatprep.subr.mxu0 0.0
    %801 = vmatpush1.msra.mxu0 %v700
    %802 = vmatprep.subr.mxu0 0.0
    %803 = vmatpush1.msra.mxu0 %v701
    %804 = vmatprep.subr.mxu0 0.0
    %805 = vmatpush1.msra.mxu0 0.0
    %806 = vmatprep.subr.mxu0 0.0
    %807 = vmatpush1.msra.mxu0 0.0
    %808 = vmatprep.subr.mxu0 0.0
    %809 = vmatpush1.msra.mxu0 0.0
    %810 = vmatprep.subr.mxu0 0.0
    %811 = vmatpush1.msra.mxu0 0.0
    %812 = vmatprep.subr.mxu0 0.0
    %813 = vmatpush1.msra.mxu0 0.0
    %814 = vmatprep.subr.mxu0 0.0
    %815 = vmatpush1.msra.mxu0 0.0
    %816 = vmatprep.subr.mxu0 0.0
    %817 = vmatpush1.msra.mxu0 0.0
    %818 = vmatprep.subr.mxu0 0.0
    %819 = vmatpush1.msra.mxu0 0.0
    %820 = vmatprep.subr.mxu0 0.0
    %821 = vmatpush1.msra.mxu0 0.0
    %822 = vmatprep.subr.mxu0 0.0
    %823 = vmatpush1.msra.mxu0 0.0
    %824 = vmatprep.subr.mxu0 0.0
    %825 = vmatpush1.msra.mxu0 0.0
    %826 = vmatprep.subr.mxu0 0.0
    %827 = vmatpush1.msra.mxu0 0.0
    %828 = vmatprep.subr.mxu0 0.0
    %829 = vmatpush1.msra.mxu0 0.0
    %830 = vmatprep.subr.mxu0 0.0
    %831 = vmatpush1.msra.mxu0 0.0
    %832 = vmatprep.subr.mxu0 0.0
    %833 = vmatpush1.msra.mxu0 0.0
    %834 = vmatprep.subr.mxu0 0.0
    %835 = vmatpush1.msra.mxu0 0.0
    %836 = vmatprep.subr.mxu0 0.0
    %837 = vmatpush1.msra.mxu0 0.0
    %838 = vmatprep.subr.mxu0 0.0
    %839 = vmatpush1.msra.mxu0 0.0
    %840 = vmatprep.subr.mxu0 0.0
    %841 = vmatpush1.msra.mxu0 0.0
    %842 = vmatprep.subr.mxu0 0.0
    %843 = vmatpush1.msra.mxu0 0.0
    %844 = vmatprep.subr.mxu0 0.0
    %845 = vmatpush1.msra.mxu0 0.0
    %846 = vmatprep.subr.mxu0 0.0
    %847 = vmatpush1.msra.mxu0 0.0
    %848 = vmatprep.subr.mxu0 0.0
    %849 = vmatpush1.msra.mxu0 0.0
    %850 = vmatprep.subr.mxu0 0.0
    %851 = vmatpush1.msra.mxu0 0.0
    %852 = vmatprep.subr.mxu0 0.0
    %853 = vmatpush1.msra.mxu0 0.0
    %854 = vmatprep.subr.mxu0 0.0
    %855 = vmatpush1.msra.mxu0 0.0
    %856 = vmatprep.subr.mxu0 0.0
    %857 = vmatpush1.msra.mxu0 0.0
    %858 = vmatprep.subr.mxu0 0.0
    %859 = vmatpush1.msra.mxu0 0.0
    %860 = vmatprep.mubr.f32.mxu0 0.0
    %861 = vmatmul.mubr.f32.gmra.mrb[0].mxu0 %v129
    %v862 = vpop.f32.mrb[0].mxu0
    %v863 = vadd.f32 0.0, %v862
    %v864 = vpop.f32.mrb[0].mxu0
    %865 = vdwg.mxu0
    %866 = vmatprep.subr.mxu0 0.0
    %867 = vmatpush1.msra.mxu0 %v702
    %868 = vmatprep.subr.mxu0 0.0
    %869 = vmatpush1.msra.mxu0 %v703
    %870 = vmatprep.subr.mxu0 0.0
    %871 = vmatpush1.msra.mxu0 %v704
    %872 = vmatprep.subr.mxu0 0.0
    %873 = vmatpush1.msra.mxu0 %v705
    %874 = vmatprep.subr.mxu0 0.0
    %875 = vmatpush1.msra.mxu0 0.0
    %876 = vmatprep.subr.mxu0 0.0
    %877 = vmatpush1.msra.mxu0 0.0
    %878 = vmatprep.subr.mxu0 0.0
    %879 = vmatpush1.msra.mxu0 0.0
    %880 = vmatprep.subr.mxu0 0.0
    %881 = vmatpush1.msra.mxu0 0.0
    %882 = vmatprep.subr.mxu0 0.0
    %883 = vmatpush1.msra.mxu0 0.0
    %884 = vmatprep.subr.mxu0 0.0
    %885 = vmatpush1.msra.mxu0 0.0
    %886 = vmatprep.subr.mxu0 0.0
    %887 = vmatpush1.msra.mxu0 0.0
    %888 = vmatprep.subr.mxu0 0.0
    %889 = vmatpush1.msra.mxu0 0.0
    %890 = vmatprep.subr.mxu0 0.0
    %891 = vmatpush1.msra.mxu0 0.0
    %892 = vmatprep.subr.mxu0 0.0
    %893 = vmatpush1.msra.mxu0 0.0
    %894 = vmatprep.subr.mxu0 0.0
    %895 = vmatpush1.msra.mxu0 0.0
    %896 = vmatprep.subr.mxu0 0.0
    %897 = vmatpush1.msra.mxu0 0.0
    %898 = vmatprep.subr.mxu0 0.0
    %899 = vmatpush1.msra.mxu0 0.0
    %900 = vmatprep.subr.mxu0 0.0
    %901 = vmatpush1.msra.mxu0 0.0
    %902 = vmatprep.subr.mxu0 0.0
    %903 = vmatpush1.msra.mxu0 0.0
    %904 = vmatprep.subr.mxu0 0.0
    %905 = vmatpush1.msra.mxu0 0.0
    %906 = vmatprep.subr.mxu0 0.0
    %907 = vmatpush1.msra.mxu0 0.0
    %908 = vmatprep.subr.mxu0 0.0
    %909 = vmatpush1.msra.mxu0 0.0
    %910 = vmatprep.subr.mxu0 0.0
    %911 = vmatpush1.msra.mxu0 0.0
    %912 = vmatprep.subr.mxu0 0.0
    %913 = vmatpush1.msra.mxu0 0.0
    %914 = vmatprep.subr.mxu0 0.0
    %915 = vmatpush1.msra.mxu0 0.0
    %916 = vmatprep.subr.mxu0 0.0
    %917 = vmatpush1.msra.mxu0 0.0
    %918 = vmatprep.subr.mxu0 0.0
    %919 = vmatpush1.msra.mxu0 0.0
    %920 = vmatprep.subr.mxu0 0.0
    %921 = vmatpush1.msra.mxu0 0.0
    %922 = vmatprep.subr.mxu0 0.0
    %923 = vmatpush1.msra.mxu0 0.0
    %924 = vmatprep.subr.mxu0 0.0
    %925 = vmatpush1.msra.mxu0 0.0
    %926 = vmatprep.subr.mxu0 0.0
    %927 = vmatpush1.msra.mxu0 0.0
    %928 = vmatprep.subr.mxu0 0.0
    %929 = vmatpush1.msra.mxu0 0.0
    %930 = vmatprep.mubr.f32.mxu0 0.0
    %931 = vmatmul.mubr.f32.gmra.mrb[0].mxu0 %v129
    %v932 = vpop.f32.mrb[0].mxu0
    %v933 = vadd.f32 0.0, %v932
    %v934 = vpop.f32.mrb[0].mxu0
    %935 = vdwg.mxu0
    %936 = vmatprep.subr.mxu0 0.0
    %937 = vmatpush1.msra.mxu0 %v706
    %938 = vmatprep.subr.mxu0 0.0
    %939 = vmatpush1.msra.mxu0 %v707
    %940 = vmatprep.subr.mxu0 0.0
    %941 = vmatpush1.msra.mxu0 %v708
    %942 = vmatprep.subr.mxu0 0.0
    %943 = vmatpush1.msra.mxu0 %v709
    %944 = vmatprep.subr.mxu0 0.0
    %945 = vmatpush1.msra.mxu0 0.0
    %946 = vmatprep.subr.mxu0 0.0
    %947 = vmatpush1.msra.mxu0 0.0
    %948 = vmatprep.subr.mxu0 0.0
    %949 = vmatpush1.msra.mxu0 0.0
    %950 = vmatprep.subr.mxu0 0.0
    %951 = vmatpush1.msra.mxu0 0.0
    %952 = vmatprep.subr.mxu0 0.0
    %953 = vmatpush1.msra.mxu0 0.0
    %954 = vmatprep.subr.mxu0 0.0
    %955 = vmatpush1.msra.mxu0 0.0
    %956 = vmatprep.subr.mxu0 0.0
    %957 = vmatpush1.msra.mxu0 0.0
    %958 = vmatprep.subr.mxu0 0.0
    %959 = vmatpush1.msra.mxu0 0.0
    %960 = vmatprep.subr.mxu0 0.0
    %961 = vmatpush1.msra.mxu0 0.0
    %962 = vmatprep.subr.mxu0 0.0
    %963 = vmatpush1.msra.mxu0 0.0
    %964 = vmatprep.subr.mxu0 0.0
    %965 = vmatpush1.msra.mxu0 0.0
    %966 = vmatprep.subr.mxu0 0.0
    %967 = vmatpush1.msra.mxu0 0.0
    %968 = vmatprep.subr.mxu0 0.0
    %969 = vmatpush1.msra.mxu0 0.0
    %970 = vmatprep.subr.mxu0 0.0
    %971 = vmatpush1.msra.mxu0 0.0
    %972 = vmatprep.subr.mxu0 0.0
    %973 = vmatpush1.msra.mxu0 0.0
    %974 = vmatprep.subr.mxu0 0.0
    %975 = vmatpush1.msra.mxu0 0.0
    %976 = vmatprep.subr.mxu0 0.0
    %977 = vmatpush1.msra.mxu0 0.0
    %978 = vmatprep.subr.mxu0 0.0
    %979 = vmatpush1.msra.mxu0 0.0
    %980 = vmatprep.subr.mxu0 0.0
    %981 = vmatpush1.msra.mxu0 0.0
    %982 = vmatprep.subr.mxu0 0.0
    %983 = vmatpush1.msra.mxu0 0.0
    %984 = vmatprep.subr.mxu0 0.0
    %985 = vmatpush1.msra.mxu0 0.0
    %986 = vmatprep.subr.mxu0 0.0
    %987 = vmatpush1.msra.mxu0 0.0
    %988 = vmatprep.subr.mxu0 0.0
    %989 = vmatpush1.msra.mxu0 0.0
    %990 = vmatprep.subr.mxu0 0.0
    %991 = vmatpush1.msra.mxu0 0.0
    %992 = vmatprep.subr.mxu0 0.0
    %993 = vmatpush1.msra.mxu0 0.0
    %994 = vmatprep.subr.mxu0 0.0
    %995 = vmatpush1.msra.mxu0 0.0
    %996 = vmatprep.subr.mxu0 0.0
    %997 = vmatpush1.msra.mxu0 0.0
    %998 = vmatprep.subr.mxu0 0.0
    %999 = vmatpush1.msra.mxu0 0.0
    %1000 = vmatprep.mubr.f32.mxu0 0.0
    %1001 = vmatmul.mubr.f32.gmra.mrb[0].mxu0 %v129
    %v1002 = vpop.f32.mrb[0].mxu0
    %v1003 = vadd.f32 0.0, %v1002
    %v1004 = vpop.f32.mrb[0].mxu0
    %1005 = vdwg.mxu0
    %1006 = vmatprep.subr.mxu0 0.0
    %1007 = vmatpush1.msra.mxu0 %v710
    %1008 = vmatprep.subr.mxu0 0.0
    %1009 = vmatpush1.msra.mxu0 %v711
    %1010 = vmatprep.subr.mxu0 0.0
    %1011 = vmatpush1.msra.mxu0 %v712
    %1012 = vmatprep.subr.mxu0 0.0
    %1013 = vmatpush1.msra.mxu0 %v713
    %1014 = vmatprep.subr.mxu0 0.0
    %1015 = vmatpush1.msra.mxu0 0.0
    %1016 = vmatprep.subr.mxu0 0.0
    %1017 = vmatpush1.msra.mxu0 0.0
    %1018 = vmatprep.subr.mxu0 0.0
    %1019 = vmatpush1.msra.mxu0 0.0
    %1020 = vmatprep.subr.mxu0 0.0
    %1021 = vmatpush1.msra.mxu0 0.0
    %1022 = vmatprep.subr.mxu0 0.0
    %1023 = vmatpush1.msra.mxu0 0.0
    %1024 = vmatprep.subr.mxu0 0.0
    %1025 = vmatpush1.msra.mxu0 0.0
    %1026 = vmatprep.subr.mxu0 0.0
    %1027 = vmatpush1.msra.mxu0 0.0
    %1028 = vmatprep.subr.mxu0 0.0
    %1029 = vmatpush1.msra.mxu0 0.0
    %1030 = vmatprep.subr.mxu0 0.0
    %1031 = vmatpush1.msra.mxu0 0.0
    %1032 = vmatprep.subr.mxu0 0.0
    %1033 = vmatpush1.msra.mxu0 0.0
    %1034 = vmatprep.subr.mxu0 0.0
    %1035 = vmatpush1.msra.mxu0 0.0
    %1036 = vmatprep.subr.mxu0 0.0
    %1037 = vmatpush1.msra.mxu0 0.0
    %1038 = vmatprep.subr.mxu0 0.0
    %1039 = vmatpush1.msra.mxu0 0.0
    %1040 = vmatprep.subr.mxu0 0.0
    %1041 = vmatpush1.msra.mxu0 0.0
    %1042 = vmatprep.subr.mxu0 0.0
    %1043 = vmatpush1.msra.mxu0 0.0
    %1044 = vmatprep.subr.mxu0 0.0
    %1045 = vmatpush1.msra.mxu0 0.0
    %1046 = vmatprep.subr.mxu0 0.0
    %1047 = vmatpush1.msra.mxu0 0.0
    %1048 = vmatprep.subr.mxu0 0.0
    %1049 = vmatpush1.msra.mxu0 0.0
    %1050 = vmatprep.subr.mxu0 0.0
    %1051 = vmatpush1.msra.mxu0 0.0
    %1052 = vmatprep.subr.mxu0 0.0
    %1053 = vmatpush1.msra.mxu0 0.0
    %1054 = vmatprep.subr.mxu0 0.0
    %1055 = vmatpush1.msra.mxu0 0.0
    %1056 = vmatprep.subr.mxu0 0.0
    %1057 = vmatpush1.msra.mxu0 0.0
    %1058 = vmatprep.subr.mxu0 0.0
    %1059 = vmatpush1.msra.mxu0 0.0
    %1060 = vmatprep.subr.mxu0 0.0
    %1061 = vmatpush1.msra.mxu0 0.0
    %1062 = vmatprep.subr.mxu0 0.0
    %1063 = vmatpush1.msra.mxu0 0.0
    %1064 = vmatprep.subr.mxu0 0.0
    %1065 = vmatpush1.msra.mxu0 0.0
    %1066 = vmatprep.subr.mxu0 0.0
    %1067 = vmatpush1.msra.mxu0 0.0
    %1068 = vmatprep.subr.mxu0 0.0
    %1069 = vmatpush1.msra.mxu0 0.0
    %1070 = vmatprep.mubr.f32.mxu0 0.0
    %1071 = vmatmul.mubr.f32.gmra.mrb[0].mxu0 %v412
    %v1072 = vpop.f32.mrb[0].mxu0
    %v1073 = vadd.f32 0.0, %v1072
    %v1074 = vpop.f32.mrb[0].mxu0
    %1075 = vdwg.mxu0
    %1076 = vmatprep.subr.mxu0 0.0
    %1077 = vmatpush1.msra.mxu0 %v714
    %1078 = vmatprep.subr.mxu0 0.0
    %1079 = vmatpush1.msra.mxu0 %v715
    %1080 = vmatprep.subr.mxu0 0.0
    %1081 = vmatpush1.msra.mxu0 %v716
    %1082 = vmatprep.subr.mxu0 0.0
    %1083 = vmatpush1.msra.mxu0 %v717
    %1084 = vmatprep.subr.mxu0 0.0
    %1085 = vmatpush1.msra.mxu0 0.0
    %1086 = vmatprep.subr.mxu0 0.0
    %1087 = vmatpush1.msra.mxu0 0.0
    %1088 = vmatprep.subr.mxu0 0.0
    %1089 = vmatpush1.msra.mxu0 0.0
    %1090 = vmatprep.subr.mxu0 0.0
    %1091 = vmatpush1.msra.mxu0 0.0
    %1092 = vmatprep.subr.mxu0 0.0
    %1093 = vmatpush1.msra.mxu0 0.0
    %1094 = vmatprep.subr.mxu0 0.0
    %1095 = vmatpush1.msra.mxu0 0.0
    %1096 = vmatprep.subr.mxu0 0.0
    %1097 = vmatpush1.msra.mxu0 0.0
    %1098 = vmatprep.subr.mxu0 0.0
    %1099 = vmatpush1.msra.mxu0 0.0
    %1100 = vmatprep.subr.mxu0 0.0
    %1101 = vmatpush1.msra.mxu0 0.0
    %1102 = vmatprep.subr.mxu0 0.0
    %1103 = vmatpush1.msra.mxu0 0.0
    %1104 = vmatprep.subr.mxu0 0.0
    %1105 = vmatpush1.msra.mxu0 0.0
    %1106 = vmatprep.subr.mxu0 0.0
    %1107 = vmatpush1.msra.mxu0 0.0
    %1108 = vmatprep.subr.mxu0 0.0
    %1109 = vmatpush1.msra.mxu0 0.0
    %1110 = vmatprep.subr.mxu0 0.0
    %1111 = vmatpush1.msra.mxu0 0.0
    %1112 = vmatprep.subr.mxu0 0.0
    %1113 = vmatpush1.msra.mxu0 0.0
    %1114 = vmatprep.subr.mxu0 0.0
    %1115 = vmatpush1.msra.mxu0 0.0
    %1116 = vmatprep.subr.mxu0 0.0
    %1117 = vmatpush1.msra.mxu0 0.0
    %1118 = vmatprep.subr.mxu0 0.0
    %1119 = vmatpush1.msra.mxu0 0.0
    %1120 = vmatprep.subr.mxu0 0.0
    %1121 = vmatpush1.msra.mxu0 0.0
    %1122 = vmatprep.subr.mxu0 0.0
    %1123 = vmatpush1.msra.mxu0 0.0
    %1124 = vmatprep.subr.mxu0 0.0
    %1125 = vmatpush1.msra.mxu0 0.0
    %1126 = vmatprep.subr.mxu0 0.0
    %1127 = vmatpush1.msra.mxu0 0.0
    %1128 = vmatprep.subr.mxu0 0.0
    %1129 = vmatpush1.msra.mxu0 0.0
    %1130 = vmatprep.subr.mxu0 0.0
    %1131 = vmatpush1.msra.mxu0 0.0
    %1132 = vmatprep.subr.mxu0 0.0
    %1133 = vmatpush1.msra.mxu0 0.0
    %1134 = vmatprep.subr.mxu0 0.0
    %1135 = vmatpush1.msra.mxu0 0.0
    %1136 = vmatprep.subr.mxu0 0.0
    %1137 = vmatpush1.msra.mxu0 0.0
    %1138 = vmatprep.subr.mxu0 0.0
    %1139 = vmatpush1.msra.mxu0 0.0
    %1140 = vmatprep.mubr.f32.mxu0 0.0
    %1141 = vmatmul.mubr.f32.gmra.mrb[0].mxu0 %v412
    %v1142 = vpop.f32.mrb[0].mxu0
    %v1143 = vadd.f32 0.0, %v1142
    %v1144 = vpop.f32.mrb[0].mxu0
    %1145 = vdwg.mxu0
    %1146 = vmatprep.subr.mxu0 0.0
    %1147 = vmatpush1.msra.mxu0 %v718
    %1148 = vmatprep.subr.mxu0 0.0
    %1149 = vmatpush1.msra.mxu0 %v719
    %1150 = vmatprep.subr.mxu0 0.0
    %1151 = vmatpush1.msra.mxu0 %v720
    %1152 = vmatprep.subr.mxu0 0.0
    %1153 = vmatpush1.msra.mxu0 %v721
    %1154 = vmatprep.subr.mxu0 0.0
    %1155 = vmatpush1.msra.mxu0 0.0
    %1156 = vmatprep.subr.mxu0 0.0
    %1157 = vmatpush1.msra.mxu0 0.0
    %1158 = vmatprep.subr.mxu0 0.0
    %1159 = vmatpush1.msra.mxu0 0.0
    %1160 = vmatprep.subr.mxu0 0.0
    %1161 = vmatpush1.msra.mxu0 0.0
    %1162 = vmatprep.subr.mxu0 0.0
    %1163 = vmatpush1.msra.mxu0 0.0
    %1164 = vmatprep.subr.mxu0 0.0
    %1165 = vmatpush1.msra.mxu0 0.0
    %1166 = vmatprep.subr.mxu0 0.0
    %1167 = vmatpush1.msra.mxu0 0.0
    %1168 = vmatprep.subr.mxu0 0.0
    %1169 = vmatpush1.msra.mxu0 0.0
    %1170 = vmatprep.subr.mxu0 0.0
    %1171 = vmatpush1.msra.mxu0 0.0
    %1172 = vmatprep.subr.mxu0 0.0
    %1173 = vmatpush1.msra.mxu0 0.0
    %1174 = vmatprep.subr.mxu0 0.0
    %1175 = vmatpush1.msra.mxu0 0.0
    %1176 = vmatprep.subr.mxu0 0.0
    %1177 = vmatpush1.msra.mxu0 0.0
    %1178 = vmatprep.subr.mxu0 0.0
    %1179 = vmatpush1.msra.mxu0 0.0
    %1180 = vmatprep.subr.mxu0 0.0
    %1181 = vmatpush1.msra.mxu0 0.0
    %1182 = vmatprep.subr.mxu0 0.0
    %1183 = vmatpush1.msra.mxu0 0.0
    %1184 = vmatprep.subr.mxu0 0.0
    %1185 = vmatpush1.msra.mxu0 0.0
    %1186 = vmatprep.subr.mxu0 0.0
    %1187 = vmatpush1.msra.mxu0 0.0
    %1188 = vmatprep.subr.mxu0 0.0
    %1189 = vmatpush1.msra.mxu0 0.0
    %1190 = vmatprep.subr.mxu0 0.0
    %1191 = vmatpush1.msra.mxu0 0.0
    %1192 = vmatprep.subr.mxu0 0.0
    %1193 = vmatpush1.msra.mxu0 0.0
    %1194 = vmatprep.subr.mxu0 0.0
    %1195 = vmatpush1.msra.mxu0 0.0
    %1196 = vmatprep.subr.mxu0 0.0
    %1197 = vmatpush1.msra.mxu0 0.0
    %1198 = vmatprep.subr.mxu0 0.0
    %1199 = vmatpush1.msra.mxu0 0.0
    %1200 = vmatprep.subr.mxu0 0.0
    %1201 = vmatpush1.msra.mxu0 0.0
    %1202 = vmatprep.subr.mxu0 0.0
    %1203 = vmatpush1.msra.mxu0 0.0
    %1204 = vmatprep.subr.mxu0 0.0
    %1205 = vmatpush1.msra.mxu0 0.0
    %1206 = vmatprep.subr.mxu0 0.0
    %1207 = vmatpush1.msra.mxu0 0.0
    %1208 = vmatprep.subr.mxu0 0.0
    %1209 = vmatpush1.msra.mxu0 0.0
    %1210 = vmatprep.mubr.f32.mxu0 0.0
    %1211 = vmatmul.mubr.f32.gmra.mrb[0].mxu0 %v412
    %v1212 = vpop.f32.mrb[0].mxu0
    %v1213 = vadd.f32 0.0, %v1212
    %v1214 = vpop.f32.mrb[0].mxu0
    %1215 = vdwg.mxu0
    %1216 = vmatprep.subr.mxu0 0.0
    %1217 = vmatpush1.msra.mxu0 %v722
    %1218 = vmatprep.subr.mxu0 0.0
    %1219 = vmatpush1.msra.mxu0 %v723
    %1220 = vmatprep.subr.mxu0 0.0
    %1221 = vmatpush1.msra.mxu0 %v724
    %1222 = vmatprep.subr.mxu0 0.0
    %1223 = vmatpush1.msra.mxu0 %v725
    %1224 = vmatprep.subr.mxu0 0.0
    %1225 = vmatpush1.msra.mxu0 0.0
    %1226 = vmatprep.subr.mxu0 0.0
    %1227 = vmatpush1.msra.mxu0 0.0
    %1228 = vmatprep.subr.mxu0 0.0
    %1229 = vmatpush1.msra.mxu0 0.0
    %1230 = vmatprep.subr.mxu0 0.0
    %1231 = vmatpush1.msra.mxu0 0.0
    %1232 = vmatprep.subr.mxu0 0.0
    %1233 = vmatpush1.msra.mxu0 0.0
    %1234 = vmatprep.subr.mxu0 0.0
    %1235 = vmatpush1.msra.mxu0 0.0
    %1236 = vmatprep.subr.mxu0 0.0
    %1237 = vmatpush1.msra.mxu0 0.0
    %1238 = vmatprep.subr.mxu0 0.0
    %1239 = vmatpush1.msra.mxu0 0.0
    %1240 = vmatprep.subr.mxu0 0.0
    %1241 = vmatpush1.msra.mxu0 0.0
    %1242 = vmatprep.subr.mxu0 0.0
    %1243 = vmatpush1.msra.mxu0 0.0
    %1244 = vmatprep.subr.mxu0 0.0
    %1245 = vmatpush1.msra.mxu0 0.0
    %1246 = vmatprep.subr.mxu0 0.0
    %1247 = vmatpush1.msra.mxu0 0.0
    %1248 = vmatprep.subr.mxu0 0.0
    %1249 = vmatpush1.msra.mxu0 0.0
    %1250 = vmatprep.subr.mxu0 0.0
    %1251 = vmatpush1.msra.mxu0 0.0
    %1252 = vmatprep.subr.mxu0 0.0
    %1253 = vmatpush1.msra.mxu0 0.0
    %1254 = vmatprep.subr.mxu0 0.0
    %1255 = vmatpush1.msra.mxu0 0.0
    %1256 = vmatprep.subr.mxu0 0.0
    %1257 = vmatpush1.msra.mxu0 0.0
    %1258 = vmatprep.subr.mxu0 0.0
    %1259 = vmatpush1.msra.mxu0 0.0
    %1260 = vmatprep.subr.mxu0 0.0
    %1261 = vmatpush1.msra.mxu0 0.0
    %1262 = vmatprep.subr.mxu0 0.0
    %1263 = vmatpush1.msra.mxu0 0.0
    %1264 = vmatprep.subr.mxu0 0.0
    %1265 = vmatpush1.msra.mxu0 0.0
    %1266 = vmatprep.subr.mxu0 0.0
    %1267 = vmatpush1.msra.mxu0 0.0
    %1268 = vmatprep.subr.mxu0 0.0
    %1269 = vmatpush1.msra.mxu0 0.0
    %1270 = vmatprep.subr.mxu0 0.0
    %1271 = vmatpush1.msra.mxu0 0.0
    %1272 = vmatprep.subr.mxu0 0.0
    %1273 = vmatpush1.msra.mxu0 0.0
    %1274 = vmatprep.subr.mxu0 0.0
    %1275 = vmatpush1.msra.mxu0 0.0
    %1276 = vmatprep.subr.mxu0 0.0
    %1277 = vmatpush1.msra.mxu0 0.0
    %1278 = vmatprep.subr.mxu0 0.0
    %1279 = vmatpush1.msra.mxu0 0.0
    %1280 = vmatprep.mubr.f32.mxu0 0.0
    %1281 = vmatmul.mubr.f32.gmra.mrb[0].mxu0 %v412
    %v1282 = vpop.f32.mrb[0].mxu0
    %v1283 = vadd.f32 0.0, %v1282
    %v1284 = vpop.f32.mrb[0].mxu0
    %1285 = vdwg.mxu0
    %v1286 = vld [vmem:[%s5] sm:$0xff]
    %v1287 = vld [vmem:[%s5 + $0x8] sm:$0xff]
    %v1288 = vld [vmem:[%s5 + $0x10] sm:$0xff]
    %v1289 = vld [vmem:[%s5 + $0x18] sm:$0xff]
    %v1290 = vld [vmem:[%s5 + $0x20] sm:$0xff]
    %v1291 = vld [vmem:[%s5 + $0x28] sm:$0xff]
    %v1292 = vld [vmem:[%s5 + $0x30] sm:$0xff]
    %v1293 = vld [vmem:[%s5 + $0x38] sm:$0xff]
    %v1294 = vld [vmem:[%s5 + $0x40] sm:$0xff]
    %v1295 = vld [vmem:[%s5 + $0x48] sm:$0xff]
    %v1296 = vld [vmem:[%s5 + $0x50] sm:$0xff]
    %v1297 = vld [vmem:[%s5 + $0x58] sm:$0xff]
    %v1298 = vld [vmem:[%s5 + $0x60] sm:$0xff]
    %v1299 = vld [vmem:[%s5 + $0x68] sm:$0xff]
    %v1300 = vld [vmem:[%s5 + $0x70] sm:$0xff]
    %v1301 = vld [vmem:[%s5 + $0x78] sm:$0xff]
    %v1302 = vld [vmem:[%s5 + $0x80] sm:$0xff]
    %v1303 = vld [vmem:[%s5 + $0x88] sm:$0xff]
    %v1304 = vld [vmem:[%s5 + $0x90] sm:$0xff]
    %v1305 = vld [vmem:[%s5 + $0x98] sm:$0xff]
    %v1306 = vld [vmem:[%s5 + $0xa0] sm:$0xff]
    %v1307 = vld [vmem:[%s5 + $0xa8] sm:$0xff]
    %v1308 = vld [vmem:[%s5 + $0xb0] sm:$0xff]
    %v1309 = vld [vmem:[%s5 + $0xb8] sm:$0xff]
    %v1310 = vld [vmem:[%s5 + $0xc0] sm:$0xff]
    %v1311 = vld [vmem:[%s5 + $0xc8] sm:$0xff]
    %v1312 = vld [vmem:[%s5 + $0xd0] sm:$0xff]
    %v1313 = vld [vmem:[%s5 + $0xd8] sm:$0xff]
    %v1314 = vld [vmem:[%s5 + $0xe0] sm:$0xff]
    %v1315 = vld [vmem:[%s5 + $0xe8] sm:$0xff]
    %v1316 = vld [vmem:[%s5 + $0xf0] sm:$0xff]
    %v1317 = vld [vmem:[%s5 + $0xf8] sm:$0xff]
    %1318 = vmatprep.subr.mxu0 0.0
    %1319 = vmatpush1.msra.mxu0 %v1286
    %1320 = vmatprep.subr.mxu0 0.0
    %1321 = vmatpush1.msra.mxu0 %v1287
    %1322 = vmatprep.subr.mxu0 0.0
    %1323 = vmatpush1.msra.mxu0 %v1288
    %1324 = vmatprep.subr.mxu0 0.0
    %1325 = vmatpush1.msra.mxu0 %v1289
    %1326 = vmatprep.subr.mxu0 0.0
    %1327 = vmatpush1.msra.mxu0 0.0
    %1328 = vmatprep.subr.mxu0 0.0
    %1329 = vmatpush1.msra.mxu0 0.0
    %1330 = vmatprep.subr.mxu0 0.0
    %1331 = vmatpush1.msra.mxu0 0.0
    %1332 = vmatprep.subr.mxu0 0.0
    %1333 = vmatpush1.msra.mxu0 0.0
    %1334 = vmatprep.subr.mxu0 0.0
    %1335 = vmatpush1.msra.mxu0 0.0
    %1336 = vmatprep.subr.mxu0 0.0
    %1337 = vmatpush1.msra.mxu0 0.0
    %1338 = vmatprep.subr.mxu0 0.0
    %1339 = vmatpush1.msra.mxu0 0.0
    %1340 = vmatprep.subr.mxu0 0.0
    %1341 = vmatpush1.msra.mxu0 0.0
    %1342 = vmatprep.subr.mxu0 0.0
    %1343 = vmatpush1.msra.mxu0 0.0
    %1344 = vmatprep.subr.mxu0 0.0
    %1345 = vmatpush1.msra.mxu0 0.0
    %1346 = vmatprep.subr.mxu0 0.0
    %1347 = vmatpush1.msra.mxu0 0.0
    %1348 = vmatprep.subr.mxu0 0.0
    %1349 = vmatpush1.msra.mxu0 0.0
    %1350 = vmatprep.subr.mxu0 0.0
    %1351 = vmatpush1.msra.mxu0 0.0
    %1352 = vmatprep.subr.mxu0 0.0
    %1353 = vmatpush1.msra.mxu0 0.0
    %1354 = vmatprep.subr.mxu0 0.0
    %1355 = vmatpush1.msra.mxu0 0.0
    %1356 = vmatprep.subr.mxu0 0.0
    %1357 = vmatpush1.msra.mxu0 0.0
    %1358 = vmatprep.subr.mxu0 0.0
    %1359 = vmatpush1.msra.mxu0 0.0
    %1360 = vmatprep.subr.mxu0 0.0
    %1361 = vmatpush1.msra.mxu0 0.0
    %1362 = vmatprep.subr.mxu0 0.0
    %1363 = vmatpush1.msra.mxu0 0.0
    %1364 = vmatprep.subr.mxu0 0.0
    %1365 = vmatpush1.msra.mxu0 0.0
    %1366 = vmatprep.subr.mxu0 0.0
    %1367 = vmatpush1.msra.mxu0 0.0
    %1368 = vmatprep.subr.mxu0 0.0
    %1369 = vmatpush1.msra.mxu0 0.0
    %1370 = vmatprep.subr.mxu0 0.0
    %1371 = vmatpush1.msra.mxu0 0.0
    %1372 = vmatprep.subr.mxu0 0.0
    %1373 = vmatpush1.msra.mxu0 0.0
    %1374 = vmatprep.subr.mxu0 0.0
    %1375 = vmatpush1.msra.mxu0 0.0
    %1376 = vmatprep.subr.mxu0 0.0
    %1377 = vmatpush1.msra.mxu0 0.0
    %1378 = vmatprep.subr.mxu0 0.0
    %1379 = vmatpush1.msra.mxu0 0.0
    %1380 = vmatprep.subr.mxu0 0.0
    %1381 = vmatpush1.msra.mxu0 0.0
    %1382 = vmatprep.mubr.f32.mxu0 0.0
    %1383 = vmatmul.mubr.f32.gmra.mrb[0].mxu0 %v129
    %v1384 = vpop.f32.mrb[0].mxu0
    %v1385 = vadd.f32 0.0, %v1384
    %v1386 = vpop.f32.mrb[0].mxu0
    %1387 = vdwg.mxu0
    %1388 = vmatprep.subr.mxu0 0.0
    %1389 = vmatpush1.msra.mxu0 %v1290
    %1390 = vmatprep.subr.mxu0 0.0
    %1391 = vmatpush1.msra.mxu0 %v1291
    %1392 = vmatprep.subr.mxu0 0.0
    %1393 = vmatpush1.msra.mxu0 %v1292
    %1394 = vmatprep.subr.mxu0 0.0
    %1395 = vmatpush1.msra.mxu0 %v1293
    %1396 = vmatprep.subr.mxu0 0.0
    %1397 = vmatpush1.msra.mxu0 0.0
    %1398 = vmatprep.subr.mxu0 0.0
    %1399 = vmatpush1.msra.mxu0 0.0
    %1400 = vmatprep.subr.mxu0 0.0
    %1401 = vmatpush1.msra.mxu0 0.0
    %1402 = vmatprep.subr.mxu0 0.0
    %1403 = vmatpush1.msra.mxu0 0.0
    %1404 = vmatprep.subr.mxu0 0.0
    %1405 = vmatpush1.msra.mxu0 0.0
    %1406 = vmatprep.subr.mxu0 0.0
    %1407 = vmatpush1.msra.mxu0 0.0
    %1408 = vmatprep.subr.mxu0 0.0
    %1409 = vmatpush1.msra.mxu0 0.0
    %1410 = vmatprep.subr.mxu0 0.0
    %1411 = vmatpush1.msra.mxu0 0.0
    %1412 = vmatprep.subr.mxu0 0.0
    %1413 = vmatpush1.msra.mxu0 0.0
    %1414 = vmatprep.subr.mxu0 0.0
    %1415 = vmatpush1.msra.mxu0 0.0
    %1416 = vmatprep.subr.mxu0 0.0
    %1417 = vmatpush1.msra.mxu0 0.0
    %1418 = vmatprep.subr.mxu0 0.0
    %1419 = vmatpush1.msra.mxu0 0.0
    %1420 = vmatprep.subr.mxu0 0.0
    %1421 = vmatpush1.msra.mxu0 0.0
    %1422 = vmatprep.subr.mxu0 0.0
    %1423 = vmatpush1.msra.mxu0 0.0
    %1424 = vmatprep.subr.mxu0 0.0
    %1425 = vmatpush1.msra.mxu0 0.0
    %1426 = vmatprep.subr.mxu0 0.0
    %1427 = vmatpush1.msra.mxu0 0.0
    %1428 = vmatprep.subr.mxu0 0.0
    %1429 = vmatpush1.msra.mxu0 0.0
    %1430 = vmatprep.subr.mxu0 0.0
    %1431 = vmatpush1.msra.mxu0 0.0
    %1432 = vmatprep.subr.mxu0 0.0
    %1433 = vmatpush1.msra.mxu0 0.0
    %1434 = vmatprep.subr.mxu0 0.0
    %1435 = vmatpush1.msra.mxu0 0.0
    %1436 = vmatprep.subr.mxu0 0.0
    %1437 = vmatpush1.msra.mxu0 0.0
    %1438 = vmatprep.subr.mxu0 0.0
    %1439 = vmatpush1.msra.mxu0 0.0
    %1440 = vmatprep.subr.mxu0 0.0
    %1441 = vmatpush1.msra.mxu0 0.0
    %1442 = vmatprep.subr.mxu0 0.0
    %1443 = vmatpush1.msra.mxu0 0.0
    %1444 = vmatprep.subr.mxu0 0.0
    %1445 = vmatpush1.msra.mxu0 0.0
    %1446 = vmatprep.subr.mxu0 0.0
    %1447 = vmatpush1.msra.mxu0 0.0
    %1448 = vmatprep.subr.mxu0 0.0
    %1449 = vmatpush1.msra.mxu0 0.0
    %1450 = vmatprep.subr.mxu0 0.0
    %1451 = vmatpush1.msra.mxu0 0.0
    %1452 = vmatprep.mubr.f32.mxu0 0.0
    %1453 = vmatmul.mubr.f32.gmra.mrb[0].mxu0 %v129
    %v1454 = vpop.f32.mrb[0].mxu0
    %v1455 = vadd.f32 0.0, %v1454
    %v1456 = vpop.f32.mrb[0].mxu0
    %1457 = vdwg.mxu0
    %1458 = vmatprep.subr.mxu0 0.0
    %1459 = vmatpush1.msra.mxu0 %v1294
    %1460 = vmatprep.subr.mxu0 0.0
    %1461 = vmatpush1.msra.mxu0 %v1295
    %1462 = vmatprep.subr.mxu0 0.0
    %1463 = vmatpush1.msra.mxu0 %v1296
    %1464 = vmatprep.subr.mxu0 0.0
    %1465 = vmatpush1.msra.mxu0 %v1297
    %1466 = vmatprep.subr.mxu0 0.0
    %1467 = vmatpush1.msra.mxu0 0.0
    %1468 = vmatprep.subr.mxu0 0.0
    %1469 = vmatpush1.msra.mxu0 0.0
    %1470 = vmatprep.subr.mxu0 0.0
    %1471 = vmatpush1.msra.mxu0 0.0
    %1472 = vmatprep.subr.mxu0 0.0
    %1473 = vmatpush1.msra.mxu0 0.0
    %1474 = vmatprep.subr.mxu0 0.0
    %1475 = vmatpush1.msra.mxu0 0.0
    %1476 = vmatprep.subr.mxu0 0.0
    %1477 = vmatpush1.msra.mxu0 0.0
    %1478 = vmatprep.subr.mxu0 0.0
    %1479 = vmatpush1.msra.mxu0 0.0
    %1480 = vmatprep.subr.mxu0 0.0
    %1481 = vmatpush1.msra.mxu0 0.0
    %1482 = vmatprep.subr.mxu0 0.0
    %1483 = vmatpush1.msra.mxu0 0.0
    %1484 = vmatprep.subr.mxu0 0.0
    %1485 = vmatpush1.msra.mxu0 0.0
    %1486 = vmatprep.subr.mxu0 0.0
    %1487 = vmatpush1.msra.mxu0 0.0
    %1488 = vmatprep.subr.mxu0 0.0
    %1489 = vmatpush1.msra.mxu0 0.0
    %1490 = vmatprep.subr.mxu0 0.0
    %1491 = vmatpush1.msra.mxu0 0.0
    %1492 = vmatprep.subr.mxu0 0.0
    %1493 = vmatpush1.msra.mxu0 0.0
    %1494 = vmatprep.subr.mxu0 0.0
    %1495 = vmatpush1.msra.mxu0 0.0
    %1496 = vmatprep.subr.mxu0 0.0
    %1497 = vmatpush1.msra.mxu0 0.0
    %1498 = vmatprep.subr.mxu0 0.0
    %1499 = vmatpush1.msra.mxu0 0.0
    %1500 = vmatprep.subr.mxu0 0.0
    %1501 = vmatpush1.msra.mxu0 0.0
    %1502 = vmatprep.subr.mxu0 0.0
    %1503 = vmatpush1.msra.mxu0 0.0
    %1504 = vmatprep.subr.mxu0 0.0
    %1505 = vmatpush1.msra.mxu0 0.0
    %1506 = vmatprep.subr.mxu0 0.0
    %1507 = vmatpush1.msra.mxu0 0.0
    %1508 = vmatprep.subr.mxu0 0.0
    %1509 = vmatpush1.msra.mxu0 0.0
    %1510 = vmatprep.subr.mxu0 0.0
    %1511 = vmatpush1.msra.mxu0 0.0
    %1512 = vmatprep.subr.mxu0 0.0
    %1513 = vmatpush1.msra.mxu0 0.0
    %1514 = vmatprep.subr.mxu0 0.0
    %1515 = vmatpush1.msra.mxu0 0.0
    %1516 = vmatprep.subr.mxu0 0.0
    %1517 = vmatpush1.msra.mxu0 0.0
    %1518 = vmatprep.subr.mxu0 0.0
    %1519 = vmatpush1.msra.mxu0 0.0
    %1520 = vmatprep.subr.mxu0 0.0
    %1521 = vmatpush1.msra.mxu0 0.0
    %1522 = vmatprep.mubr.f32.mxu0 0.0
    %1523 = vmatmul.mubr.f32.gmra.mrb[0].mxu0 %v129
    %v1524 = vpop.f32.mrb[0].mxu0
    %v1525 = vadd.f32 0.0, %v1524
    %v1526 = vpop.f32.mrb[0].mxu0
    %1527 = vdwg.mxu0
    %1528 = vmatprep.subr.mxu0 0.0
    %1529 = vmatpush1.msra.mxu0 %v1298
    %1530 = vmatprep.subr.mxu0 0.0
    %1531 = vmatpush1.msra.mxu0 %v1299
    %1532 = vmatprep.subr.mxu0 0.0
    %1533 = vmatpush1.msra.mxu0 %v1300
    %1534 = vmatprep.subr.mxu0 0.0
    %1535 = vmatpush1.msra.mxu0 %v1301
    %1536 = vmatprep.subr.mxu0 0.0
    %1537 = vmatpush1.msra.mxu0 0.0
    %1538 = vmatprep.subr.mxu0 0.0
    %1539 = vmatpush1.msra.mxu0 0.0
    %1540 = vmatprep.subr.mxu0 0.0
    %1541 = vmatpush1.msra.mxu0 0.0
    %1542 = vmatprep.subr.mxu0 0.0
    %1543 = vmatpush1.msra.mxu0 0.0
    %1544 = vmatprep.subr.mxu0 0.0
    %1545 = vmatpush1.msra.mxu0 0.0
    %1546 = vmatprep.subr.mxu0 0.0
    %1547 = vmatpush1.msra.mxu0 0.0
    %1548 = vmatprep.subr.mxu0 0.0
    %1549 = vmatpush1.msra.mxu0 0.0
    %1550 = vmatprep.subr.mxu0 0.0
    %1551 = vmatpush1.msra.mxu0 0.0
    %1552 = vmatprep.subr.mxu0 0.0
    %1553 = vmatpush1.msra.mxu0 0.0
    %1554 = vmatprep.subr.mxu0 0.0
    %1555 = vmatpush1.msra.mxu0 0.0
    %1556 = vmatprep.subr.mxu0 0.0
    %1557 = vmatpush1.msra.mxu0 0.0
    %1558 = vmatprep.subr.mxu0 0.0
    %1559 = vmatpush1.msra.mxu0 0.0
    %1560 = vmatprep.subr.mxu0 0.0
    %1561 = vmatpush1.msra.mxu0 0.0
    %1562 = vmatprep.subr.mxu0 0.0
    %1563 = vmatpush1.msra.mxu0 0.0
    %1564 = vmatprep.subr.mxu0 0.0
    %1565 = vmatpush1.msra.mxu0 0.0
    %1566 = vmatprep.subr.mxu0 0.0
    %1567 = vmatpush1.msra.mxu0 0.0
    %1568 = vmatprep.subr.mxu0 0.0
    %1569 = vmatpush1.msra.mxu0 0.0
    %1570 = vmatprep.subr.mxu0 0.0
    %1571 = vmatpush1.msra.mxu0 0.0
    %1572 = vmatprep.subr.mxu0 0.0
    %1573 = vmatpush1.msra.mxu0 0.0
    %1574 = vmatprep.subr.mxu0 0.0
    %1575 = vmatpush1.msra.mxu0 0.0
    %1576 = vmatprep.subr.mxu0 0.0
    %1577 = vmatpush1.msra.mxu0 0.0
    %1578 = vmatprep.subr.mxu0 0.0
    %1579 = vmatpush1.msra.mxu0 0.0
    %1580 = vmatprep.subr.mxu0 0.0
    %1581 = vmatpush1.msra.mxu0 0.0
    %1582 = vmatprep.subr.mxu0 0.0
    %1583 = vmatpush1.msra.mxu0 0.0
    %1584 = vmatprep.subr.mxu0 0.0
    %1585 = vmatpush1.msra.mxu0 0.0
    %1586 = vmatprep.subr.mxu0 0.0
    %1587 = vmatpush1.msra.mxu0 0.0
    %1588 = vmatprep.subr.mxu0 0.0
    %1589 = vmatpush1.msra.mxu0 0.0
    %1590 = vmatprep.subr.mxu0 0.0
    %1591 = vmatpush1.msra.mxu0 0.0
    %1592 = vmatprep.mubr.f32.mxu0 0.0
    %1593 = vmatmul.mubr.f32.gmra.mrb[0].mxu0 %v129
    %v1594 = vpop.f32.mrb[0].mxu0
    %v1595 = vadd.f32 0.0, %v1594
    %v1596 = vpop.f32.mrb[0].mxu0
    %1597 = vdwg.mxu0
    %1598 = vmatprep.subr.mxu0 0.0
    %1599 = vmatpush1.msra.mxu0 %v1302
    %1600 = vmatprep.subr.mxu0 0.0
    %1601 = vmatpush1.msra.mxu0 %v1303
    %1602 = vmatprep.subr.mxu0 0.0
    %1603 = vmatpush1.msra.mxu0 %v1304
    %1604 = vmatprep.subr.mxu0 0.0
    %1605 = vmatpush1.msra.mxu0 %v1305
    %1606 = vmatprep.subr.mxu0 0.0
    %1607 = vmatpush1.msra.mxu0 0.0
    %1608 = vmatprep.subr.mxu0 0.0
    %1609 = vmatpush1.msra.mxu0 0.0
    %1610 = vmatprep.subr.mxu0 0.0
    %1611 = vmatpush1.msra.mxu0 0.0
    %1612 = vmatprep.subr.mxu0 0.0
    %1613 = vmatpush1.msra.mxu0 0.0
    %1614 = vmatprep.subr.mxu0 0.0
    %1615 = vmatpush1.msra.mxu0 0.0
    %1616 = vmatprep.subr.mxu0 0.0
    %1617 = vmatpush1.msra.mxu0 0.0
    %1618 = vmatprep.subr.mxu0 0.0
    %1619 = vmatpush1.msra.mxu0 0.0
    %1620 = vmatprep.subr.mxu0 0.0
    %1621 = vmatpush1.msra.mxu0 0.0
    %1622 = vmatprep.subr.mxu0 0.0
    %1623 = vmatpush1.msra.mxu0 0.0
    %1624 = vmatprep.subr.mxu0 0.0
    %1625 = vmatpush1.msra.mxu0 0.0
    %1626 = vmatprep.subr.mxu0 0.0
    %1627 = vmatpush1.msra.mxu0 0.0
    %1628 = vmatprep.subr.mxu0 0.0
    %1629 = vmatpush1.msra.mxu0 0.0
    %1630 = vmatprep.subr.mxu0 0.0
    %1631 = vmatpush1.msra.mxu0 0.0
    %1632 = vmatprep.subr.mxu0 0.0
    %1633 = vmatpush1.msra.mxu0 0.0
    %1634 = vmatprep.subr.mxu0 0.0
    %1635 = vmatpush1.msra.mxu0 0.0
    %1636 = vmatprep.subr.mxu0 0.0
    %1637 = vmatpush1.msra.mxu0 0.0
    %1638 = vmatprep.subr.mxu0 0.0
    %1639 = vmatpush1.msra.mxu0 0.0
    %1640 = vmatprep.subr.mxu0 0.0
    %1641 = vmatpush1.msra.mxu0 0.0
    %1642 = vmatprep.subr.mxu0 0.0
    %1643 = vmatpush1.msra.mxu0 0.0
    %1644 = vmatprep.subr.mxu0 0.0
    %1645 = vmatpush1.msra.mxu0 0.0
    %1646 = vmatprep.subr.mxu0 0.0
    %1647 = vmatpush1.msra.mxu0 0.0
    %1648 = vmatprep.subr.mxu0 0.0
    %1649 = vmatpush1.msra.mxu0 0.0
    %1650 = vmatprep.subr.mxu0 0.0
    %1651 = vmatpush1.msra.mxu0 0.0
    %1652 = vmatprep.subr.mxu0 0.0
    %1653 = vmatpush1.msra.mxu0 0.0
    %1654 = vmatprep.subr.mxu0 0.0
    %1655 = vmatpush1.msra.mxu0 0.0
    %1656 = vmatprep.subr.mxu0 0.0
    %1657 = vmatpush1.msra.mxu0 0.0
    %1658 = vmatprep.subr.mxu0 0.0
    %1659 = vmatpush1.msra.mxu0 0.0
    %1660 = vmatprep.subr.mxu0 0.0
    %1661 = vmatpush1.msra.mxu0 0.0
    %1662 = vmatprep.mubr.f32.mxu0 0.0
    %1663 = vmatmul.mubr.f32.gmra.mrb[0].mxu0 %v412
    %v1664 = vpop.f32.mrb[0].mxu0
    %v1665 = vadd.f32 0.0, %v1664
    %v1666 = vpop.f32.mrb[0].mxu0
    %1667 = vdwg.mxu0
    %1668 = vmatprep.subr.mxu0 0.0
    %1669 = vmatpush1.msra.mxu0 %v1306
    %1670 = vmatprep.subr.mxu0 0.0
    %1671 = vmatpush1.msra.mxu0 %v1307
    %1672 = vmatprep.subr.mxu0 0.0
    %1673 = vmatpush1.msra.mxu0 %v1308
    %1674 = vmatprep.subr.mxu0 0.0
    %1675 = vmatpush1.msra.mxu0 %v1309
    %1676 = vmatprep.subr.mxu0 0.0
    %1677 = vmatpush1.msra.mxu0 0.0
    %1678 = vmatprep.subr.mxu0 0.0
    %1679 = vmatpush1.msra.mxu0 0.0
    %1680 = vmatprep.subr.mxu0 0.0
    %1681 = vmatpush1.msra.mxu0 0.0
    %1682 = vmatprep.subr.mxu0 0.0
    %1683 = vmatpush1.msra.mxu0 0.0
    %1684 = vmatprep.subr.mxu0 0.0
    %1685 = vmatpush1.msra.mxu0 0.0
    %1686 = vmatprep.subr.mxu0 0.0
    %1687 = vmatpush1.msra.mxu0 0.0
    %1688 = vmatprep.subr.mxu0 0.0
    %1689 = vmatpush1.msra.mxu0 0.0
    %1690 = vmatprep.subr.mxu0 0.0
    %1691 = vmatpush1.msra.mxu0 0.0
    %1692 = vmatprep.subr.mxu0 0.0
    %1693 = vmatpush1.msra.mxu0 0.0
    %1694 = vmatprep.subr.mxu0 0.0
    %1695 = vmatpush1.msra.mxu0 0.0
    %1696 = vmatprep.subr.mxu0 0.0
    %1697 = vmatpush1.msra.mxu0 0.0
    %1698 = vmatprep.subr.mxu0 0.0
    %1699 = vmatpush1.msra.mxu0 0.0
    %1700 = vmatprep.subr.mxu0 0.0
    %1701 = vmatpush1.msra.mxu0 0.0
    %1702 = vmatprep.subr.mxu0 0.0
    %1703 = vmatpush1.msra.mxu0 0.0
    %1704 = vmatprep.subr.mxu0 0.0
    %1705 = vmatpush1.msra.mxu0 0.0
    %1706 = vmatprep.subr.mxu0 0.0
    %1707 = vmatpush1.msra.mxu0 0.0
    %1708 = vmatprep.subr.mxu0 0.0
    %1709 = vmatpush1.msra.mxu0 0.0
    %1710 = vmatprep.subr.mxu0 0.0
    %1711 = vmatpush1.msra.mxu0 0.0
    %1712 = vmatprep.subr.mxu0 0.0
    %1713 = vmatpush1.msra.mxu0 0.0
    %1714 = vmatprep.subr.mxu0 0.0
    %1715 = vmatpush1.msra.mxu0 0.0
    %1716 = vmatprep.subr.mxu0 0.0
    %1717 = vmatpush1.msra.mxu0 0.0
    %1718 = vmatprep.subr.mxu0 0.0
    %1719 = vmatpush1.msra.mxu0 0.0
    %1720 = vmatprep.subr.mxu0 0.0
    %1721 = vmatpush1.msra.mxu0 0.0
    %1722 = vmatprep.subr.mxu0 0.0
    %1723 = vmatpush1.msra.mxu0 0.0
    %1724 = vmatprep.subr.mxu0 0.0
    %1725 = vmatpush1.msra.mxu0 0.0
    %1726 = vmatprep.subr.mxu0 0.0
    %1727 = vmatpush1.msra.mxu0 0.0
    %1728 = vmatprep.subr.mxu0 0.0
    %1729 = vmatpush1.msra.mxu0 0.0
    %1730 = vmatprep.subr.mxu0 0.0
    %1731 = vmatpush1.msra.mxu0 0.0
    %1732 = vmatprep.mubr.f32.mxu0 0.0
    %1733 = vmatmul.mubr.f32.gmra.mrb[0].mxu0 %v412
    %v1734 = vpop.f32.mrb[0].mxu0
    %v1735 = vadd.f32 0.0, %v1734
    %v1736 = vpop.f32.mrb[0].mxu0
    %1737 = vdwg.mxu0
    %1738 = vmatprep.subr.mxu0 0.0
    %1739 = vmatpush1.msra.mxu0 %v1310
    %1740 = vmatprep.subr.mxu0 0.0
    %1741 = vmatpush1.msra.mxu0 %v1311
    %1742 = vmatprep.subr.mxu0 0.0
    %1743 = vmatpush1.msra.mxu0 %v1312
    %1744 = vmatprep.subr.mxu0 0.0
    %1745 = vmatpush1.msra.mxu0 %v1313
    %1746 = vmatprep.subr.mxu0 0.0
    %1747 = vmatpush1.msra.mxu0 0.0
    %1748 = vmatprep.subr.mxu0 0.0
    %1749 = vmatpush1.msra.mxu0 0.0
    %1750 = vmatprep.subr.mxu0 0.0
    %1751 = vmatpush1.msra.mxu0 0.0
    %1752 = vmatprep.subr.mxu0 0.0
    %1753 = vmatpush1.msra.mxu0 0.0
    %1754 = vmatprep.subr.mxu0 0.0
    %1755 = vmatpush1.msra.mxu0 0.0
    %1756 = vmatprep.subr.mxu0 0.0
    %1757 = vmatpush1.msra.mxu0 0.0
    %1758 = vmatprep.subr.mxu0 0.0
    %1759 = vmatpush1.msra.mxu0 0.0
    %1760 = vmatprep.subr.mxu0 0.0
    %1761 = vmatpush1.msra.mxu0 0.0
    %1762 = vmatprep.subr.mxu0 0.0
    %1763 = vmatpush1.msra.mxu0 0.0
    %1764 = vmatprep.subr.mxu0 0.0
    %1765 = vmatpush1.msra.mxu0 0.0
    %1766 = vmatprep.subr.mxu0 0.0
    %1767 = vmatpush1.msra.mxu0 0.0
    %1768 = vmatprep.subr.mxu0 0.0
    %1769 = vmatpush1.msra.mxu0 0.0
    %1770 = vmatprep.subr.mxu0 0.0
    %1771 = vmatpush1.msra.mxu0 0.0
    %1772 = vmatprep.subr.mxu0 0.0
    %1773 = vmatpush1.msra.mxu0 0.0
    %1774 = vmatprep.subr.mxu0 0.0
    %1775 = vmatpush1.msra.mxu0 0.0
    %1776 = vmatprep.subr.mxu0 0.0
    %1777 = vmatpush1.msra.mxu0 0.0
    %1778 = vmatprep.subr.mxu0 0.0
    %1779 = vmatpush1.msra.mxu0 0.0
    %1780 = vmatprep.subr.mxu0 0.0
    %1781 = vmatpush1.msra.mxu0 0.0
    %1782 = vmatprep.subr.mxu0 0.0
    %1783 = vmatpush1.msra.mxu0 0.0
    %1784 = vmatprep.subr.mxu0 0.0
    %1785 = vmatpush1.msra.mxu0 0.0
    %1786 = vmatprep.subr.mxu0 0.0
    %1787 = vmatpush1.msra.mxu0 0.0
    %1788 = vmatprep.subr.mxu0 0.0
    %1789 = vmatpush1.msra.mxu0 0.0
    %1790 = vmatprep.subr.mxu0 0.0
    %1791 = vmatpush1.msra.mxu0 0.0
    %1792 = vmatprep.subr.mxu0 0.0
    %1793 = vmatpush1.msra.mxu0 0.0
    %1794 = vmatprep.subr.mxu0 0.0
    %1795 = vmatpush1.msra.mxu0 0.0
    %1796 = vmatprep.subr.mxu0 0.0
    %1797 = vmatpush1.msra.mxu0 0.0
    %1798 = vmatprep.subr.mxu0 0.0
    %1799 = vmatpush1.msra.mxu0 0.0
    %1800 = vmatprep.subr.mxu0 0.0
    %1801 = vmatpush1.msra.mxu0 0.0
    %1802 = vmatprep.mubr.f32.mxu0 0.0
    %1803 = vmatmul.mubr.f32.gmra.mrb[0].mxu0 %v412
    %v1804 = vpop.f32.mrb[0].mxu0
    %v1805 = vadd.f32 0.0, %v1804
    %v1806 = vpop.f32.mrb[0].mxu0
    %1807 = vdwg.mxu0
    %1808 = vmatprep.subr.mxu0 0.0
    %1809 = vmatpush1.msra.mxu0 %v1314
    %1810 = vmatprep.subr.mxu0 0.0
    %1811 = vmatpush1.msra.mxu0 %v1315
    %1812 = vmatprep.subr.mxu0 0.0
    %1813 = vmatpush1.msra.mxu0 %v1316
    %1814 = vmatprep.subr.mxu0 0.0
    %1815 = vmatpush1.msra.mxu0 %v1317
    %1816 = vmatprep.subr.mxu0 0.0
    %1817 = vmatpush1.msra.mxu0 0.0
    %1818 = vmatprep.subr.mxu0 0.0
    %1819 = vmatpush1.msra.mxu0 0.0
    %1820 = vmatprep.subr.mxu0 0.0
    %1821 = vmatpush1.msra.mxu0 0.0
    %1822 = vmatprep.subr.mxu0 0.0
    %1823 = vmatpush1.msra.mxu0 0.0
    %1824 = vmatprep.subr.mxu0 0.0
    %1825 = vmatpush1.msra.mxu0 0.0
    %1826 = vmatprep.subr.mxu0 0.0
    %1827 = vmatpush1.msra.mxu0 0.0
    %1828 = vmatprep.subr.mxu0 0.0
    %1829 = vmatpush1.msra.mxu0 0.0
    %1830 = vmatprep.subr.mxu0 0.0
    %1831 = vmatpush1.msra.mxu0 0.0
    %1832 = vmatprep.subr.mxu0 0.0
    %1833 = vmatpush1.msra.mxu0 0.0
    %1834 = vmatprep.subr.mxu0 0.0
    %1835 = vmatpush1.msra.mxu0 0.0
    %1836 = vmatprep.subr.mxu0 0.0
    %1837 = vmatpush1.msra.mxu0 0.0
    %1838 = vmatprep.subr.mxu0 0.0
    %1839 = vmatpush1.msra.mxu0 0.0
    %1840 = vmatprep.subr.mxu0 0.0
    %1841 = vmatpush1.msra.mxu0 0.0
    %1842 = vmatprep.subr.mxu0 0.0
    %1843 = vmatpush1.msra.mxu0 0.0
    %1844 = vmatprep.subr.mxu0 0.0
    %1845 = vmatpush1.msra.mxu0 0.0
    %1846 = vmatprep.subr.mxu0 0.0
    %1847 = vmatpush1.msra.mxu0 0.0
    %1848 = vmatprep.subr.mxu0 0.0
    %1849 = vmatpush1.msra.mxu0 0.0
    %1850 = vmatprep.subr.mxu0 0.0
    %1851 = vmatpush1.msra.mxu0 0.0
    %1852 = vmatprep.subr.mxu0 0.0
    %1853 = vmatpush1.msra.mxu0 0.0
    %1854 = vmatprep.subr.mxu0 0.0
    %1855 = vmatpush1.msra.mxu0 0.0
    %1856 = vmatprep.subr.mxu0 0.0
    %1857 = vmatpush1.msra.mxu0 0.0
    %1858 = vmatprep.subr.mxu0 0.0
    %1859 = vmatpush1.msra.mxu0 0.0
    %1860 = vmatprep.subr.mxu0 0.0
    %1861 = vmatpush1.msra.mxu0 0.0
    %1862 = vmatprep.subr.mxu0 0.0
    %1863 = vmatpush1.msra.mxu0 0.0
    %1864 = vmatprep.subr.mxu0 0.0
    %1865 = vmatpush1.msra.mxu0 0.0
    %1866 = vmatprep.subr.mxu0 0.0
    %1867 = vmatpush1.msra.mxu0 0.0
    %1868 = vmatprep.subr.mxu0 0.0
    %1869 = vmatpush1.msra.mxu0 0.0
    %1870 = vmatprep.subr.mxu0 0.0
    %1871 = vmatpush1.msra.mxu0 0.0
    %1872 = vmatprep.mubr.f32.mxu0 0.0
    %1873 = vmatmul.mubr.f32.gmra.mrb[0].mxu0 %v412
    %v1874 = vpop.f32.mrb[0].mxu0
    %v1875 = vadd.f32 0.0, %v1874
    %v1876 = vpop.f32.mrb[0].mxu0
    %1877 = vdwg.mxu0
    %vm1878 = vcmask 64512
    %v1880 = vsel %vm1878, %v198, 0
    %v1883 = vsel %vm1878, %v793, 0
    %1885 = vmatprep.subr.mxu0 0.0
    %1886 = vmatpush1.xpose.msra.mxu0 %v1883
    %1887 = vmatprep.subr.mxu0 0.0
    %1888 = vmatpush1.xpose.msra.mxu0 0.0
    %1889 = vmatprep.subr.mxu0 0.0
    %1890 = vmatpush1.xpose.msra.mxu0 0.0
    %1891 = vmatprep.subr.mxu0 0.0
    %1892 = vmatpush1.xpose.msra.mxu0 0.0
    %1893 = vmatprep.subr.mxu0 0.0
    %1894 = vmatpush1.xpose.msra.mxu0 0.0
    %1895 = vmatprep.subr.mxu0 0.0
    %1896 = vmatpush1.xpose.msra.mxu0 0.0
    %1897 = vmatprep.subr.mxu0 0.0
    %1898 = vmatpush1.xpose.msra.mxu0 0.0
    %1899 = vmatprep.subr.mxu0 0.0
    %1900 = vmatpush1.xpose.msra.mxu0 0.0
    %1901 = vmatprep.subr.mxu0 0.0
    %1902 = vmatpush1.xpose.msra.mxu0 0.0
    %1903 = vmatprep.subr.mxu0 0.0
    %1904 = vmatpush1.xpose.msra.mxu0 0.0
    %1905 = vmatprep.subr.mxu0 0.0
    %1906 = vmatpush1.xpose.msra.mxu0 0.0
    %1907 = vmatprep.subr.mxu0 0.0
    %1908 = vmatpush1.xpose.msra.mxu0 0.0
    %1909 = vmatprep.subr.mxu0 0.0
    %1910 = vmatpush1.xpose.msra.mxu0 0.0
    %1911 = vmatprep.subr.mxu0 0.0
    %1912 = vmatpush1.xpose.msra.mxu0 0.0
    %1913 = vmatprep.subr.mxu0 0.0
    %1914 = vmatpush1.xpose.msra.mxu0 0.0
    %1915 = vmatprep.subr.mxu0 0.0
    %1916 = vmatpush1.xpose.msra.mxu0 0.0
    %1917 = vmatprep.subr.mxu0 0.0
    %1918 = vmatpush1.xpose.msra.mxu0 0.0
    %1919 = vmatprep.subr.mxu0 0.0
    %1920 = vmatpush1.xpose.msra.mxu0 0.0
    %1921 = vmatprep.subr.mxu0 0.0
    %1922 = vmatpush1.xpose.msra.mxu0 0.0
    %1923 = vmatprep.subr.mxu0 0.0
    %1924 = vmatpush1.xpose.msra.mxu0 0.0
    %1925 = vmatprep.subr.mxu0 0.0
    %1926 = vmatpush1.xpose.msra.mxu0 0.0
    %1927 = vmatprep.subr.mxu0 0.0
    %1928 = vmatpush1.xpose.msra.mxu0 0.0
    %1929 = vmatprep.subr.mxu0 0.0
    %1930 = vmatpush1.xpose.msra.mxu0 0.0
    %1931 = vmatprep.subr.mxu0 0.0
    %1932 = vmatpush1.xpose.msra.mxu0 0.0
    %1933 = vmatprep.subr.mxu0 0.0
    %1934 = vmatpush1.xpose.msra.mxu0 0.0
    %1935 = vmatprep.subr.mxu0 0.0
    %1936 = vmatpush1.xpose.msra.mxu0 0.0
    %1937 = vmatprep.subr.mxu0 0.0
    %1938 = vmatpush1.xpose.msra.mxu0 0.0
    %1939 = vmatprep.subr.mxu0 0.0
    %1940 = vmatpush1.xpose.msra.mxu0 0.0
    %1941 = vmatprep.subr.mxu0 0.0
    %1942 = vmatpush1.xpose.msra.mxu0 0.0
    %1943 = vmatprep.subr.mxu0 0.0
    %1944 = vmatpush1.xpose.msra.mxu0 0.0
    %1945 = vmatprep.subr.mxu0 0.0
    %1946 = vmatpush1.xpose.msra.mxu0 0.0
    %1947 = vmatprep.subr.mxu0 0.0
    %1948 = vmatpush1.xpose.msra.mxu0 0.0
    %1949 = vmatprep.mubr.f32.mxu0 0.0
    %1950 = vmatmul.mubr.f32.gmra.mrb[0].mxu0 %v1880
    %v1951 = vpop.f32.mrb[0].mxu0
    %v1952 = vadd.f32 0.0, %v1951
    %v1953 = vpop.f32.mrb[0].mxu0
    %1954 = vdwg.mxu0
    %v1956 = vsel %vm1878, %v268, 0
    %v1959 = vsel %vm1878, %v863, 0
    %1961 = vmatprep.subr.mxu0 0.0
    %1962 = vmatpush1.xpose.msra.mxu0 %v1959
    %1963 = vmatprep.subr.mxu0 0.0
    %1964 = vmatpush1.xpose.msra.mxu0 0.0
    %1965 = vmatprep.subr.mxu0 0.0
    %1966 = vmatpush1.xpose.msra.mxu0 0.0
    %1967 = vmatprep.subr.mxu0 0.0
    %1968 = vmatpush1.xpose.msra.mxu0 0.0
    %1969 = vmatprep.subr.mxu0 0.0
    %1970 = vmatpush1.xpose.msra.mxu0 0.0
    %1971 = vmatprep.subr.mxu0 0.0
    %1972 = vmatpush1.xpose.msra.mxu0 0.0
    %1973 = vmatprep.subr.mxu0 0.0
    %1974 = vmatpush1.xpose.msra.mxu0 0.0
    %1975 = vmatprep.subr.mxu0 0.0
    %1976 = vmatpush1.xpose.msra.mxu0 0.0
    %1977 = vmatprep.subr.mxu0 0.0
    %1978 = vmatpush1.xpose.msra.mxu0 0.0
    %1979 = vmatprep.subr.mxu0 0.0
    %1980 = vmatpush1.xpose.msra.mxu0 0.0
    %1981 = vmatprep.subr.mxu0 0.0
    %1982 = vmatpush1.xpose.msra.mxu0 0.0
    %1983 = vmatprep.subr.mxu0 0.0
    %1984 = vmatpush1.xpose.msra.mxu0 0.0
    %1985 = vmatprep.subr.mxu0 0.0
    %1986 = vmatpush1.xpose.msra.mxu0 0.0
    %1987 = vmatprep.subr.mxu0 0.0
    %1988 = vmatpush1.xpose.msra.mxu0 0.0
    %1989 = vmatprep.subr.mxu0 0.0
    %1990 = vmatpush1.xpose.msra.mxu0 0.0
    %1991 = vmatprep.subr.mxu0 0.0
    %1992 = vmatpush1.xpose.msra.mxu0 0.0
    %1993 = vmatprep.subr.mxu0 0.0
    %1994 = vmatpush1.xpose.msra.mxu0 0.0
    %1995 = vmatprep.subr.mxu0 0.0
    %1996 = vmatpush1.xpose.msra.mxu0 0.0
    %1997 = vmatprep.subr.mxu0 0.0
    %1998 = vmatpush1.xpose.msra.mxu0 0.0
    %1999 = vmatprep.subr.mxu0 0.0
    %2000 = vmatpush1.xpose.msra.mxu0 0.0
    %2001 = vmatprep.subr.mxu0 0.0
    %2002 = vmatpush1.xpose.msra.mxu0 0.0
    %2003 = vmatprep.subr.mxu0 0.0
    %2004 = vmatpush1.xpose.msra.mxu0 0.0
    %2005 = vmatprep.subr.mxu0 0.0
    %2006 = vmatpush1.xpose.msra.mxu0 0.0
    %2007 = vmatprep.subr.mxu0 0.0
    %2008 = vmatpush1.xpose.msra.mxu0 0.0
    %2009 = vmatprep.subr.mxu0 0.0
    %2010 = vmatpush1.xpose.msra.mxu0 0.0
    %2011 = vmatprep.subr.mxu0 0.0
    %2012 = vmatpush1.xpose.msra.mxu0 0.0
    %2013 = vmatprep.subr.mxu0 0.0
    %2014 = vmatpush1.xpose.msra.mxu0 0.0
    %2015 = vmatprep.subr.mxu0 0.0
    %2016 = vmatpush1.xpose.msra.mxu0 0.0
    %2017 = vmatprep.subr.mxu0 0.0
    %2018 = vmatpush1.xpose.msra.mxu0 0.0
    %2019 = vmatprep.subr.mxu0 0.0
    %2020 = vmatpush1.xpose.msra.mxu0 0.0
    %2021 = vmatprep.subr.mxu0 0.0
    %2022 = vmatpush1.xpose.msra.mxu0 0.0
    %2023 = vmatprep.subr.mxu0 0.0
    %2024 = vmatpush1.xpose.msra.mxu0 0.0
    %2025 = vmatprep.mubr.f32.mxu0 0.0
    %2026 = vmatmul.mubr.f32.gmra.mrb[0].mxu0 %v1956
    %v2027 = vpop.f32.mrb[0].mxu0
    %v2028 = vadd.f32 0.0, %v2027
    %v2029 = vpop.f32.mrb[0].mxu0
    %2030 = vdwg.mxu0
    %v2032 = vsel %vm1878, %v338, 0
    %v2035 = vsel %vm1878, %v933, 0
    %2037 = vmatprep.subr.mxu0 0.0
    %2038 = vmatpush1.xpose.msra.mxu0 %v2035
    %2039 = vmatprep.subr.mxu0 0.0
    %2040 = vmatpush1.xpose.msra.mxu0 0.0
    %2041 = vmatprep.subr.mxu0 0.0
    %2042 = vmatpush1.xpose.msra.mxu0 0.0
    %2043 = vmatprep.subr.mxu0 0.0
    %2044 = vmatpush1.xpose.msra.mxu0 0.0
    %2045 = vmatprep.subr.mxu0 0.0
    %2046 = vmatpush1.xpose.msra.mxu0 0.0
    %2047 = vmatprep.subr.mxu0 0.0
    %2048 = vmatpush1.xpose.msra.mxu0 0.0
    %2049 = vmatprep.subr.mxu0 0.0
    %2050 = vmatpush1.xpose.msra.mxu0 0.0
    %2051 = vmatprep.subr.mxu0 0.0
    %2052 = vmatpush1.xpose.msra.mxu0 0.0
    %2053 = vmatprep.subr.mxu0 0.0
    %2054 = vmatpush1.xpose.msra.mxu0 0.0
    %2055 = vmatprep.subr.mxu0 0.0
    %2056 = vmatpush1.xpose.msra.mxu0 0.0
    %2057 = vmatprep.subr.mxu0 0.0
    %2058 = vmatpush1.xpose.msra.mxu0 0.0
    %2059 = vmatprep.subr.mxu0 0.0
    %2060 = vmatpush1.xpose.msra.mxu0 0.0
    %2061 = vmatprep.subr.mxu0 0.0
    %2062 = vmatpush1.xpose.msra.mxu0 0.0
    %2063 = vmatprep.subr.mxu0 0.0
    %2064 = vmatpush1.xpose.msra.mxu0 0.0
    %2065 = vmatprep.subr.mxu0 0.0
    %2066 = vmatpush1.xpose.msra.mxu0 0.0
    %2067 = vmatprep.subr.mxu0 0.0
    %2068 = vmatpush1.xpose.msra.mxu0 0.0
    %2069 = vmatprep.subr.mxu0 0.0
    %2070 = vmatpush1.xpose.msra.mxu0 0.0
    %2071 = vmatprep.subr.mxu0 0.0
    %2072 = vmatpush1.xpose.msra.mxu0 0.0
    %2073 = vmatprep.subr.mxu0 0.0
    %2074 = vmatpush1.xpose.msra.mxu0 0.0
    %2075 = vmatprep.subr.mxu0 0.0
    %2076 = vmatpush1.xpose.msra.mxu0 0.0
    %2077 = vmatprep.subr.mxu0 0.0
    %2078 = vmatpush1.xpose.msra.mxu0 0.0
    %2079 = vmatprep.subr.mxu0 0.0
    %2080 = vmatpush1.xpose.msra.mxu0 0.0
    %2081 = vmatprep.subr.mxu0 0.0
    %2082 = vmatpush1.xpose.msra.mxu0 0.0
    %2083 = vmatprep.subr.mxu0 0.0
    %2084 = vmatpush1.xpose.msra.mxu0 0.0
    %2085 = vmatprep.subr.mxu0 0.0
    %2086 = vmatpush1.xpose.msra.mxu0 0.0
    %2087 = vmatprep.subr.mxu0 0.0
    %2088 = vmatpush1.xpose.msra.mxu0 0.0
    %2089 = vmatprep.subr.mxu0 0.0
    %2090 = vmatpush1.xpose.msra.mxu0 0.0
    %2091 = vmatprep.subr.mxu0 0.0
    %2092 = vmatpush1.xpose.msra.mxu0 0.0
    %2093 = vmatprep.subr.mxu0 0.0
    %2094 = vmatpush1.xpose.msra.mxu0 0.0
    %2095 = vmatprep.subr.mxu0 0.0
    %2096 = vmatpush1.xpose.msra.mxu0 0.0
    %2097 = vmatprep.subr.mxu0 0.0
    %2098 = vmatpush1.xpose.msra.mxu0 0.0
    %2099 = vmatprep.subr.mxu0 0.0
    %2100 = vmatpush1.xpose.msra.mxu0 0.0
    %2101 = vmatprep.mubr.f32.mxu0 0.0
    %2102 = vmatmul.mubr.f32.gmra.mrb[0].mxu0 %v2032
    %v2103 = vpop.f32.mrb[0].mxu0
    %v2104 = vadd.f32 0.0, %v2103
    %v2105 = vpop.f32.mrb[0].mxu0
    %2106 = vdwg.mxu0
    %v2108 = vsel %vm1878, %v408, 0
    %v2111 = vsel %vm1878, %v1003, 0
    %2113 = vmatprep.subr.mxu0 0.0
    %2114 = vmatpush1.xpose.msra.mxu0 %v2111
    %2115 = vmatprep.subr.mxu0 0.0
    %2116 = vmatpush1.xpose.msra.mxu0 0.0
    %2117 = vmatprep.subr.mxu0 0.0
    %2118 = vmatpush1.xpose.msra.mxu0 0.0
    %2119 = vmatprep.subr.mxu0 0.0
    %2120 = vmatpush1.xpose.msra.mxu0 0.0
    %2121 = vmatprep.subr.mxu0 0.0
    %2122 = vmatpush1.xpose.msra.mxu0 0.0
    %2123 = vmatprep.subr.mxu0 0.0
    %2124 = vmatpush1.xpose.msra.mxu0 0.0
    %2125 = vmatprep.subr.mxu0 0.0
    %2126 = vmatpush1.xpose.msra.mxu0 0.0
    %2127 = vmatprep.subr.mxu0 0.0
    %2128 = vmatpush1.xpose.msra.mxu0 0.0
    %2129 = vmatprep.subr.mxu0 0.0
    %2130 = vmatpush1.xpose.msra.mxu0 0.0
    %2131 = vmatprep.subr.mxu0 0.0
    %2132 = vmatpush1.xpose.msra.mxu0 0.0
    %2133 = vmatprep.subr.mxu0 0.0
    %2134 = vmatpush1.xpose.msra.mxu0 0.0
    %2135 = vmatprep.subr.mxu0 0.0
    %2136 = vmatpush1.xpose.msra.mxu0 0.0
    %2137 = vmatprep.subr.mxu0 0.0
    %2138 = vmatpush1.xpose.msra.mxu0 0.0
    %2139 = vmatprep.subr.mxu0 0.0
    %2140 = vmatpush1.xpose.msra.mxu0 0.0
    %2141 = vmatprep.subr.mxu0 0.0
    %2142 = vmatpush1.xpose.msra.mxu0 0.0
    %2143 = vmatprep.subr.mxu0 0.0
    %2144 = vmatpush1.xpose.msra.mxu0 0.0
    %2145 = vmatprep.subr.mxu0 0.0
    %2146 = vmatpush1.xpose.msra.mxu0 0.0
    %2147 = vmatprep.subr.mxu0 0.0
    %2148 = vmatpush1.xpose.msra.mxu0 0.0
    %2149 = vmatprep.subr.mxu0 0.0
    %2150 = vmatpush1.xpose.msra.mxu0 0.0
    %2151 = vmatprep.subr.mxu0 0.0
    %2152 = vmatpush1.xpose.msra.mxu0 0.0
    %2153 = vmatprep.subr.mxu0 0.0
    %2154 = vmatpush1.xpose.msra.mxu0 0.0
    %2155 = vmatprep.subr.mxu0 0.0
    %2156 = vmatpush1.xpose.msra.mxu0 0.0
    %2157 = vmatprep.subr.mxu0 0.0
    %2158 = vmatpush1.xpose.msra.mxu0 0.0
    %2159 = vmatprep.subr.mxu0 0.0
    %2160 = vmatpush1.xpose.msra.mxu0 0.0
    %2161 = vmatprep.subr.mxu0 0.0
    %2162 = vmatpush1.xpose.msra.mxu0 0.0
    %2163 = vmatprep.subr.mxu0 0.0
    %2164 = vmatpush1.xpose.msra.mxu0 0.0
    %2165 = vmatprep.subr.mxu0 0.0
    %2166 = vmatpush1.xpose.msra.mxu0 0.0
    %2167 = vmatprep.subr.mxu0 0.0
    %2168 = vmatpush1.xpose.msra.mxu0 0.0
    %2169 = vmatprep.subr.mxu0 0.0
    %2170 = vmatpush1.xpose.msra.mxu0 0.0
    %2171 = vmatprep.subr.mxu0 0.0
    %2172 = vmatpush1.xpose.msra.mxu0 0.0
    %2173 = vmatprep.subr.mxu0 0.0
    %2174 = vmatpush1.xpose.msra.mxu0 0.0
    %2175 = vmatprep.subr.mxu0 0.0
    %2176 = vmatpush1.xpose.msra.mxu0 0.0
    %2177 = vmatprep.mubr.f32.mxu0 0.0
    %2178 = vmatmul.mubr.f32.gmra.mrb[0].mxu0 %v2108
    %v2179 = vpop.f32.mrb[0].mxu0
    %v2180 = vadd.f32 0.0, %v2179
    %v2181 = vpop.f32.mrb[0].mxu0
    %2182 = vdwg.mxu0
    %v2184 = vsel %vm1878, %v481, 0
    %v2187 = vsel %vm1878, %v1073, 0
    %2189 = vmatprep.subr.mxu0 0.0
    %2190 = vmatpush1.xpose.msra.mxu0 %v2187
    %2191 = vmatprep.subr.mxu0 0.0
    %2192 = vmatpush1.xpose.msra.mxu0 0.0
    %2193 = vmatprep.subr.mxu0 0.0
    %2194 = vmatpush1.xpose.msra.mxu0 0.0
    %2195 = vmatprep.subr.mxu0 0.0
    %2196 = vmatpush1.xpose.msra.mxu0 0.0
    %2197 = vmatprep.subr.mxu0 0.0
    %2198 = vmatpush1.xpose.msra.mxu0 0.0
    %2199 = vmatprep.subr.mxu0 0.0
    %2200 = vmatpush1.xpose.msra.mxu0 0.0
    %2201 = vmatprep.subr.mxu0 0.0
    %2202 = vmatpush1.xpose.msra.mxu0 0.0
    %2203 = vmatprep.subr.mxu0 0.0
    %2204 = vmatpush1.xpose.msra.mxu0 0.0
    %2205 = vmatprep.subr.mxu0 0.0
    %2206 = vmatpush1.xpose.msra.mxu0 0.0
    %2207 = vmatprep.subr.mxu0 0.0
    %2208 = vmatpush1.xpose.msra.mxu0 0.0
    %2209 = vmatprep.subr.mxu0 0.0
    %2210 = vmatpush1.xpose.msra.mxu0 0.0
    %2211 = vmatprep.subr.mxu0 0.0
    %2212 = vmatpush1.xpose.msra.mxu0 0.0
    %2213 = vmatprep.subr.mxu0 0.0
    %2214 = vmatpush1.xpose.msra.mxu0 0.0
    %2215 = vmatprep.subr.mxu0 0.0
    %2216 = vmatpush1.xpose.msra.mxu0 0.0
    %2217 = vmatprep.subr.mxu0 0.0
    %2218 = vmatpush1.xpose.msra.mxu0 0.0
    %2219 = vmatprep.subr.mxu0 0.0
    %2220 = vmatpush1.xpose.msra.mxu0 0.0
    %2221 = vmatprep.subr.mxu0 0.0
    %2222 = vmatpush1.xpose.msra.mxu0 0.0
    %2223 = vmatprep.subr.mxu0 0.0
    %2224 = vmatpush1.xpose.msra.mxu0 0.0
    %2225 = vmatprep.subr.mxu0 0.0
    %2226 = vmatpush1.xpose.msra.mxu0 0.0
    %2227 = vmatprep.subr.mxu0 0.0
    %2228 = vmatpush1.xpose.msra.mxu0 0.0
    %2229 = vmatprep.subr.mxu0 0.0
    %2230 = vmatpush1.xpose.msra.mxu0 0.0
    %2231 = vmatprep.subr.mxu0 0.0
    %2232 = vmatpush1.xpose.msra.mxu0 0.0
    %2233 = vmatprep.subr.mxu0 0.0
    %2234 = vmatpush1.xpose.msra.mxu0 0.0
    %2235 = vmatprep.subr.mxu0 0.0
    %2236 = vmatpush1.xpose.msra.mxu0 0.0
    %2237 = vmatprep.subr.mxu0 0.0
    %2238 = vmatpush1.xpose.msra.mxu0 0.0
    %2239 = vmatprep.subr.mxu0 0.0
    %2240 = vmatpush1.xpose.msra.mxu0 0.0
    %2241 = vmatprep.subr.mxu0 0.0
    %2242 = vmatpush1.xpose.msra.mxu0 0.0
    %2243 = vmatprep.subr.mxu0 0.0
    %2244 = vmatpush1.xpose.msra.mxu0 0.0
    %2245 = vmatprep.subr.mxu0 0.0
    %2246 = vmatpush1.xpose.msra.mxu0 0.0
    %2247 = vmatprep.subr.mxu0 0.0
    %2248 = vmatpush1.xpose.msra.mxu0 0.0
    %2249 = vmatprep.subr.mxu0 0.0
    %2250 = vmatpush1.xpose.msra.mxu0 0.0
    %2251 = vmatprep.subr.mxu0 0.0
    %2252 = vmatpush1.xpose.msra.mxu0 0.0
    %2253 = vmatprep.mubr.f32.mxu0 0.0
    %2254 = vmatmul.mubr.f32.gmra.mrb[0].mxu0 %v2184
    %v2255 = vpop.f32.mrb[0].mxu0
    %v2256 = vadd.f32 0.0, %v2255
    %v2257 = vpop.f32.mrb[0].mxu0
    %2258 = vdwg.mxu0
    %v2260 = vsel %vm1878, %v551, 0
    %v2263 = vsel %vm1878, %v1143, 0
    %2265 = vmatprep.subr.mxu0 0.0
    %2266 = vmatpush1.xpose.msra.mxu0 %v2263
    %2267 = vmatprep.subr.mxu0 0.0
    %2268 = vmatpush1.xpose.msra.mxu0 0.0
    %2269 = vmatprep.subr.mxu0 0.0
    %2270 = vmatpush1.xpose.msra.mxu0 0.0
    %2271 = vmatprep.subr.mxu0 0.0
    %2272 = vmatpush1.xpose.msra.mxu0 0.0
    %2273 = vmatprep.subr.mxu0 0.0
    %2274 = vmatpush1.xpose.msra.mxu0 0.0
    %2275 = vmatprep.subr.mxu0 0.0
    %2276 = vmatpush1.xpose.msra.mxu0 0.0
    %2277 = vmatprep.subr.mxu0 0.0
    %2278 = vmatpush1.xpose.msra.mxu0 0.0
    %2279 = vmatprep.subr.mxu0 0.0
    %2280 = vmatpush1.xpose.msra.mxu0 0.0
    %2281 = vmatprep.subr.mxu0 0.0
    %2282 = vmatpush1.xpose.msra.mxu0 0.0
    %2283 = vmatprep.subr.mxu0 0.0
    %2284 = vmatpush1.xpose.msra.mxu0 0.0
    %2285 = vmatprep.subr.mxu0 0.0
    %2286 = vmatpush1.xpose.msra.mxu0 0.0
    %2287 = vmatprep.subr.mxu0 0.0
    %2288 = vmatpush1.xpose.msra.mxu0 0.0
    %2289 = vmatprep.subr.mxu0 0.0
    %2290 = vmatpush1.xpose.msra.mxu0 0.0
    %2291 = vmatprep.subr.mxu0 0.0
    %2292 = vmatpush1.xpose.msra.mxu0 0.0
    %2293 = vmatprep.subr.mxu0 0.0
    %2294 = vmatpush1.xpose.msra.mxu0 0.0
    %2295 = vmatprep.subr.mxu0 0.0
    %2296 = vmatpush1.xpose.msra.mxu0 0.0
    %2297 = vmatprep.subr.mxu0 0.0
    %2298 = vmatpush1.xpose.msra.mxu0 0.0
    %2299 = vmatprep.subr.mxu0 0.0
    %2300 = vmatpush1.xpose.msra.mxu0 0.0
    %2301 = vmatprep.subr.mxu0 0.0
    %2302 = vmatpush1.xpose.msra.mxu0 0.0
    %2303 = vmatprep.subr.mxu0 0.0
    %2304 = vmatpush1.xpose.msra.mxu0 0.0
    %2305 = vmatprep.subr.mxu0 0.0
    %2306 = vmatpush1.xpose.msra.mxu0 0.0
    %2307 = vmatprep.subr.mxu0 0.0
    %2308 = vmatpush1.xpose.msra.mxu0 0.0
    %2309 = vmatprep.subr.mxu0 0.0
    %2310 = vmatpush1.xpose.msra.mxu0 0.0
    %2311 = vmatprep.subr.mxu0 0.0
    %2312 = vmatpush1.xpose.msra.mxu0 0.0
    %2313 = vmatprep.subr.mxu0 0.0
    %2314 = vmatpush1.xpose.msra.mxu0 0.0
    %2315 = vmatprep.subr.mxu0 0.0
    %2316 = vmatpush1.xpose.msra.mxu0 0.0
    %2317 = vmatprep.subr.mxu0 0.0
    %2318 = vmatpush1.xpose.msra.mxu0 0.0
    %2319 = vmatprep.subr.mxu0 0.0
    %2320 = vmatpush1.xpose.msra.mxu0 0.0
    %2321 = vmatprep.subr.mxu0 0.0
    %2322 = vmatpush1.xpose.msra.mxu0 0.0
    %2323 = vmatprep.subr.mxu0 0.0
    %2324 = vmatpush1.xpose.msra.mxu0 0.0
    %2325 = vmatprep.subr.mxu0 0.0
    %2326 = vmatpush1.xpose.msra.mxu0 0.0
    %2327 = vmatprep.subr.mxu0 0.0
    %2328 = vmatpush1.xpose.msra.mxu0 0.0
    %2329 = vmatprep.mubr.f32.mxu0 0.0
    %2330 = vmatmul.mubr.f32.gmra.mrb[0].mxu0 %v2260
    %v2331 = vpop.f32.mrb[0].mxu0
    %v2332 = vadd.f32 0.0, %v2331
    %v2333 = vpop.f32.mrb[0].mxu0
    %2334 = vdwg.mxu0
    %v2336 = vsel %vm1878, %v621, 0
    %v2339 = vsel %vm1878, %v1213, 0
    %2341 = vmatprep.subr.mxu0 0.0
    %2342 = vmatpush1.xpose.msra.mxu0 %v2339
    %2343 = vmatprep.subr.mxu0 0.0
    %2344 = vmatpush1.xpose.msra.mxu0 0.0
    %2345 = vmatprep.subr.mxu0 0.0
    %2346 = vmatpush1.xpose.msra.mxu0 0.0
    %2347 = vmatprep.subr.mxu0 0.0
    %2348 = vmatpush1.xpose.msra.mxu0 0.0
    %2349 = vmatprep.subr.mxu0 0.0
    %2350 = vmatpush1.xpose.msra.mxu0 0.0
    %2351 = vmatprep.subr.mxu0 0.0
    %2352 = vmatpush1.xpose.msra.mxu0 0.0
    %2353 = vmatprep.subr.mxu0 0.0
    %2354 = vmatpush1.xpose.msra.mxu0 0.0
    %2355 = vmatprep.subr.mxu0 0.0
    %2356 = vmatpush1.xpose.msra.mxu0 0.0
    %2357 = vmatprep.subr.mxu0 0.0
    %2358 = vmatpush1.xpose.msra.mxu0 0.0
    %2359 = vmatprep.subr.mxu0 0.0
    %2360 = vmatpush1.xpose.msra.mxu0 0.0
    %2361 = vmatprep.subr.mxu0 0.0
    %2362 = vmatpush1.xpose.msra.mxu0 0.0
    %2363 = vmatprep.subr.mxu0 0.0
    %2364 = vmatpush1.xpose.msra.mxu0 0.0
    %2365 = vmatprep.subr.mxu0 0.0
    %2366 = vmatpush1.xpose.msra.mxu0 0.0
    %2367 = vmatprep.subr.mxu0 0.0
    %2368 = vmatpush1.xpose.msra.mxu0 0.0
    %2369 = vmatprep.subr.mxu0 0.0
    %2370 = vmatpush1.xpose.msra.mxu0 0.0
    %2371 = vmatprep.subr.mxu0 0.0
    %2372 = vmatpush1.xpose.msra.mxu0 0.0
    %2373 = vmatprep.subr.mxu0 0.0
    %2374 = vmatpush1.xpose.msra.mxu0 0.0
    %2375 = vmatprep.subr.mxu0 0.0
    %2376 = vmatpush1.xpose.msra.mxu0 0.0
    %2377 = vmatprep.subr.mxu0 0.0
    %2378 = vmatpush1.xpose.msra.mxu0 0.0
    %2379 = vmatprep.subr.mxu0 0.0
    %2380 = vmatpush1.xpose.msra.mxu0 0.0
    %2381 = vmatprep.subr.mxu0 0.0
    %2382 = vmatpush1.xpose.msra.mxu0 0.0
    %2383 = vmatprep.subr.mxu0 0.0
    %2384 = vmatpush1.xpose.msra.mxu0 0.0
    %2385 = vmatprep.subr.mxu0 0.0
    %2386 = vmatpush1.xpose.msra.mxu0 0.0
    %2387 = vmatprep.subr.mxu0 0.0
    %2388 = vmatpush1.xpose.msra.mxu0 0.0
    %2389 = vmatprep.subr.mxu0 0.0
    %2390 = vmatpush1.xpose.msra.mxu0 0.0
    %2391 = vmatprep.subr.mxu0 0.0
    %2392 = vmatpush1.xpose.msra.mxu0 0.0
    %2393 = vmatprep.subr.mxu0 0.0
    %2394 = vmatpush1.xpose.msra.mxu0 0.0
    %2395 = vmatprep.subr.mxu0 0.0
    %2396 = vmatpush1.xpose.msra.mxu0 0.0
    %2397 = vmatprep.subr.mxu0 0.0
    %2398 = vmatpush1.xpose.msra.mxu0 0.0
    %2399 = vmatprep.subr.mxu0 0.0
    %2400 = vmatpush1.xpose.msra.mxu0 0.0
    %2401 = vmatprep.subr.mxu0 0.0
    %2402 = vmatpush1.xpose.msra.mxu0 0.0
    %2403 = vmatprep.subr.mxu0 0.0
    %2404 = vmatpush1.xpose.msra.mxu0 0.0
    %2405 = vmatprep.mubr.f32.mxu0 0.0
    %2406 = vmatmul.mubr.f32.gmra.mrb[0].mxu0 %v2336
    %v2407 = vpop.f32.mrb[0].mxu0
    %v2408 = vadd.f32 0.0, %v2407
    %v2409 = vpop.f32.mrb[0].mxu0
    %2410 = vdwg.mxu0
    %v2412 = vsel %vm1878, %v691, 0
    %v2415 = vsel %vm1878, %v1283, 0
    %2417 = vmatprep.subr.mxu0 0.0
    %2418 = vmatpush1.xpose.msra.mxu0 %v2415
    %2419 = vmatprep.subr.mxu0 0.0
    %2420 = vmatpush1.xpose.msra.mxu0 0.0
    %2421 = vmatprep.subr.mxu0 0.0
    %2422 = vmatpush1.xpose.msra.mxu0 0.0
    %2423 = vmatprep.subr.mxu0 0.0
    %2424 = vmatpush1.xpose.msra.mxu0 0.0
    %2425 = vmatprep.subr.mxu0 0.0
    %2426 = vmatpush1.xpose.msra.mxu0 0.0
    %2427 = vmatprep.subr.mxu0 0.0
    %2428 = vmatpush1.xpose.msra.mxu0 0.0
    %2429 = vmatprep.subr.mxu0 0.0
    %2430 = vmatpush1.xpose.msra.mxu0 0.0
    %2431 = vmatprep.subr.mxu0 0.0
    %2432 = vmatpush1.xpose.msra.mxu0 0.0
    %2433 = vmatprep.subr.mxu0 0.0
    %2434 = vmatpush1.xpose.msra.mxu0 0.0
    %2435 = vmatprep.subr.mxu0 0.0
    %2436 = vmatpush1.xpose.msra.mxu0 0.0
    %2437 = vmatprep.subr.mxu0 0.0
    %2438 = vmatpush1.xpose.msra.mxu0 0.0
    %2439 = vmatprep.subr.mxu0 0.0
    %2440 = vmatpush1.xpose.msra.mxu0 0.0
    %2441 = vmatprep.subr.mxu0 0.0
    %2442 = vmatpush1.xpose.msra.mxu0 0.0
    %2443 = vmatprep.subr.mxu0 0.0
    %2444 = vmatpush1.xpose.msra.mxu0 0.0
    %2445 = vmatprep.subr.mxu0 0.0
    %2446 = vmatpush1.xpose.msra.mxu0 0.0
    %2447 = vmatprep.subr.mxu0 0.0
    %2448 = vmatpush1.xpose.msra.mxu0 0.0
    %2449 = vmatprep.subr.mxu0 0.0
    %2450 = vmatpush1.xpose.msra.mxu0 0.0
    %2451 = vmatprep.subr.mxu0 0.0
    %2452 = vmatpush1.xpose.msra.mxu0 0.0
    %2453 = vmatprep.subr.mxu0 0.0
    %2454 = vmatpush1.xpose.msra.mxu0 0.0
    %2455 = vmatprep.subr.mxu0 0.0
    %2456 = vmatpush1.xpose.msra.mxu0 0.0
    %2457 = vmatprep.subr.mxu0 0.0
    %2458 = vmatpush1.xpose.msra.mxu0 0.0
    %2459 = vmatprep.subr.mxu0 0.0
    %2460 = vmatpush1.xpose.msra.mxu0 0.0
    %2461 = vmatprep.subr.mxu0 0.0
    %2462 = vmatpush1.xpose.msra.mxu0 0.0
    %2463 = vmatprep.subr.mxu0 0.0
    %2464 = vmatpush1.xpose.msra.mxu0 0.0
    %2465 = vmatprep.subr.mxu0 0.0
    %2466 = vmatpush1.xpose.msra.mxu0 0.0
    %2467 = vmatprep.subr.mxu0 0.0
    %2468 = vmatpush1.xpose.msra.mxu0 0.0
    %2469 = vmatprep.subr.mxu0 0.0
    %2470 = vmatpush1.xpose.msra.mxu0 0.0
    %2471 = vmatprep.subr.mxu0 0.0
    %2472 = vmatpush1.xpose.msra.mxu0 0.0
    %2473 = vmatprep.subr.mxu0 0.0
    %2474 = vmatpush1.xpose.msra.mxu0 0.0
    %2475 = vmatprep.subr.mxu0 0.0
    %2476 = vmatpush1.xpose.msra.mxu0 0.0
    %2477 = vmatprep.subr.mxu0 0.0
    %2478 = vmatpush1.xpose.msra.mxu0 0.0
    %2479 = vmatprep.subr.mxu0 0.0
    %2480 = vmatpush1.xpose.msra.mxu0 0.0
    %2481 = vmatprep.mubr.f32.mxu0 0.0
    %2482 = vmatmul.mubr.f32.gmra.mrb[0].mxu0 %v2412
    %v2483 = vpop.f32.mrb[0].mxu0
    %v2484 = vadd.f32 0.0, %v2483
    %v2485 = vpop.f32.mrb[0].mxu0
    %2486 = vdwg.mxu0
    %v2487 = vsel %vm1878, %v1952, -inf
    %2488 = vmax.xlane.f32.xlu0 %v2487
    %v2489 = vpop.xlane.xlu0 %2488
    %v2490 = vsel %vm1878, %v2028, -inf
    %2491 = vmax.xlane.f32.xlu0 %v2490
    %v2492 = vpop.xlane.xlu0 %2491
    %v2493 = vsel %vm1878, %v2104, -inf
    %2494 = vmax.xlane.f32.xlu0 %v2493
    %v2495 = vpop.xlane.xlu0 %2494
    %v2496 = vsel %vm1878, %v2180, -inf
    %2497 = vmax.xlane.f32.xlu0 %v2496
    %v2498 = vpop.xlane.xlu0 %2497
    %v2499 = vsel %vm1878, %v2256, -inf
    %2500 = vmax.xlane.f32.xlu0 %v2499
    %v2501 = vpop.xlane.xlu0 %2500
    %v2502 = vsel %vm1878, %v2332, -inf
    %2503 = vmax.xlane.f32.xlu0 %v2502
    %v2504 = vpop.xlane.xlu0 %2503
    %v2505 = vsel %vm1878, %v2408, -inf
    %2506 = vmax.xlane.f32.xlu0 %v2505
    %v2507 = vpop.xlane.xlu0 %2506
    %v2508 = vsel %vm1878, %v2484, -inf
    %2509 = vmax.xlane.f32.xlu0 %v2508
    %v2510 = vpop.xlane.xlu0 %2509
    %v2511 = vsub.f32 %v1952, %v2489
    %v2512 = vsub.f32 %v2028, %v2492
    %v2513 = vsub.f32 %v2104, %v2495
    %v2514 = vsub.f32 %v2180, %v2498
    %v2515 = vsub.f32 %v2256, %v2501
    %v2516 = vsub.f32 %v2332, %v2504
    %v2517 = vsub.f32 %v2408, %v2507
    %v2518 = vsub.f32 %v2484, %v2510
    %v2519 = vmul.f32 %v2511, 1.442695
    %v2520 = vpow.pop %v2519
    %v2521 = vmul.f32 %v2512, 1.442695
    %v2522 = vpow.pop %v2521
    %v2523 = vmul.f32 %v2513, 1.442695
    %v2524 = vpow.pop %v2523
    %v2525 = vmul.f32 %v2514, 1.442695
    %v2526 = vpow.pop %v2525
    %v2527 = vmul.f32 %v2515, 1.442695
    %v2528 = vpow.pop %v2527
    %v2529 = vmul.f32 %v2516, 1.442695
    %v2530 = vpow.pop %v2529
    %v2531 = vmul.f32 %v2517, 1.442695
    %v2532 = vpow.pop %v2531
    %v2533 = vmul.f32 %v2518, 1.442695
    %v2534 = vpow.pop %v2533
    %v2535 = vsel %vm1878, %v2520, 0.0
    %2536 = vadd.xlane.f32.xlu0 %v2535
    %v2537 = vpop.xlane.xlu0 %2536
    %v2538 = vsel %vm1878, %v2522, 0.0
    %2539 = vadd.xlane.f32.xlu0 %v2538
    %v2540 = vpop.xlane.xlu0 %2539
    %v2541 = vsel %vm1878, %v2524, 0.0
    %2542 = vadd.xlane.f32.xlu0 %v2541
    %v2543 = vpop.xlane.xlu0 %2542
    %v2544 = vsel %vm1878, %v2526, 0.0
    %2545 = vadd.xlane.f32.xlu0 %v2544
    %v2546 = vpop.xlane.xlu0 %2545
    %v2547 = vsel %vm1878, %v2528, 0.0
    %2548 = vadd.xlane.f32.xlu0 %v2547
    %v2549 = vpop.xlane.xlu0 %2548
    %v2550 = vsel %vm1878, %v2530, 0.0
    %2551 = vadd.xlane.f32.xlu0 %v2550
    %v2552 = vpop.xlane.xlu0 %2551
    %v2553 = vsel %vm1878, %v2532, 0.0
    %2554 = vadd.xlane.f32.xlu0 %v2553
    %v2555 = vpop.xlane.xlu0 %2554
    %v2556 = vsel %vm1878, %v2534, 0.0
    %2557 = vadd.xlane.f32.xlu0 %v2556
    %v2558 = vpop.xlane.xlu0 %2557
    %v2559 = vrcp.pop %v2537
    %v2560 = vrcp.pop %v2540
    %v2561 = vrcp.pop %v2543
    %v2562 = vrcp.pop %v2546
    %v2563 = vrcp.pop %v2549
    %v2564 = vrcp.pop %v2552
    %v2565 = vrcp.pop %v2555
    %v2566 = vrcp.pop %v2558
    %v2567 = vmul.f32 %v2520, %v2559
    %v2568 = vmul.f32 %v2522, %v2560
    %v2569 = vmul.f32 %v2524, %v2561
    %v2570 = vmul.f32 %v2526, %v2562
    %v2571 = vmul.f32 %v2528, %v2563
    %v2572 = vmul.f32 %v2530, %v2564
    %v2573 = vmul.f32 %v2532, %v2565
    %v2574 = vmul.f32 %v2534, %v2566
    %v2576 = vsel %vm1878, %v2567, 0
    %2578 = vmatprep.subr.mxu0 0.0
    %2579 = vmatpush1.msra.mxu0 %v1385
    %2580 = vmatprep.subr.mxu0 0.0
    %2581 = vmatpush1.msra.mxu0 0.0
    %2582 = vmatprep.subr.mxu0 0.0
    %2583 = vmatpush1.msra.mxu0 0.0
    %2584 = vmatprep.subr.mxu0 0.0
    %2585 = vmatpush1.msra.mxu0 0.0
    %2586 = vmatprep.subr.mxu0 0.0
    %2587 = vmatpush1.msra.mxu0 0.0
    %2588 = vmatprep.subr.mxu0 0.0
    %2589 = vmatpush1.msra.mxu0 0.0
    %2590 = vmatprep.subr.mxu0 0.0
    %2591 = vmatpush1.msra.mxu0 0.0
    %2592 = vmatprep.subr.mxu0 0.0
    %2593 = vmatpush1.msra.mxu0 0.0
    %2594 = vmatprep.subr.mxu0 0.0
    %2595 = vmatpush1.msra.mxu0 0.0
    %2596 = vmatprep.subr.mxu0 0.0
    %2597 = vmatpush1.msra.mxu0 0.0
    %2598 = vmatprep.subr.mxu0 0.0
    %2599 = vmatpush1.msra.mxu0 0.0
    %2600 = vmatprep.subr.mxu0 0.0
    %2601 = vmatpush1.msra.mxu0 0.0
    %2602 = vmatprep.subr.mxu0 0.0
    %2603 = vmatpush1.msra.mxu0 0.0
    %2604 = vmatprep.subr.mxu0 0.0
    %2605 = vmatpush1.msra.mxu0 0.0
    %2606 = vmatprep.subr.mxu0 0.0
    %2607 = vmatpush1.msra.mxu0 0.0
    %2608 = vmatprep.subr.mxu0 0.0
    %2609 = vmatpush1.msra.mxu0 0.0
    %2610 = vmatprep.subr.mxu0 0.0
    %2611 = vmatpush1.msra.mxu0 0.0
    %2612 = vmatprep.subr.mxu0 0.0
    %2613 = vmatpush1.msra.mxu0 0.0
    %2614 = vmatprep.subr.mxu0 0.0
    %2615 = vmatpush1.msra.mxu0 0.0
    %2616 = vmatprep.subr.mxu0 0.0
    %2617 = vmatpush1.msra.mxu0 0.0
    %2618 = vmatprep.subr.mxu0 0.0
    %2619 = vmatpush1.msra.mxu0 0.0
    %2620 = vmatprep.subr.mxu0 0.0
    %2621 = vmatpush1.msra.mxu0 0.0
    %2622 = vmatprep.subr.mxu0 0.0
    %2623 = vmatpush1.msra.mxu0 0.0
    %2624 = vmatprep.subr.mxu0 0.0
    %2625 = vmatpush1.msra.mxu0 0.0
    %2626 = vmatprep.subr.mxu0 0.0
    %2627 = vmatpush1.msra.mxu0 0.0
    %2628 = vmatprep.subr.mxu0 0.0
    %2629 = vmatpush1.msra.mxu0 0.0
    %2630 = vmatprep.subr.mxu0 0.0
    %2631 = vmatpush1.msra.mxu0 0.0
    %2632 = vmatprep.subr.mxu0 0.0
    %2633 = vmatpush1.msra.mxu0 0.0
    %2634 = vmatprep.subr.mxu0 0.0
    %2635 = vmatpush1.msra.mxu0 0.0
    %2636 = vmatprep.subr.mxu0 0.0
    %2637 = vmatpush1.msra.mxu0 0.0
    %2638 = vmatprep.subr.mxu0 0.0
    %2639 = vmatpush1.msra.mxu0 0.0
    %2640 = vmatprep.subr.mxu0 0.0
    %2641 = vmatpush1.msra.mxu0 0.0
    %2642 = vmatprep.mubr.f32.mxu0 0.0
    %2643 = vmatmul.mubr.f32.gmra.mrb[0].mxu0 %v2576
    %v2644 = vpop.f32.mrb[0].mxu0
    %v2645 = vadd.f32 0.0, %v2644
    %v2646 = vpop.f32.mrb[0].mxu0
    %2647 = vdwg.mxu0
    %v2649 = vsel %vm1878, %v2568, 0
    %2651 = vmatprep.subr.mxu0 0.0
    %2652 = vmatpush1.msra.mxu0 %v1455
    %2653 = vmatprep.subr.mxu0 0.0
    %2654 = vmatpush1.msra.mxu0 0.0
    %2655 = vmatprep.subr.mxu0 0.0
    %2656 = vmatpush1.msra.mxu0 0.0
    %2657 = vmatprep.subr.mxu0 0.0
    %2658 = vmatpush1.msra.mxu0 0.0
    %2659 = vmatprep.subr.mxu0 0.0
    %2660 = vmatpush1.msra.mxu0 0.0
    %2661 = vmatprep.subr.mxu0 0.0
    %2662 = vmatpush1.msra.mxu0 0.0
    %2663 = vmatprep.subr.mxu0 0.0
    %2664 = vmatpush1.msra.mxu0 0.0
    %2665 = vmatprep.subr.mxu0 0.0
    %2666 = vmatpush1.msra.mxu0 0.0
    %2667 = vmatprep.subr.mxu0 0.0
    %2668 = vmatpush1.msra.mxu0 0.0
    %2669 = vmatprep.subr.mxu0 0.0
    %2670 = vmatpush1.msra.mxu0 0.0
    %2671 = vmatprep.subr.mxu0 0.0
    %2672 = vmatpush1.msra.mxu0 0.0
    %2673 = vmatprep.subr.mxu0 0.0
    %2674 = vmatpush1.msra.mxu0 0.0
    %2675 = vmatprep.subr.mxu0 0.0
    %2676 = vmatpush1.msra.mxu0 0.0
    %2677 = vmatprep.subr.mxu0 0.0
    %2678 = vmatpush1.msra.mxu0 0.0
    %2679 = vmatprep.subr.mxu0 0.0
    %2680 = vmatpush1.msra.mxu0 0.0
    %2681 = vmatprep.subr.mxu0 0.0
    %2682 = vmatpush1.msra.mxu0 0.0
    %2683 = vmatprep.subr.mxu0 0.0
    %2684 = vmatpush1.msra.mxu0 0.0
    %2685 = vmatprep.subr.mxu0 0.0
    %2686 = vmatpush1.msra.mxu0 0.0
    %2687 = vmatprep.subr.mxu0 0.0
    %2688 = vmatpush1.msra.mxu0 0.0
    %2689 = vmatprep.subr.mxu0 0.0
    %2690 = vmatpush1.msra.mxu0 0.0
    %2691 = vmatprep.subr.mxu0 0.0
    %2692 = vmatpush1.msra.mxu0 0.0
    %2693 = vmatprep.subr.mxu0 0.0
    %2694 = vmatpush1.msra.mxu0 0.0
    %2695 = vmatprep.subr.mxu0 0.0
    %2696 = vmatpush1.msra.mxu0 0.0
    %2697 = vmatprep.subr.mxu0 0.0
    %2698 = vmatpush1.msra.mxu0 0.0
    %2699 = vmatprep.subr.mxu0 0.0
    %2700 = vmatpush1.msra.mxu0 0.0
    %2701 = vmatprep.subr.mxu0 0.0
    %2702 = vmatpush1.msra.mxu0 0.0
    %2703 = vmatprep.subr.mxu0 0.0
    %2704 = vmatpush1.msra.mxu0 0.0
    %2705 = vmatprep.subr.mxu0 0.0
    %2706 = vmatpush1.msra.mxu0 0.0
    %2707 = vmatprep.subr.mxu0 0.0
    %2708 = vmatpush1.msra.mxu0 0.0
    %2709 = vmatprep.subr.mxu0 0.0
    %2710 = vmatpush1.msra.mxu0 0.0
    %2711 = vmatprep.subr.mxu0 0.0
    %2712 = vmatpush1.msra.mxu0 0.0
    %2713 = vmatprep.subr.mxu0 0.0
    %2714 = vmatpush1.msra.mxu0 0.0
    %2715 = vmatprep.mubr.f32.mxu0 0.0
    %2716 = vmatmul.mubr.f32.gmra.mrb[0].mxu0 %v2649
    %v2717 = vpop.f32.mrb[0].mxu0
    %v2718 = vadd.f32 0.0, %v2717
    %v2719 = vpop.f32.mrb[0].mxu0
    %2720 = vdwg.mxu0
    %v2722 = vsel %vm1878, %v2569, 0
    %2724 = vmatprep.subr.mxu0 0.0
    %2725 = vmatpush1.msra.mxu0 %v1525
    %2726 = vmatprep.subr.mxu0 0.0
    %2727 = vmatpush1.msra.mxu0 0.0
    %2728 = vmatprep.subr.mxu0 0.0
    %2729 = vmatpush1.msra.mxu0 0.0
    %2730 = vmatprep.subr.mxu0 0.0
    %2731 = vmatpush1.msra.mxu0 0.0
    %2732 = vmatprep.subr.mxu0 0.0
    %2733 = vmatpush1.msra.mxu0 0.0
    %2734 = vmatprep.subr.mxu0 0.0
    %2735 = vmatpush1.msra.mxu0 0.0
    %2736 = vmatprep.subr.mxu0 0.0
    %2737 = vmatpush1.msra.mxu0 0.0
    %2738 = vmatprep.subr.mxu0 0.0
    %2739 = vmatpush1.msra.mxu0 0.0
    %2740 = vmatprep.subr.mxu0 0.0
    %2741 = vmatpush1.msra.mxu0 0.0
    %2742 = vmatprep.subr.mxu0 0.0
    %2743 = vmatpush1.msra.mxu0 0.0
    %2744 = vmatprep.subr.mxu0 0.0
    %2745 = vmatpush1.msra.mxu0 0.0
    %2746 = vmatprep.subr.mxu0 0.0
    %2747 = vmatpush1.msra.mxu0 0.0
    %2748 = vmatprep.subr.mxu0 0.0
    %2749 = vmatpush1.msra.mxu0 0.0
    %2750 = vmatprep.subr.mxu0 0.0
    %2751 = vmatpush1.msra.mxu0 0.0
    %2752 = vmatprep.subr.mxu0 0.0
    %2753 = vmatpush1.msra.mxu0 0.0
    %2754 = vmatprep.subr.mxu0 0.0
    %2755 = vmatpush1.msra.mxu0 0.0
    %2756 = vmatprep.subr.mxu0 0.0
    %2757 = vmatpush1.msra.mxu0 0.0
    %2758 = vmatprep.subr.mxu0 0.0
    %2759 = vmatpush1.msra.mxu0 0.0
    %2760 = vmatprep.subr.mxu0 0.0
    %2761 = vmatpush1.msra.mxu0 0.0
    %2762 = vmatprep.subr.mxu0 0.0
    %2763 = vmatpush1.msra.mxu0 0.0
    %2764 = vmatprep.subr.mxu0 0.0
    %2765 = vmatpush1.msra.mxu0 0.0
    %2766 = vmatprep.subr.mxu0 0.0
    %2767 = vmatpush1.msra.mxu0 0.0
    %2768 = vmatprep.subr.mxu0 0.0
    %2769 = vmatpush1.msra.mxu0 0.0
    %2770 = vmatprep.subr.mxu0 0.0
    %2771 = vmatpush1.msra.mxu0 0.0
    %2772 = vmatprep.subr.mxu0 0.0
    %2773 = vmatpush1.msra.mxu0 0.0
    %2774 = vmatprep.subr.mxu0 0.0
    %2775 = vmatpush1.msra.mxu0 0.0
    %2776 = vmatprep.subr.mxu0 0.0
    %2777 = vmatpush1.msra.mxu0 0.0
    %2778 = vmatprep.subr.mxu0 0.0
    %2779 = vmatpush1.msra.mxu0 0.0
    %2780 = vmatprep.subr.mxu0 0.0
    %2781 = vmatpush1.msra.mxu0 0.0
    %2782 = vmatprep.subr.mxu0 0.0
    %2783 = vmatpush1.msra.mxu0 0.0
    %2784 = vmatprep.subr.mxu0 0.0
    %2785 = vmatpush1.msra.mxu0 0.0
    %2786 = vmatprep.subr.mxu0 0.0
    %2787 = vmatpush1.msra.mxu0 0.0
    %2788 = vmatprep.mubr.f32.mxu0 0.0
    %2789 = vmatmul.mubr.f32.gmra.mrb[0].mxu0 %v2722
    %v2790 = vpop.f32.mrb[0].mxu0
    %v2791 = vadd.f32 0.0, %v2790
    %v2792 = vpop.f32.mrb[0].mxu0
    %2793 = vdwg.mxu0
    %v2795 = vsel %vm1878, %v2570, 0
    %2797 = vmatprep.subr.mxu0 0.0
    %2798 = vmatpush1.msra.mxu0 %v1595
    %2799 = vmatprep.subr.mxu0 0.0
    %2800 = vmatpush1.msra.mxu0 0.0
    %2801 = vmatprep.subr.mxu0 0.0
    %2802 = vmatpush1.msra.mxu0 0.0
    %2803 = vmatprep.subr.mxu0 0.0
    %2804 = vmatpush1.msra.mxu0 0.0
    %2805 = vmatprep.subr.mxu0 0.0
    %2806 = vmatpush1.msra.mxu0 0.0
    %2807 = vmatprep.subr.mxu0 0.0
    %2808 = vmatpush1.msra.mxu0 0.0
    %2809 = vmatprep.subr.mxu0 0.0
    %2810 = vmatpush1.msra.mxu0 0.0
    %2811 = vmatprep.subr.mxu0 0.0
    %2812 = vmatpush1.msra.mxu0 0.0
    %2813 = vmatprep.subr.mxu0 0.0
    %2814 = vmatpush1.msra.mxu0 0.0
    %2815 = vmatprep.subr.mxu0 0.0
    %2816 = vmatpush1.msra.mxu0 0.0
    %2817 = vmatprep.subr.mxu0 0.0
    %2818 = vmatpush1.msra.mxu0 0.0
    %2819 = vmatprep.subr.mxu0 0.0
    %2820 = vmatpush1.msra.mxu0 0.0
    %2821 = vmatprep.subr.mxu0 0.0
    %2822 = vmatpush1.msra.mxu0 0.0
    %2823 = vmatprep.subr.mxu0 0.0
    %2824 = vmatpush1.msra.mxu0 0.0
    %2825 = vmatprep.subr.mxu0 0.0
    %2826 = vmatpush1.msra.mxu0 0.0
    %2827 = vmatprep.subr.mxu0 0.0
    %2828 = vmatpush1.msra.mxu0 0.0
    %2829 = vmatprep.subr.mxu0 0.0
    %2830 = vmatpush1.msra.mxu0 0.0
    %2831 = vmatprep.subr.mxu0 0.0
    %2832 = vmatpush1.msra.mxu0 0.0
    %2833 = vmatprep.subr.mxu0 0.0
    %2834 = vmatpush1.msra.mxu0 0.0
    %2835 = vmatprep.subr.mxu0 0.0
    %2836 = vmatpush1.msra.mxu0 0.0
    %2837 = vmatprep.subr.mxu0 0.0
    %2838 = vmatpush1.msra.mxu0 0.0
    %2839 = vmatprep.subr.mxu0 0.0
    %2840 = vmatpush1.msra.mxu0 0.0
    %2841 = vmatprep.subr.mxu0 0.0
    %2842 = vmatpush1.msra.mxu0 0.0
    %2843 = vmatprep.subr.mxu0 0.0
    %2844 = vmatpush1.msra.mxu0 0.0
    %2845 = vmatprep.subr.mxu0 0.0
    %2846 = vmatpush1.msra.mxu0 0.0
    %2847 = vmatprep.subr.mxu0 0.0
    %2848 = vmatpush1.msra.mxu0 0.0
    %2849 = vmatprep.subr.mxu0 0.0
    %2850 = vmatpush1.msra.mxu0 0.0
    %2851 = vmatprep.subr.mxu0 0.0
    %2852 = vmatpush1.msra.mxu0 0.0
    %2853 = vmatprep.subr.mxu0 0.0
    %2854 = vmatpush1.msra.mxu0 0.0
    %2855 = vmatprep.subr.mxu0 0.0
    %2856 = vmatpush1.msra.mxu0 0.0
    %2857 = vmatprep.subr.mxu0 0.0
    %2858 = vmatpush1.msra.mxu0 0.0
    %2859 = vmatprep.subr.mxu0 0.0
    %2860 = vmatpush1.msra.mxu0 0.0
    %2861 = vmatprep.mubr.f32.mxu0 0.0
    %2862 = vmatmul.mubr.f32.gmra.mrb[0].mxu0 %v2795
    %v2863 = vpop.f32.mrb[0].mxu0
    %v2864 = vadd.f32 0.0, %v2863
    %v2865 = vpop.f32.mrb[0].mxu0
    %2866 = vdwg.mxu0
    %v2868 = vsel %vm1878, %v2571, 0
    %2870 = vmatprep.subr.mxu0 0.0
    %2871 = vmatpush1.msra.mxu0 %v1665
    %2872 = vmatprep.subr.mxu0 0.0
    %2873 = vmatpush1.msra.mxu0 0.0
    %2874 = vmatprep.subr.mxu0 0.0
    %2875 = vmatpush1.msra.mxu0 0.0
    %2876 = vmatprep.subr.mxu0 0.0
    %2877 = vmatpush1.msra.mxu0 0.0
    %2878 = vmatprep.subr.mxu0 0.0
    %2879 = vmatpush1.msra.mxu0 0.0
    %2880 = vmatprep.subr.mxu0 0.0
    %2881 = vmatpush1.msra.mxu0 0.0
    %2882 = vmatprep.subr.mxu0 0.0
    %2883 = vmatpush1.msra.mxu0 0.0
    %2884 = vmatprep.subr.mxu0 0.0
    %2885 = vmatpush1.msra.mxu0 0.0
    %2886 = vmatprep.subr.mxu0 0.0
    %2887 = vmatpush1.msra.mxu0 0.0
    %2888 = vmatprep.subr.mxu0 0.0
    %2889 = vmatpush1.msra.mxu0 0.0
    %2890 = vmatprep.subr.mxu0 0.0
    %2891 = vmatpush1.msra.mxu0 0.0
    %2892 = vmatprep.subr.mxu0 0.0
    %2893 = vmatpush1.msra.mxu0 0.0
    %2894 = vmatprep.subr.mxu0 0.0
    %2895 = vmatpush1.msra.mxu0 0.0
    %2896 = vmatprep.subr.mxu0 0.0
    %2897 = vmatpush1.msra.mxu0 0.0
    %2898 = vmatprep.subr.mxu0 0.0
    %2899 = vmatpush1.msra.mxu0 0.0
    %2900 = vmatprep.subr.mxu0 0.0
    %2901 = vmatpush1.msra.mxu0 0.0
    %2902 = vmatprep.subr.mxu0 0.0
    %2903 = vmatpush1.msra.mxu0 0.0
    %2904 = vmatprep.subr.mxu0 0.0
    %2905 = vmatpush1.msra.mxu0 0.0
    %2906 = vmatprep.subr.mxu0 0.0
    %2907 = vmatpush1.msra.mxu0 0.0
    %2908 = vmatprep.subr.mxu0 0.0
    %2909 = vmatpush1.msra.mxu0 0.0
    %2910 = vmatprep.subr.mxu0 0.0
    %2911 = vmatpush1.msra.mxu0 0.0
    %2912 = vmatprep.subr.mxu0 0.0
    %2913 = vmatpush1.msra.mxu0 0.0
    %2914 = vmatprep.subr.mxu0 0.0
    %2915 = vmatpush1.msra.mxu0 0.0
    %2916 = vmatprep.subr.mxu0 0.0
    %2917 = vmatpush1.msra.mxu0 0.0
    %2918 = vmatprep.subr.mxu0 0.0
    %2919 = vmatpush1.msra.mxu0 0.0
    %2920 = vmatprep.subr.mxu0 0.0
    %2921 = vmatpush1.msra.mxu0 0.0
    %2922 = vmatprep.subr.mxu0 0.0
    %2923 = vmatpush1.msra.mxu0 0.0
    %2924 = vmatprep.subr.mxu0 0.0
    %2925 = vmatpush1.msra.mxu0 0.0
    %2926 = vmatprep.subr.mxu0 0.0
    %2927 = vmatpush1.msra.mxu0 0.0
    %2928 = vmatprep.subr.mxu0 0.0
    %2929 = vmatpush1.msra.mxu0 0.0
    %2930 = vmatprep.subr.mxu0 0.0
    %2931 = vmatpush1.msra.mxu0 0.0
    %2932 = vmatprep.subr.mxu0 0.0
    %2933 = vmatpush1.msra.mxu0 0.0
    %2934 = vmatprep.mubr.f32.mxu0 0.0
    %2935 = vmatmul.mubr.f32.gmra.mrb[0].mxu0 %v2868
    %v2936 = vpop.f32.mrb[0].mxu0
    %v2937 = vadd.f32 0.0, %v2936
    %v2938 = vpop.f32.mrb[0].mxu0
    %2939 = vdwg.mxu0
    %v2941 = vsel %vm1878, %v2572, 0
    %2943 = vmatprep.subr.mxu0 0.0
    %2944 = vmatpush1.msra.mxu0 %v1735
    %2945 = vmatprep.subr.mxu0 0.0
    %2946 = vmatpush1.msra.mxu0 0.0
    %2947 = vmatprep.subr.mxu0 0.0
    %2948 = vmatpush1.msra.mxu0 0.0
    %2949 = vmatprep.subr.mxu0 0.0
    %2950 = vmatpush1.msra.mxu0 0.0
    %2951 = vmatprep.subr.mxu0 0.0
    %2952 = vmatpush1.msra.mxu0 0.0
    %2953 = vmatprep.subr.mxu0 0.0
    %2954 = vmatpush1.msra.mxu0 0.0
    %2955 = vmatprep.subr.mxu0 0.0
    %2956 = vmatpush1.msra.mxu0 0.0
    %2957 = vmatprep.subr.mxu0 0.0
    %2958 = vmatpush1.msra.mxu0 0.0
    %2959 = vmatprep.subr.mxu0 0.0
    %2960 = vmatpush1.msra.mxu0 0.0
    %2961 = vmatprep.subr.mxu0 0.0
    %2962 = vmatpush1.msra.mxu0 0.0
    %2963 = vmatprep.subr.mxu0 0.0
    %2964 = vmatpush1.msra.mxu0 0.0
    %2965 = vmatprep.subr.mxu0 0.0
    %2966 = vmatpush1.msra.mxu0 0.0
    %2967 = vmatprep.subr.mxu0 0.0
    %2968 = vmatpush1.msra.mxu0 0.0
    %2969 = vmatprep.subr.mxu0 0.0
    %2970 = vmatpush1.msra.mxu0 0.0
    %2971 = vmatprep.subr.mxu0 0.0
    %2972 = vmatpush1.msra.mxu0 0.0
    %2973 = vmatprep.subr.mxu0 0.0
    %2974 = vmatpush1.msra.mxu0 0.0
    %2975 = vmatprep.subr.mxu0 0.0
    %2976 = vmatpush1.msra.mxu0 0.0
    %2977 = vmatprep.subr.mxu0 0.0
    %2978 = vmatpush1.msra.mxu0 0.0
    %2979 = vmatprep.subr.mxu0 0.0
    %2980 = vmatpush1.msra.mxu0 0.0
    %2981 = vmatprep.subr.mxu0 0.0
    %2982 = vmatpush1.msra.mxu0 0.0
    %2983 = vmatprep.subr.mxu0 0.0
    %2984 = vmatpush1.msra.mxu0 0.0
    %2985 = vmatprep.subr.mxu0 0.0
    %2986 = vmatpush1.msra.mxu0 0.0
    %2987 = vmatprep.subr.mxu0 0.0
    %2988 = vmatpush1.msra.mxu0 0.0
    %2989 = vmatprep.subr.mxu0 0.0
    %2990 = vmatpush1.msra.mxu0 0.0
    %2991 = vmatprep.subr.mxu0 0.0
    %2992 = vmatpush1.msra.mxu0 0.0
    %2993 = vmatprep.subr.mxu0 0.0
    %2994 = vmatpush1.msra.mxu0 0.0
    %2995 = vmatprep.subr.mxu0 0.0
    %2996 = vmatpush1.msra.mxu0 0.0
    %2997 = vmatprep.subr.mxu0 0.0
    %2998 = vmatpush1.msra.mxu0 0.0
    %2999 = vmatprep.subr.mxu0 0.0
    %3000 = vmatpush1.msra.mxu0 0.0
    %3001 = vmatprep.subr.mxu0 0.0
    %3002 = vmatpush1.msra.mxu0 0.0
    %3003 = vmatprep.subr.mxu0 0.0
    %3004 = vmatpush1.msra.mxu0 0.0
    %3005 = vmatprep.subr.mxu0 0.0
    %3006 = vmatpush1.msra.mxu0 0.0
    %3007 = vmatprep.mubr.f32.mxu0 0.0
    %3008 = vmatmul.mubr.f32.gmra.mrb[0].mxu0 %v2941
    %v3009 = vpop.f32.mrb[0].mxu0
    %v3010 = vadd.f32 0.0, %v3009
    %v3011 = vpop.f32.mrb[0].mxu0
    %3012 = vdwg.mxu0
    %v3014 = vsel %vm1878, %v2573, 0
    %3016 = vmatprep.subr.mxu0 0.0
    %3017 = vmatpush1.msra.mxu0 %v1805
    %3018 = vmatprep.subr.mxu0 0.0
    %3019 = vmatpush1.msra.mxu0 0.0
    %3020 = vmatprep.subr.mxu0 0.0
    %3021 = vmatpush1.msra.mxu0 0.0
    %3022 = vmatprep.subr.mxu0 0.0
    %3023 = vmatpush1.msra.mxu0 0.0
    %3024 = vmatprep.subr.mxu0 0.0
    %3025 = vmatpush1.msra.mxu0 0.0
    %3026 = vmatprep.subr.mxu0 0.0
    %3027 = vmatpush1.msra.mxu0 0.0
    %3028 = vmatprep.subr.mxu0 0.0
    %3029 = vmatpush1.msra.mxu0 0.0
    %3030 = vmatprep.subr.mxu0 0.0
    %3031 = vmatpush1.msra.mxu0 0.0
    %3032 = vmatprep.subr.mxu0 0.0
    %3033 = vmatpush1.msra.mxu0 0.0
    %3034 = vmatprep.subr.mxu0 0.0
    %3035 = vmatpush1.msra.mxu0 0.0
    %3036 = vmatprep.subr.mxu0 0.0
    %3037 = vmatpush1.msra.mxu0 0.0
    %3038 = vmatprep.subr.mxu0 0.0
    %3039 = vmatpush1.msra.mxu0 0.0
    %3040 = vmatprep.subr.mxu0 0.0
    %3041 = vmatpush1.msra.mxu0 0.0
    %3042 = vmatprep.subr.mxu0 0.0
    %3043 = vmatpush1.msra.mxu0 0.0
    %3044 = vmatprep.subr.mxu0 0.0
    %3045 = vmatpush1.msra.mxu0 0.0
    %3046 = vmatprep.subr.mxu0 0.0
    %3047 = vmatpush1.msra.mxu0 0.0
    %3048 = vmatprep.subr.mxu0 0.0
    %3049 = vmatpush1.msra.mxu0 0.0
    %3050 = vmatprep.subr.mxu0 0.0
    %3051 = vmatpush1.msra.mxu0 0.0
    %3052 = vmatprep.subr.mxu0 0.0
    %3053 = vmatpush1.msra.mxu0 0.0
    %3054 = vmatprep.subr.mxu0 0.0
    %3055 = vmatpush1.msra.mxu0 0.0
    %3056 = vmatprep.subr.mxu0 0.0
    %3057 = vmatpush1.msra.mxu0 0.0
    %3058 = vmatprep.subr.mxu0 0.0
    %3059 = vmatpush1.msra.mxu0 0.0
    %3060 = vmatprep.subr.mxu0 0.0
    %3061 = vmatpush1.msra.mxu0 0.0
    %3062 = vmatprep.subr.mxu0 0.0
    %3063 = vmatpush1.msra.mxu0 0.0
    %3064 = vmatprep.subr.mxu0 0.0
    %3065 = vmatpush1.msra.mxu0 0.0
    %3066 = vmatprep.subr.mxu0 0.0
    %3067 = vmatpush1.msra.mxu0 0.0
    %3068 = vmatprep.subr.mxu0 0.0
    %3069 = vmatpush1.msra.mxu0 0.0
    %3070 = vmatprep.subr.mxu0 0.0
    %3071 = vmatpush1.msra.mxu0 0.0
    %3072 = vmatprep.subr.mxu0 0.0
    %3073 = vmatpush1.msra.mxu0 0.0
    %3074 = vmatprep.subr.mxu0 0.0
    %3075 = vmatpush1.msra.mxu0 0.0
    %3076 = vmatprep.subr.mxu0 0.0
    %3077 = vmatpush1.msra.mxu0 0.0
    %3078 = vmatprep.subr.mxu0 0.0
    %3079 = vmatpush1.msra.mxu0 0.0
    %3080 = vmatprep.mubr.f32.mxu0 0.0
    %3081 = vmatmul.mubr.f32.gmra.mrb[0].mxu0 %v3014
    %v3082 = vpop.f32.mrb[0].mxu0
    %v3083 = vadd.f32 0.0, %v3082
    %v3084 = vpop.f32.mrb[0].mxu0
    %3085 = vdwg.mxu0
    %v3087 = vsel %vm1878, %v2574, 0
    %3089 = vmatprep.subr.mxu0 0.0
    %3090 = vmatpush1.msra.mxu0 %v1875
    %3091 = vmatprep.subr.mxu0 0.0
    %3092 = vmatpush1.msra.mxu0 0.0
    %3093 = vmatprep.subr.mxu0 0.0
    %3094 = vmatpush1.msra.mxu0 0.0
    %3095 = vmatprep.subr.mxu0 0.0
    %3096 = vmatpush1.msra.mxu0 0.0
    %3097 = vmatprep.subr.mxu0 0.0
    %3098 = vmatpush1.msra.mxu0 0.0
    %3099 = vmatprep.subr.mxu0 0.0
    %3100 = vmatpush1.msra.mxu0 0.0
    %3101 = vmatprep.subr.mxu0 0.0
    %3102 = vmatpush1.msra.mxu0 0.0
    %3103 = vmatprep.subr.mxu0 0.0
    %3104 = vmatpush1.msra.mxu0 0.0
    %3105 = vmatprep.subr.mxu0 0.0
    %3106 = vmatpush1.msra.mxu0 0.0
    %3107 = vmatprep.subr.mxu0 0.0
    %3108 = vmatpush1.msra.mxu0 0.0
    %3109 = vmatprep.subr.mxu0 0.0
    %3110 = vmatpush1.msra.mxu0 0.0
    %3111 = vmatprep.subr.mxu0 0.0
    %3112 = vmatpush1.msra.mxu0 0.0
    %3113 = vmatprep.subr.mxu0 0.0
    %3114 = vmatpush1.msra.mxu0 0.0
    %3115 = vmatprep.subr.mxu0 0.0
    %3116 = vmatpush1.msra.mxu0 0.0
    %3117 = vmatprep.subr.mxu0 0.0
    %3118 = vmatpush1.msra.mxu0 0.0
    %3119 = vmatprep.subr.mxu0 0.0
    %3120 = vmatpush1.msra.mxu0 0.0
    %3121 = vmatprep.subr.mxu0 0.0
    %3122 = vmatpush1.msra.mxu0 0.0
    %3123 = vmatprep.subr.mxu0 0.0
    %3124 = vmatpush1.msra.mxu0 0.0
    %3125 = vmatprep.subr.mxu0 0.0
    %3126 = vmatpush1.msra.mxu0 0.0
    %3127 = vmatprep.subr.mxu0 0.0
    %3128 = vmatpush1.msra.mxu0 0.0
    %3129 = vmatprep.subr.mxu0 0.0
    %3130 = vmatpush1.msra.mxu0 0.0
    %3131 = vmatprep.subr.mxu0 0.0
    %3132 = vmatpush1.msra.mxu0 0.0
    %3133 = vmatprep.subr.mxu0 0.0
    %3134 = vmatpush1.msra.mxu0 0.0
    %3135 = vmatprep.subr.mxu0 0.0
    %3136 = vmatpush1.msra.mxu0 0.0
    %3137 = vmatprep.subr.mxu0 0.0
    %3138 = vmatpush1.msra.mxu0 0.0
    %3139 = vmatprep.subr.mxu0 0.0
    %3140 = vmatpush1.msra.mxu0 0.0
    %3141 = vmatprep.subr.mxu0 0.0
    %3142 = vmatpush1.msra.mxu0 0.0
    %3143 = vmatprep.subr.mxu0 0.0
    %3144 = vmatpush1.msra.mxu0 0.0
    %3145 = vmatprep.subr.mxu0 0.0
    %3146 = vmatpush1.msra.mxu0 0.0
    %3147 = vmatprep.subr.mxu0 0.0
    %3148 = vmatpush1.msra.mxu0 0.0
    %3149 = vmatprep.subr.mxu0 0.0
    %3150 = vmatpush1.msra.mxu0 0.0
    %3151 = vmatprep.subr.mxu0 0.0
    %3152 = vmatpush1.msra.mxu0 0.0
    %3153 = vmatprep.mubr.f32.mxu0 0.0
    %3154 = vmatmul.mubr.f32.gmra.mrb[0].mxu0 %v3087
    %v3155 = vpop.f32.mrb[0].mxu0
    %v3156 = vadd.f32 0.0, %v3155
    %v3157 = vpop.f32.mrb[0].mxu0
    %3158 = vdwg.mxu0
    %v3159 = vld [vmem:[%s6] sm:$0xff]
    %v3160 = vld [vmem:[%s6 + $0x8] sm:$0xff]
    %v3161 = vld [vmem:[%s6 + $0x10] sm:$0xff]
    %v3162 = vld [vmem:[%s6 + $0x18] sm:$0xff]
    %v3163 = vld [vmem:[%s6 + $0x20] sm:$0xff]
    %v3164 = vld [vmem:[%s6 + $0x28] sm:$0xff]
    %v3165 = vld [vmem:[%s6 + $0x30] sm:$0xff]
    %v3166 = vld [vmem:[%s6 + $0x38] sm:$0xff]
    %v3168 = vsel %vm1878, %v2645, 0
    %3170 = vmatprep.subr.mxu0 0.0
    %3171 = vmatpush1.msra.mxu0 %v3159
    %3172 = vmatprep.subr.mxu0 0.0
    %3173 = vmatpush1.msra.mxu0 0.0
    %3174 = vmatprep.subr.mxu0 0.0
    %3175 = vmatpush1.msra.mxu0 0.0
    %3176 = vmatprep.subr.mxu0 0.0
    %3177 = vmatpush1.msra.mxu0 0.0
    %3178 = vmatprep.subr.mxu0 0.0
    %3179 = vmatpush1.msra.mxu0 0.0
    %3180 = vmatprep.subr.mxu0 0.0
    %3181 = vmatpush1.msra.mxu0 0.0
    %3182 = vmatprep.subr.mxu0 0.0
    %3183 = vmatpush1.msra.mxu0 0.0
    %3184 = vmatprep.subr.mxu0 0.0
    %3185 = vmatpush1.msra.mxu0 0.0
    %3186 = vmatprep.subr.mxu0 0.0
    %3187 = vmatpush1.msra.mxu0 0.0
    %3188 = vmatprep.subr.mxu0 0.0
    %3189 = vmatpush1.msra.mxu0 0.0
    %3190 = vmatprep.subr.mxu0 0.0
    %3191 = vmatpush1.msra.mxu0 0.0
    %3192 = vmatprep.subr.mxu0 0.0
    %3193 = vmatpush1.msra.mxu0 0.0
    %3194 = vmatprep.subr.mxu0 0.0
    %3195 = vmatpush1.msra.mxu0 0.0
    %3196 = vmatprep.subr.mxu0 0.0
    %3197 = vmatpush1.msra.mxu0 0.0
    %3198 = vmatprep.subr.mxu0 0.0
    %3199 = vmatpush1.msra.mxu0 0.0
    %3200 = vmatprep.subr.mxu0 0.0
    %3201 = vmatpush1.msra.mxu0 0.0
    %3202 = vmatprep.subr.mxu0 0.0
    %3203 = vmatpush1.msra.mxu0 0.0
    %3204 = vmatprep.subr.mxu0 0.0
    %3205 = vmatpush1.msra.mxu0 0.0
    %3206 = vmatprep.subr.mxu0 0.0
    %3207 = vmatpush1.msra.mxu0 0.0
    %3208 = vmatprep.subr.mxu0 0.0
    %3209 = vmatpush1.msra.mxu0 0.0
    %3210 = vmatprep.subr.mxu0 0.0
    %3211 = vmatpush1.msra.mxu0 0.0
    %3212 = vmatprep.subr.mxu0 0.0
    %3213 = vmatpush1.msra.mxu0 0.0
    %3214 = vmatprep.subr.mxu0 0.0
    %3215 = vmatpush1.msra.mxu0 0.0
    %3216 = vmatprep.subr.mxu0 0.0
    %3217 = vmatpush1.msra.mxu0 0.0
    %3218 = vmatprep.subr.mxu0 0.0
    %3219 = vmatpush1.msra.mxu0 0.0
    %3220 = vmatprep.subr.mxu0 0.0
    %3221 = vmatpush1.msra.mxu0 0.0
    %3222 = vmatprep.subr.mxu0 0.0
    %3223 = vmatpush1.msra.mxu0 0.0
    %3224 = vmatprep.subr.mxu0 0.0
    %3225 = vmatpush1.msra.mxu0 0.0
    %3226 = vmatprep.subr.mxu0 0.0
    %3227 = vmatpush1.msra.mxu0 0.0
    %3228 = vmatprep.subr.mxu0 0.0
    %3229 = vmatpush1.msra.mxu0 0.0
    %3230 = vmatprep.subr.mxu0 0.0
    %3231 = vmatpush1.msra.mxu0 0.0
    %3232 = vmatprep.subr.mxu0 0.0
    %3233 = vmatpush1.msra.mxu0 0.0
    %3234 = vmatprep.mubr.f32.mxu0 0.0
    %3235 = vmatmul.mubr.f32.gmra.mrb[0].mxu0 %v3168
    %v3236 = vpop.f32.mrb[0].mxu0
    %v3237 = vadd.f32 0.0, %v3236
    %v3238 = vpop.f32.mrb[0].mxu0
    %3239 = vdwg.mxu0
    %v3241 = vsel %vm1878, %v2718, 0
    %3243 = vmatprep.subr.mxu0 0.0
    %3244 = vmatpush1.msra.mxu0 %v3160
    %3245 = vmatprep.subr.mxu0 0.0
    %3246 = vmatpush1.msra.mxu0 0.0
    %3247 = vmatprep.subr.mxu0 0.0
    %3248 = vmatpush1.msra.mxu0 0.0
    %3249 = vmatprep.subr.mxu0 0.0
    %3250 = vmatpush1.msra.mxu0 0.0
    %3251 = vmatprep.subr.mxu0 0.0
    %3252 = vmatpush1.msra.mxu0 0.0
    %3253 = vmatprep.subr.mxu0 0.0
    %3254 = vmatpush1.msra.mxu0 0.0
    %3255 = vmatprep.subr.mxu0 0.0
    %3256 = vmatpush1.msra.mxu0 0.0
    %3257 = vmatprep.subr.mxu0 0.0
    %3258 = vmatpush1.msra.mxu0 0.0
    %3259 = vmatprep.subr.mxu0 0.0
    %3260 = vmatpush1.msra.mxu0 0.0
    %3261 = vmatprep.subr.mxu0 0.0
    %3262 = vmatpush1.msra.mxu0 0.0
    %3263 = vmatprep.subr.mxu0 0.0
    %3264 = vmatpush1.msra.mxu0 0.0
    %3265 = vmatprep.subr.mxu0 0.0
    %3266 = vmatpush1.msra.mxu0 0.0
    %3267 = vmatprep.subr.mxu0 0.0
    %3268 = vmatpush1.msra.mxu0 0.0
    %3269 = vmatprep.subr.mxu0 0.0
    %3270 = vmatpush1.msra.mxu0 0.0
    %3271 = vmatprep.subr.mxu0 0.0
    %3272 = vmatpush1.msra.mxu0 0.0
    %3273 = vmatprep.subr.mxu0 0.0
    %3274 = vmatpush1.msra.mxu0 0.0
    %3275 = vmatprep.subr.mxu0 0.0
    %3276 = vmatpush1.msra.mxu0 0.0
    %3277 = vmatprep.subr.mxu0 0.0
    %3278 = vmatpush1.msra.mxu0 0.0
    %3279 = vmatprep.subr.mxu0 0.0
    %3280 = vmatpush1.msra.mxu0 0.0
    %3281 = vmatprep.subr.mxu0 0.0
    %3282 = vmatpush1.msra.mxu0 0.0
    %3283 = vmatprep.subr.mxu0 0.0
    %3284 = vmatpush1.msra.mxu0 0.0
    %3285 = vmatprep.subr.mxu0 0.0
    %3286 = vmatpush1.msra.mxu0 0.0
    %3287 = vmatprep.subr.mxu0 0.0
    %3288 = vmatpush1.msra.mxu0 0.0
    %3289 = vmatprep.subr.mxu0 0.0
    %3290 = vmatpush1.msra.mxu0 0.0
    %3291 = vmatprep.subr.mxu0 0.0
    %3292 = vmatpush1.msra.mxu0 0.0
    %3293 = vmatprep.subr.mxu0 0.0
    %3294 = vmatpush1.msra.mxu0 0.0
    %3295 = vmatprep.subr.mxu0 0.0
    %3296 = vmatpush1.msra.mxu0 0.0
    %3297 = vmatprep.subr.mxu0 0.0
    %3298 = vmatpush1.msra.mxu0 0.0
    %3299 = vmatprep.subr.mxu0 0.0
    %3300 = vmatpush1.msra.mxu0 0.0
    %3301 = vmatprep.subr.mxu0 0.0
    %3302 = vmatpush1.msra.mxu0 0.0
    %3303 = vmatprep.subr.mxu0 0.0
    %3304 = vmatpush1.msra.mxu0 0.0
    %3305 = vmatprep.subr.mxu0 0.0
    %3306 = vmatpush1.msra.mxu0 0.0
    %3307 = vmatprep.mubr.f32.mxu0 0.0
    %3308 = vmatmul.mubr.f32.gmra.mrb[0].mxu0 %v3241
    %v3309 = vpop.f32.mrb[0].mxu0
    %v3310 = vadd.f32 0.0, %v3309
    %v3311 = vpop.f32.mrb[0].mxu0
    %3312 = vdwg.mxu0
    %v3314 = vsel %vm1878, %v2791, 0
    %3316 = vmatprep.subr.mxu0 0.0
    %3317 = vmatpush1.msra.mxu0 %v3161
    %3318 = vmatprep.subr.mxu0 0.0
    %3319 = vmatpush1.msra.mxu0 0.0
    %3320 = vmatprep.subr.mxu0 0.0
    %3321 = vmatpush1.msra.mxu0 0.0
    %3322 = vmatprep.subr.mxu0 0.0
    %3323 = vmatpush1.msra.mxu0 0.0
    %3324 = vmatprep.subr.mxu0 0.0
    %3325 = vmatpush1.msra.mxu0 0.0
    %3326 = vmatprep.subr.mxu0 0.0
    %3327 = vmatpush1.msra.mxu0 0.0
    %3328 = vmatprep.subr.mxu0 0.0
    %3329 = vmatpush1.msra.mxu0 0.0
    %3330 = vmatprep.subr.mxu0 0.0
    %3331 = vmatpush1.msra.mxu0 0.0
    %3332 = vmatprep.subr.mxu0 0.0
    %3333 = vmatpush1.msra.mxu0 0.0
    %3334 = vmatprep.subr.mxu0 0.0
    %3335 = vmatpush1.msra.mxu0 0.0
    %3336 = vmatprep.subr.mxu0 0.0
    %3337 = vmatpush1.msra.mxu0 0.0
    %3338 = vmatprep.subr.mxu0 0.0
    %3339 = vmatpush1.msra.mxu0 0.0
    %3340 = vmatprep.subr.mxu0 0.0
    %3341 = vmatpush1.msra.mxu0 0.0
    %3342 = vmatprep.subr.mxu0 0.0
    %3343 = vmatpush1.msra.mxu0 0.0
    %3344 = vmatprep.subr.mxu0 0.0
    %3345 = vmatpush1.msra.mxu0 0.0
    %3346 = vmatprep.subr.mxu0 0.0
    %3347 = vmatpush1.msra.mxu0 0.0
    %3348 = vmatprep.subr.mxu0 0.0
    %3349 = vmatpush1.msra.mxu0 0.0
    %3350 = vmatprep.subr.mxu0 0.0
    %3351 = vmatpush1.msra.mxu0 0.0
    %3352 = vmatprep.subr.mxu0 0.0
    %3353 = vmatpush1.msra.mxu0 0.0
    %3354 = vmatprep.subr.mxu0 0.0
    %3355 = vmatpush1.msra.mxu0 0.0
    %3356 = vmatprep.subr.mxu0 0.0
    %3357 = vmatpush1.msra.mxu0 0.0
    %3358 = vmatprep.subr.mxu0 0.0
    %3359 = vmatpush1.msra.mxu0 0.0
    %3360 = vmatprep.subr.mxu0 0.0
    %3361 = vmatpush1.msra.mxu0 0.0
    %3362 = vmatprep.subr.mxu0 0.0
    %3363 = vmatpush1.msra.mxu0 0.0
    %3364 = vmatprep.subr.mxu0 0.0
    %3365 = vmatpush1.msra.mxu0 0.0
    %3366 = vmatprep.subr.mxu0 0.0
    %3367 = vmatpush1.msra.mxu0 0.0
    %3368 = vmatprep.subr.mxu0 0.0
    %3369 = vmatpush1.msra.mxu0 0.0
    %3370 = vmatprep.subr.mxu0 0.0
    %3371 = vmatpush1.msra.mxu0 0.0
    %3372 = vmatprep.subr.mxu0 0.0
    %3373 = vmatpush1.msra.mxu0 0.0
    %3374 = vmatprep.subr.mxu0 0.0
    %3375 = vmatpush1.msra.mxu0 0.0
    %3376 = vmatprep.subr.mxu0 0.0
    %3377 = vmatpush1.msra.mxu0 0.0
    %3378 = vmatprep.subr.mxu0 0.0
    %3379 = vmatpush1.msra.mxu0 0.0
    %3380 = vmatprep.mubr.f32.mxu0 0.0
    %3381 = vmatmul.mubr.f32.gmra.mrb[0].mxu0 %v3314
    %v3382 = vpop.f32.mrb[0].mxu0
    %v3383 = vadd.f32 0.0, %v3382
    %v3384 = vpop.f32.mrb[0].mxu0
    %3385 = vdwg.mxu0
    %v3387 = vsel %vm1878, %v2864, 0
    %3389 = vmatprep.subr.mxu0 0.0
    %3390 = vmatpush1.msra.mxu0 %v3162
    %3391 = vmatprep.subr.mxu0 0.0
    %3392 = vmatpush1.msra.mxu0 0.0
    %3393 = vmatprep.subr.mxu0 0.0
    %3394 = vmatpush1.msra.mxu0 0.0
    %3395 = vmatprep.subr.mxu0 0.0
    %3396 = vmatpush1.msra.mxu0 0.0
    %3397 = vmatprep.subr.mxu0 0.0
    %3398 = vmatpush1.msra.mxu0 0.0
    %3399 = vmatprep.subr.mxu0 0.0
    %3400 = vmatpush1.msra.mxu0 0.0
    %3401 = vmatprep.subr.mxu0 0.0
    %3402 = vmatpush1.msra.mxu0 0.0
    %3403 = vmatprep.subr.mxu0 0.0
    %3404 = vmatpush1.msra.mxu0 0.0
    %3405 = vmatprep.subr.mxu0 0.0
    %3406 = vmatpush1.msra.mxu0 0.0
    %3407 = vmatprep.subr.mxu0 0.0
    %3408 = vmatpush1.msra.mxu0 0.0
    %3409 = vmatprep.subr.mxu0 0.0
    %3410 = vmatpush1.msra.mxu0 0.0
    %3411 = vmatprep.subr.mxu0 0.0
    %3412 = vmatpush1.msra.mxu0 0.0
    %3413 = vmatprep.subr.mxu0 0.0
    %3414 = vmatpush1.msra.mxu0 0.0
    %3415 = vmatprep.subr.mxu0 0.0
    %3416 = vmatpush1.msra.mxu0 0.0
    %3417 = vmatprep.subr.mxu0 0.0
    %3418 = vmatpush1.msra.mxu0 0.0
    %3419 = vmatprep.subr.mxu0 0.0
    %3420 = vmatpush1.msra.mxu0 0.0
    %3421 = vmatprep.subr.mxu0 0.0
    %3422 = vmatpush1.msra.mxu0 0.0
    %3423 = vmatprep.subr.mxu0 0.0
    %3424 = vmatpush1.msra.mxu0 0.0
    %3425 = vmatprep.subr.mxu0 0.0
    %3426 = vmatpush1.msra.mxu0 0.0
    %3427 = vmatprep.subr.mxu0 0.0
    %3428 = vmatpush1.msra.mxu0 0.0
    %3429 = vmatprep.subr.mxu0 0.0
    %3430 = vmatpush1.msra.mxu0 0.0
    %3431 = vmatprep.subr.mxu0 0.0
    %3432 = vmatpush1.msra.mxu0 0.0
    %3433 = vmatprep.subr.mxu0 0.0
    %3434 = vmatpush1.msra.mxu0 0.0
    %3435 = vmatprep.subr.mxu0 0.0
    %3436 = vmatpush1.msra.mxu0 0.0
    %3437 = vmatprep.subr.mxu0 0.0
    %3438 = vmatpush1.msra.mxu0 0.0
    %3439 = vmatprep.subr.mxu0 0.0
    %3440 = vmatpush1.msra.mxu0 0.0
    %3441 = vmatprep.subr.mxu0 0.0
    %3442 = vmatpush1.msra.mxu0 0.0
    %3443 = vmatprep.subr.mxu0 0.0
    %3444 = vmatpush1.msra.mxu0 0.0
    %3445 = vmatprep.subr.mxu0 0.0
    %3446 = vmatpush1.msra.mxu0 0.0
    %3447 = vmatprep.subr.mxu0 0.0
    %3448 = vmatpush1.msra.mxu0 0.0
    %3449 = vmatprep.subr.mxu0 0.0
    %3450 = vmatpush1.msra.mxu0 0.0
    %3451 = vmatprep.subr.mxu0 0.0
    %3452 = vmatpush1.msra.mxu0 0.0
    %3453 = vmatprep.mubr.f32.mxu0 0.0
    %3454 = vmatmul.mubr.f32.gmra.mrb[0].mxu0 %v3387
    %v3455 = vpop.f32.mrb[0].mxu0
    %v3456 = vadd.f32 0.0, %v3455
    %v3457 = vpop.f32.mrb[0].mxu0
    %3458 = vdwg.mxu0
    %v3460 = vsel %vm1878, %v2937, 0
    %3462 = vmatprep.subr.mxu0 0.0
    %3463 = vmatpush1.msra.mxu0 %v3163
    %3464 = vmatprep.subr.mxu0 0.0
    %3465 = vmatpush1.msra.mxu0 0.0
    %3466 = vmatprep.subr.mxu0 0.0
    %3467 = vmatpush1.msra.mxu0 0.0
    %3468 = vmatprep.subr.mxu0 0.0
    %3469 = vmatpush1.msra.mxu0 0.0
    %3470 = vmatprep.subr.mxu0 0.0
    %3471 = vmatpush1.msra.mxu0 0.0
    %3472 = vmatprep.subr.mxu0 0.0
    %3473 = vmatpush1.msra.mxu0 0.0
    %3474 = vmatprep.subr.mxu0 0.0
    %3475 = vmatpush1.msra.mxu0 0.0
    %3476 = vmatprep.subr.mxu0 0.0
    %3477 = vmatpush1.msra.mxu0 0.0
    %3478 = vmatprep.subr.mxu0 0.0
    %3479 = vmatpush1.msra.mxu0 0.0
    %3480 = vmatprep.subr.mxu0 0.0
    %3481 = vmatpush1.msra.mxu0 0.0
    %3482 = vmatprep.subr.mxu0 0.0
    %3483 = vmatpush1.msra.mxu0 0.0
    %3484 = vmatprep.subr.mxu0 0.0
    %3485 = vmatpush1.msra.mxu0 0.0
    %3486 = vmatprep.subr.mxu0 0.0
    %3487 = vmatpush1.msra.mxu0 0.0
    %3488 = vmatprep.subr.mxu0 0.0
    %3489 = vmatpush1.msra.mxu0 0.0
    %3490 = vmatprep.subr.mxu0 0.0
    %3491 = vmatpush1.msra.mxu0 0.0
    %3492 = vmatprep.subr.mxu0 0.0
    %3493 = vmatpush1.msra.mxu0 0.0
    %3494 = vmatprep.subr.mxu0 0.0
    %3495 = vmatpush1.msra.mxu0 0.0
    %3496 = vmatprep.subr.mxu0 0.0
    %3497 = vmatpush1.msra.mxu0 0.0
    %3498 = vmatprep.subr.mxu0 0.0
    %3499 = vmatpush1.msra.mxu0 0.0
    %3500 = vmatprep.subr.mxu0 0.0
    %3501 = vmatpush1.msra.mxu0 0.0
    %3502 = vmatprep.subr.mxu0 0.0
    %3503 = vmatpush1.msra.mxu0 0.0
    %3504 = vmatprep.subr.mxu0 0.0
    %3505 = vmatpush1.msra.mxu0 0.0
    %3506 = vmatprep.subr.mxu0 0.0
    %3507 = vmatpush1.msra.mxu0 0.0
    %3508 = vmatprep.subr.mxu0 0.0
    %3509 = vmatpush1.msra.mxu0 0.0
    %3510 = vmatprep.subr.mxu0 0.0
    %3511 = vmatpush1.msra.mxu0 0.0
    %3512 = vmatprep.subr.mxu0 0.0
    %3513 = vmatpush1.msra.mxu0 0.0
    %3514 = vmatprep.subr.mxu0 0.0
    %3515 = vmatpush1.msra.mxu0 0.0
    %3516 = vmatprep.subr.mxu0 0.0
    %3517 = vmatpush1.msra.mxu0 0.0
    %3518 = vmatprep.subr.mxu0 0.0
    %3519 = vmatpush1.msra.mxu0 0.0
    %3520 = vmatprep.subr.mxu0 0.0
    %3521 = vmatpush1.msra.mxu0 0.0
    %3522 = vmatprep.subr.mxu0 0.0
    %3523 = vmatpush1.msra.mxu0 0.0
    %3524 = vmatprep.subr.mxu0 0.0
    %3525 = vmatpush1.msra.mxu0 0.0
    %3526 = vmatprep.mubr.f32.mxu0 0.0
    %3527 = vmatmul.mubr.f32.gmra.mrb[0].mxu0 %v3460
    %v3528 = vpop.f32.mrb[0].mxu0
    %v3529 = vadd.f32 0.0, %v3528
    %v3530 = vpop.f32.mrb[0].mxu0
    %3531 = vdwg.mxu0
    %v3533 = vsel %vm1878, %v3010, 0
    %3535 = vmatprep.subr.mxu0 0.0
    %3536 = vmatpush1.msra.mxu0 %v3164
    %3537 = vmatprep.subr.mxu0 0.0
    %3538 = vmatpush1.msra.mxu0 0.0
    %3539 = vmatprep.subr.mxu0 0.0
    %3540 = vmatpush1.msra.mxu0 0.0
    %3541 = vmatprep.subr.mxu0 0.0
    %3542 = vmatpush1.msra.mxu0 0.0
    %3543 = vmatprep.subr.mxu0 0.0
    %3544 = vmatpush1.msra.mxu0 0.0
    %3545 = vmatprep.subr.mxu0 0.0
    %3546 = vmatpush1.msra.mxu0 0.0
    %3547 = vmatprep.subr.mxu0 0.0
    %3548 = vmatpush1.msra.mxu0 0.0
    %3549 = vmatprep.subr.mxu0 0.0
    %3550 = vmatpush1.msra.mxu0 0.0
    %3551 = vmatprep.subr.mxu0 0.0
    %3552 = vmatpush1.msra.mxu0 0.0
    %3553 = vmatprep.subr.mxu0 0.0
    %3554 = vmatpush1.msra.mxu0 0.0
    %3555 = vmatprep.subr.mxu0 0.0
    %3556 = vmatpush1.msra.mxu0 0.0
    %3557 = vmatprep.subr.mxu0 0.0
    %3558 = vmatpush1.msra.mxu0 0.0
    %3559 = vmatprep.subr.mxu0 0.0
    %3560 = vmatpush1.msra.mxu0 0.0
    %3561 = vmatprep.subr.mxu0 0.0
    %3562 = vmatpush1.msra.mxu0 0.0
    %3563 = vmatprep.subr.mxu0 0.0
    %3564 = vmatpush1.msra.mxu0 0.0
    %3565 = vmatprep.subr.mxu0 0.0
    %3566 = vmatpush1.msra.mxu0 0.0
    %3567 = vmatprep.subr.mxu0 0.0
    %3568 = vmatpush1.msra.mxu0 0.0
    %3569 = vmatprep.subr.mxu0 0.0
    %3570 = vmatpush1.msra.mxu0 0.0
    %3571 = vmatprep.subr.mxu0 0.0
    %3572 = vmatpush1.msra.mxu0 0.0
    %3573 = vmatprep.subr.mxu0 0.0
    %3574 = vmatpush1.msra.mxu0 0.0
    %3575 = vmatprep.subr.mxu0 0.0
    %3576 = vmatpush1.msra.mxu0 0.0
    %3577 = vmatprep.subr.mxu0 0.0
    %3578 = vmatpush1.msra.mxu0 0.0
    %3579 = vmatprep.subr.mxu0 0.0
    %3580 = vmatpush1.msra.mxu0 0.0
    %3581 = vmatprep.subr.mxu0 0.0
    %3582 = vmatpush1.msra.mxu0 0.0
    %3583 = vmatprep.subr.mxu0 0.0
    %3584 = vmatpush1.msra.mxu0 0.0
    %3585 = vmatprep.subr.mxu0 0.0
    %3586 = vmatpush1.msra.mxu0 0.0
    %3587 = vmatprep.subr.mxu0 0.0
    %3588 = vmatpush1.msra.mxu0 0.0
    %3589 = vmatprep.subr.mxu0 0.0
    %3590 = vmatpush1.msra.mxu0 0.0
    %3591 = vmatprep.subr.mxu0 0.0
    %3592 = vmatpush1.msra.mxu0 0.0
    %3593 = vmatprep.subr.mxu0 0.0
    %3594 = vmatpush1.msra.mxu0 0.0
    %3595 = vmatprep.subr.mxu0 0.0
    %3596 = vmatpush1.msra.mxu0 0.0
    %3597 = vmatprep.subr.mxu0 0.0
    %3598 = vmatpush1.msra.mxu0 0.0
    %3599 = vmatprep.mubr.f32.mxu0 0.0
    %3600 = vmatmul.mubr.f32.gmra.mrb[0].mxu0 %v3533
    %v3601 = vpop.f32.mrb[0].mxu0
    %v3602 = vadd.f32 0.0, %v3601
    %v3603 = vpop.f32.mrb[0].mxu0
    %3604 = vdwg.mxu0
    %v3606 = vsel %vm1878, %v3083, 0
    %3608 = vmatprep.subr.mxu0 0.0
    %3609 = vmatpush1.msra.mxu0 %v3165
    %3610 = vmatprep.subr.mxu0 0.0
    %3611 = vmatpush1.msra.mxu0 0.0
    %3612 = vmatprep.subr.mxu0 0.0
    %3613 = vmatpush1.msra.mxu0 0.0
    %3614 = vmatprep.subr.mxu0 0.0
    %3615 = vmatpush1.msra.mxu0 0.0
    %3616 = vmatprep.subr.mxu0 0.0
    %3617 = vmatpush1.msra.mxu0 0.0
    %3618 = vmatprep.subr.mxu0 0.0
    %3619 = vmatpush1.msra.mxu0 0.0
    %3620 = vmatprep.subr.mxu0 0.0
    %3621 = vmatpush1.msra.mxu0 0.0
    %3622 = vmatprep.subr.mxu0 0.0
    %3623 = vmatpush1.msra.mxu0 0.0
    %3624 = vmatprep.subr.mxu0 0.0
    %3625 = vmatpush1.msra.mxu0 0.0
    %3626 = vmatprep.subr.mxu0 0.0
    %3627 = vmatpush1.msra.mxu0 0.0
    %3628 = vmatprep.subr.mxu0 0.0
    %3629 = vmatpush1.msra.mxu0 0.0
    %3630 = vmatprep.subr.mxu0 0.0
    %3631 = vmatpush1.msra.mxu0 0.0
    %3632 = vmatprep.subr.mxu0 0.0
    %3633 = vmatpush1.msra.mxu0 0.0
    %3634 = vmatprep.subr.mxu0 0.0
    %3635 = vmatpush1.msra.mxu0 0.0
    %3636 = vmatprep.subr.mxu0 0.0
    %3637 = vmatpush1.msra.mxu0 0.0
    %3638 = vmatprep.subr.mxu0 0.0
    %3639 = vmatpush1.msra.mxu0 0.0
    %3640 = vmatprep.subr.mxu0 0.0
    %3641 = vmatpush1.msra.mxu0 0.0
    %3642 = vmatprep.subr.mxu0 0.0
    %3643 = vmatpush1.msra.mxu0 0.0
    %3644 = vmatprep.subr.mxu0 0.0
    %3645 = vmatpush1.msra.mxu0 0.0
    %3646 = vmatprep.subr.mxu0 0.0
    %3647 = vmatpush1.msra.mxu0 0.0
    %3648 = vmatprep.subr.mxu0 0.0
    %3649 = vmatpush1.msra.mxu0 0.0
    %3650 = vmatprep.subr.mxu0 0.0
    %3651 = vmatpush1.msra.mxu0 0.0
    %3652 = vmatprep.subr.mxu0 0.0
    %3653 = vmatpush1.msra.mxu0 0.0
    %3654 = vmatprep.subr.mxu0 0.0
    %3655 = vmatpush1.msra.mxu0 0.0
    %3656 = vmatprep.subr.mxu0 0.0
    %3657 = vmatpush1.msra.mxu0 0.0
    %3658 = vmatprep.subr.mxu0 0.0
    %3659 = vmatpush1.msra.mxu0 0.0
    %3660 = vmatprep.subr.mxu0 0.0
    %3661 = vmatpush1.msra.mxu0 0.0
    %3662 = vmatprep.subr.mxu0 0.0
    %3663 = vmatpush1.msra.mxu0 0.0
    %3664 = vmatprep.subr.mxu0 0.0
    %3665 = vmatpush1.msra.mxu0 0.0
    %3666 = vmatprep.subr.mxu0 0.0
    %3667 = vmatpush1.msra.mxu0 0.0
    %3668 = vmatprep.subr.mxu0 0.0
    %3669 = vmatpush1.msra.mxu0 0.0
    %3670 = vmatprep.subr.mxu0 0.0
    %3671 = vmatpush1.msra.mxu0 0.0
    %3672 = vmatprep.mubr.f32.mxu0 0.0
    %3673 = vmatmul.mubr.f32.gmra.mrb[0].mxu0 %v3606
    %v3674 = vpop.f32.mrb[0].mxu0
    %v3675 = vadd.f32 0.0, %v3674
    %v3676 = vpop.f32.mrb[0].mxu0
    %3677 = vdwg.mxu0
    %v3679 = vsel %vm1878, %v3156, 0
    %3681 = vmatprep.subr.mxu0 0.0
    %3682 = vmatpush1.msra.mxu0 %v3166
    %3683 = vmatprep.subr.mxu0 0.0
    %3684 = vmatpush1.msra.mxu0 0.0
    %3685 = vmatprep.subr.mxu0 0.0
    %3686 = vmatpush1.msra.mxu0 0.0
    %3687 = vmatprep.subr.mxu0 0.0
    %3688 = vmatpush1.msra.mxu0 0.0
    %3689 = vmatprep.subr.mxu0 0.0
    %3690 = vmatpush1.msra.mxu0 0.0
    %3691 = vmatprep.subr.mxu0 0.0
    %3692 = vmatpush1.msra.mxu0 0.0
    %3693 = vmatprep.subr.mxu0 0.0
    %3694 = vmatpush1.msra.mxu0 0.0
    %3695 = vmatprep.subr.mxu0 0.0
    %3696 = vmatpush1.msra.mxu0 0.0
    %3697 = vmatprep.subr.mxu0 0.0
    %3698 = vmatpush1.msra.mxu0 0.0
    %3699 = vmatprep.subr.mxu0 0.0
    %3700 = vmatpush1.msra.mxu0 0.0
    %3701 = vmatprep.subr.mxu0 0.0
    %3702 = vmatpush1.msra.mxu0 0.0
    %3703 = vmatprep.subr.mxu0 0.0
    %3704 = vmatpush1.msra.mxu0 0.0
    %3705 = vmatprep.subr.mxu0 0.0
    %3706 = vmatpush1.msra.mxu0 0.0
    %3707 = vmatprep.subr.mxu0 0.0
    %3708 = vmatpush1.msra.mxu0 0.0
    %3709 = vmatprep.subr.mxu0 0.0
    %3710 = vmatpush1.msra.mxu0 0.0
    %3711 = vmatprep.subr.mxu0 0.0
    %3712 = vmatpush1.msra.mxu0 0.0
    %3713 = vmatprep.subr.mxu0 0.0
    %3714 = vmatpush1.msra.mxu0 0.0
    %3715 = vmatprep.subr.mxu0 0.0
    %3716 = vmatpush1.msra.mxu0 0.0
    %3717 = vmatprep.subr.mxu0 0.0
    %3718 = vmatpush1.msra.mxu0 0.0
    %3719 = vmatprep.subr.mxu0 0.0
    %3720 = vmatpush1.msra.mxu0 0.0
    %3721 = vmatprep.subr.mxu0 0.0
    %3722 = vmatpush1.msra.mxu0 0.0
    %3723 = vmatprep.subr.mxu0 0.0
    %3724 = vmatpush1.msra.mxu0 0.0
    %3725 = vmatprep.subr.mxu0 0.0
    %3726 = vmatpush1.msra.mxu0 0.0
    %3727 = vmatprep.subr.mxu0 0.0
    %3728 = vmatpush1.msra.mxu0 0.0
    %3729 = vmatprep.subr.mxu0 0.0
    %3730 = vmatpush1.msra.mxu0 0.0
    %3731 = vmatprep.subr.mxu0 0.0
    %3732 = vmatpush1.msra.mxu0 0.0
    %3733 = vmatprep.subr.mxu0 0.0
    %3734 = vmatpush1.msra.mxu0 0.0
    %3735 = vmatprep.subr.mxu0 0.0
    %3736 = vmatpush1.msra.mxu0 0.0
    %3737 = vmatprep.subr.mxu0 0.0
    %3738 = vmatpush1.msra.mxu0 0.0
    %3739 = vmatprep.subr.mxu0 0.0
    %3740 = vmatpush1.msra.mxu0 0.0
    %3741 = vmatprep.subr.mxu0 0.0
    %3742 = vmatpush1.msra.mxu0 0.0
    %3743 = vmatprep.subr.mxu0 0.0
    %3744 = vmatpush1.msra.mxu0 0.0
    %3745 = vmatprep.mubr.f32.mxu0 0.0
    %3746 = vmatmul.mubr.f32.gmra.mrb[0].mxu0 %v3679
    %v3747 = vpop.f32.mrb[0].mxu0
    %v3748 = vadd.f32 0.0, %v3747
    %v3749 = vpop.f32.mrb[0].mxu0
    %3750 = vdwg.mxu0
    %v3751 = vsel %vm52, %v3237, 0.0
    %v3752 = vsel %vm52, %v3310, 0.0
    %v3753 = vadd.f32 %v3751, %v3752
    %v3754 = vsel %vm52, %v3383, 0.0
    %v3755 = vadd.f32 %v3753, %v3754
    %v3756 = vsel %vm52, %v3456, 0.0
    %v3757 = vadd.f32 %v3755, %v3756
    %v3758 = vsel %vm52, %v3529, 0.0
    %v3759 = vsel %vm52, %v3602, 0.0
    %v3760 = vadd.f32 %v3758, %v3759
    %v3761 = vsel %vm52, %v3675, 0.0
    %v3762 = vadd.f32 %v3760, %v3761
    %v3763 = vsel %vm52, %v3748, 0.0
    %v3764 = vadd.f32 %v3762, %v3763
    %v3765 = vld [vmem:[%s7] sm:$0x1]
    %v3767 = vlaneseq
    %v3768 = vshrl.u32 %v3767, 7
    %v3769 = vsub.s32 0, %v3768
    %v3770 = vrot.slane %v3765, %v3769
    %v3772 = vadd.f32 %v3757, %v3770
    %v3773 = vadd.f32 %v3764, %v3770
    %v3774 = vadd.f32 %v48, %v3772
    %v3775 = vadd.f32 %v49, %v3773
    %v3776 = vld [vmem:[%s8] sm:$0x1]
    %v3777 = vld [vmem:[%s9] sm:$0x1]
    %v3778 = vsel %vm52, %v3774, 0.0
    %3779 = vadd.xlane.f32.xlu0 %v3778
    %v3780 = vpop.xlane.xlu0 %3779
    %v3781 = vsel %vm52, %v3775, 0.0
    %3782 = vadd.xlane.f32.xlu0 %v3781
    %v3783 = vpop.xlane.xlu0 %3782
    %v3784 = vmul.f32 %v3780, %v59
    %v3785 = vmul.f32 %v3783, %v59
    %v3786 = vsub.f32 %v3774, %v3784
    %v3787 = vsub.f32 %v3775, %v3785
    %v3788 = vmul.f32 %v3786, %v3786
    %v3789 = vmul.f32 %v3787, %v3787
    %v3790 = vsel %vm52, %v3788, 0.0
    %3791 = vadd.xlane.f32.xlu0 %v3790
    %v3792 = vpop.xlane.xlu0 %3791
    %v3793 = vsel %vm52, %v3789, 0.0
    %3794 = vadd.xlane.f32.xlu0 %v3793
    %v3795 = vpop.xlane.xlu0 %3794
    %v3796 = vmul.f32 %v3792, %v59
    %v3797 = vmul.f32 %v3795, %v59
    %v3798 = vadd.f32 %v3796, 1e-05
    %v3799 = vadd.f32 %v3797, 1e-05
    %v3800 = vrsqrt.pop %v3798
    %v3801 = vrsqrt.pop %v3799
    %v3802 = vmul.f32 %v3786, %v3800
    %v3803 = vmul.f32 %v3787, %v3801
    %v3805 = vlaneseq
    %v3806 = vshrl.u32 %v3805, 7
    %v3807 = vsub.s32 0, %v3806
    %v3808 = vrot.slane %v3776, %v3807
    %v3810 = vmul.f32 %v3802, %v3808
    %v3811 = vmul.f32 %v3803, %v3808
    %v3813 = vlaneseq
    %v3814 = vshrl.u32 %v3813, 7
    %v3815 = vsub.s32 0, %v3814
    %v3816 = vrot.slane %v3777, %v3815
    %v3818 = vadd.f32 %v3810, %v3816
    %v3819 = vadd.f32 %v3811, %v3816
    %v3820 = vld [vmem:[%s10] sm:$0xff]
    %v3821 = vld [vmem:[%s10 + $0x8] sm:$0xff]
    %v3822 = vld [vmem:[%s10 + $0x10] sm:$0xff]
    %v3823 = vld [vmem:[%s10 + $0x18] sm:$0xff]
    %v3824 = vld [vmem:[%s11] sm:$0x1]
    %v3826 = vlaneseq
    %v3827 = vshrl.u32 %v3826, 7
    %v3828 = vsub.s32 0, %v3827
    %v3829 = vrot.slane %v3824, %v3828
    %v3832 = vsel %vm52, %v3818, 0
    %v3835 = vsel %vm52, %v3819, 0
    %3837 = vmatprep.subr.mxu0 0.0
    %3838 = vmatpush1.msra.mxu0 %v3820
    %3839 = vmatprep.subr.mxu0 0.0
    %3840 = vmatpush1.msra.mxu0 %v3821
    %3841 = vmatprep.subr.mxu0 0.0
    %3842 = vmatpush1.msra.mxu0 %v3822
    %3843 = vmatprep.subr.mxu0 0.0
    %3844 = vmatpush1.msra.mxu0 %v3823
    %3845 = vmatprep.subr.mxu0 0.0
    %3846 = vmatpush1.msra.mxu0 0.0
    %3847 = vmatprep.subr.mxu0 0.0
    %3848 = vmatpush1.msra.mxu0 0.0
    %3849 = vmatprep.subr.mxu0 0.0
    %3850 = vmatpush1.msra.mxu0 0.0
    %3851 = vmatprep.subr.mxu0 0.0
    %3852 = vmatpush1.msra.mxu0 0.0
    %3853 = vmatprep.subr.mxu0 0.0
    %3854 = vmatpush1.msra.mxu0 0.0
    %3855 = vmatprep.subr.mxu0 0.0
    %3856 = vmatpush1.msra.mxu0 0.0
    %3857 = vmatprep.subr.mxu0 0.0
    %3858 = vmatpush1.msra.mxu0 0.0
    %3859 = vmatprep.subr.mxu0 0.0
    %3860 = vmatpush1.msra.mxu0 0.0
    %3861 = vmatprep.subr.mxu0 0.0
    %3862 = vmatpush1.msra.mxu0 0.0
    %3863 = vmatprep.subr.mxu0 0.0
    %3864 = vmatpush1.msra.mxu0 0.0
    %3865 = vmatprep.subr.mxu0 0.0
    %3866 = vmatpush1.msra.mxu0 0.0
    %3867 = vmatprep.subr.mxu0 0.0
    %3868 = vmatpush1.msra.mxu0 0.0
    %3869 = vmatprep.subr.mxu0 0.0
    %3870 = vmatpush1.msra.mxu0 0.0
    %3871 = vmatprep.subr.mxu0 0.0
    %3872 = vmatpush1.msra.mxu0 0.0
    %3873 = vmatprep.subr.mxu0 0.0
    %3874 = vmatpush1.msra.mxu0 0.0
    %3875 = vmatprep.subr.mxu0 0.0
    %3876 = vmatpush1.msra.mxu0 0.0
    %3877 = vmatprep.subr.mxu0 0.0
    %3878 = vmatpush1.msra.mxu0 0.0
    %3879 = vmatprep.subr.mxu0 0.0
    %3880 = vmatpush1.msra.mxu0 0.0
    %3881 = vmatprep.subr.mxu0 0.0
    %3882 = vmatpush1.msra.mxu0 0.0
    %3883 = vmatprep.subr.mxu0 0.0
    %3884 = vmatpush1.msra.mxu0 0.0
    %3885 = vmatprep.subr.mxu0 0.0
    %3886 = vmatpush1.msra.mxu0 0.0
    %3887 = vmatprep.subr.mxu0 0.0
    %3888 = vmatpush1.msra.mxu0 0.0
    %3889 = vmatprep.subr.mxu0 0.0
    %3890 = vmatpush1.msra.mxu0 0.0
    %3891 = vmatprep.subr.mxu0 0.0
    %3892 = vmatpush1.msra.mxu0 0.0
    %3893 = vmatprep.subr.mxu0 0.0
    %3894 = vmatpush1.msra.mxu0 0.0
    %3895 = vmatprep.subr.mxu0 0.0
    %3896 = vmatpush1.msra.mxu0 0.0
    %3897 = vmatprep.subr.mxu0 0.0
    %3898 = vmatpush1.msra.mxu0 0.0
    %3899 = vmatprep.subr.mxu0 0.0
    %3900 = vmatpush1.msra.mxu0 0.0
    %3901 = vmatprep.mubr.f32.mxu0 0.0
    %3902 = vmatmul.mubr.f32.gmra.mrb[0].mxu0 %v3832
    %v3903 = vpop.f32.mrb[0].mxu0
    %v3904 = vadd.f32 %v3829, %v3903
    %v3905 = vpop.f32.mrb[0].mxu0
    %3906 = vmatprep.mubr.f32.mxu0 0.0
    %3907 = vmatmul.mubr.f32.gmra.mrb[0].mxu0 %v3835
    %v3908 = vpop.f32.mrb[0].mxu0
    %v3909 = vadd.f32 %v3829, %v3908
    %v3910 = vpop.f32.mrb[0].mxu0
    %3911 = vdwg.mxu0
    %v3912 = vmul.f32 %v3904, 0.5
    %v3913 = vmul.f32 %v3909, 0.5
    %v3914 = vmul.f32 %v3904, 0.70710677
    %v3915 = vmul.f32 %v3909, 0.70710677
    %v3916 = verf.f32.pop %v3914
    %v3917 = verf.f32.pop %v3915
    %v3918 = vadd.f32 %v3916, 1.0
    %v3919 = vadd.f32 %v3917, 1.0
    %v3920 = vmul.f32 %v3912, %v3918
    %v3921 = vmul.f32 %v3913, %v3919
    %v3922 = vld [vmem:[%s12] sm:$0xff]
    %v3923 = vld [vmem:[%s12 + $0x8] sm:$0xff]
    %v3924 = vld [vmem:[%s12 + $0x10] sm:$0xff]
    %v3925 = vld [vmem:[%s12 + $0x18] sm:$0xff]
    %v3926 = vld [vmem:[%s12 + $0x20] sm:$0xff]
    %v3927 = vld [vmem:[%s12 + $0x28] sm:$0xff]
    %v3928 = vld [vmem:[%s12 + $0x30] sm:$0xff]
    %v3929 = vld [vmem:[%s12 + $0x38] sm:$0xff]
    %v3930 = vld [vmem:[%s12 + $0x40] sm:$0xff]
    %v3931 = vld [vmem:[%s12 + $0x48] sm:$0xff]
    %v3932 = vld [vmem:[%s12 + $0x50] sm:$0xff]
    %v3933 = vld [vmem:[%s12 + $0x58] sm:$0xff]
    %v3934 = vld [vmem:[%s12 + $0x60] sm:$0xff]
    %v3935 = vld [vmem:[%s12 + $0x68] sm:$0xff]
    %v3936 = vld [vmem:[%s12 + $0x70] sm:$0xff]
    %v3937 = vld [vmem:[%s12 + $0x78] sm:$0xff]
    %v3938 = vld [vmem:[%s13] sm:$0x1]
    %v3940 = vlaneseq
    %v3941 = vshrl.u32 %v3940, 7
    %v3942 = vsub.s32 0, %v3941
    %v3943 = vrot.slane %v3938, %v3942
    %3945 = vmatprep.subr.mxu0 0.0
    %3946 = vmatpush1.msra.mxu0 %v3922
    %3947 = vmatprep.subr.mxu0 0.0
    %3948 = vmatpush1.msra.mxu0 %v3923
    %3949 = vmatprep.subr.mxu0 0.0
    %3950 = vmatpush1.msra.mxu0 %v3924
    %3951 = vmatprep.subr.mxu0 0.0
    %3952 = vmatpush1.msra.mxu0 %v3925
    %3953 = vmatprep.subr.mxu0 0.0
    %3954 = vmatpush1.msra.mxu0 %v3926
    %3955 = vmatprep.subr.mxu0 0.0
    %3956 = vmatpush1.msra.mxu0 %v3927
    %3957 = vmatprep.subr.mxu0 0.0
    %3958 = vmatpush1.msra.mxu0 %v3928
    %3959 = vmatprep.subr.mxu0 0.0
    %3960 = vmatpush1.msra.mxu0 %v3929
    %3961 = vmatprep.subr.mxu0 0.0
    %3962 = vmatpush1.msra.mxu0 %v3930
    %3963 = vmatprep.subr.mxu0 0.0
    %3964 = vmatpush1.msra.mxu0 %v3931
    %3965 = vmatprep.subr.mxu0 0.0
    %3966 = vmatpush1.msra.mxu0 %v3932
    %3967 = vmatprep.subr.mxu0 0.0
    %3968 = vmatpush1.msra.mxu0 %v3933
    %3969 = vmatprep.subr.mxu0 0.0
    %3970 = vmatpush1.msra.mxu0 %v3934
    %3971 = vmatprep.subr.mxu0 0.0
    %3972 = vmatpush1.msra.mxu0 %v3935
    %3973 = vmatprep.subr.mxu0 0.0
    %3974 = vmatpush1.msra.mxu0 %v3936
    %3975 = vmatprep.subr.mxu0 0.0
    %3976 = vmatpush1.msra.mxu0 %v3937
    %3977 = vmatprep.subr.mxu0 0.0
    %3978 = vmatpush1.msra.mxu0 0.0
    %3979 = vmatprep.subr.mxu0 0.0
    %3980 = vmatpush1.msra.mxu0 0.0
    %3981 = vmatprep.subr.mxu0 0.0
    %3982 = vmatpush1.msra.mxu0 0.0
    %3983 = vmatprep.subr.mxu0 0.0
    %3984 = vmatpush1.msra.mxu0 0.0
    %3985 = vmatprep.subr.mxu0 0.0
    %3986 = vmatpush1.msra.mxu0 0.0
    %3987 = vmatprep.subr.mxu0 0.0
    %3988 = vmatpush1.msra.mxu0 0.0
    %3989 = vmatprep.subr.mxu0 0.0
    %3990 = vmatpush1.msra.mxu0 0.0
    %3991 = vmatprep.subr.mxu0 0.0
    %3992 = vmatpush1.msra.mxu0 0.0
    %3993 = vmatprep.subr.mxu0 0.0
    %3994 = vmatpush1.msra.mxu0 0.0
    %3995 = vmatprep.subr.mxu0 0.0
    %3996 = vmatpush1.msra.mxu0 0.0
    %3997 = vmatprep.subr.mxu0 0.0
    %3998 = vmatpush1.msra.mxu0 0.0
    %3999 = vmatprep.subr.mxu0 0.0
    %4000 = vmatpush1.msra.mxu0 0.0
    %4001 = vmatprep.subr.mxu0 0.0
    %4002 = vmatpush1.msra.mxu0 0.0
    %4003 = vmatprep.subr.mxu0 0.0
    %4004 = vmatpush1.msra.mxu0 0.0
    %4005 = vmatprep.subr.mxu0 0.0
    %4006 = vmatpush1.msra.mxu0 0.0
    %4007 = vmatprep.subr.mxu0 0.0
    %4008 = vmatpush1.msra.mxu0 0.0
    %4009 = vmatprep.mubr.f32.mxu0 0.0
    %4010 = vmatmul.mubr.f32.gmra.mrb[0].mxu0 %v3920
    %v4011 = vpop.f32.mrb[0].mxu0
    %v4012 = vadd.f32 %v3943, %v4011
    %v4013 = vpop.f32.mrb[0].mxu0
    %4014 = vmatprep.mubr.f32.mxu0 0.0
    %4015 = vmatmul.mubr.f32.gmra.mrb[0].mxu0 %v3921
    %v4016 = vpop.f32.mrb[0].mxu0
    %v4017 = vadd.f32 %v3943, %v4016
    %v4018 = vpop.f32.mrb[0].mxu0
    %4019 = vdwg.mxu0
    %v4020 = vadd.f32 %v3774, %v4012
    %v4021 = vadd.f32 %v3775, %v4017
    %4022 = vst.msk [vmem:[#allocation2] sm:$0xff] %vm52, %v4020
    %4023 = vst.msk [vmem:[#allocation2 + $0x8] sm:$0xff] %vm52, %v4021
    // Predicated region
    $region58: #{tpu_custom_call.1} parent=1 // pred_check
      _
    $region59: #{tpu_custom_call.1} parent=1 // pred_check_branch
      %4025 = sbr.rel (0) target = $region61
    $region60: #{tpu_custom_call.1} parent=1 // pred_region
      %s4027 = ssub.s32 256, 256
      %4028 = vsyncadd [#allocation3], %s4027
      %s4029 = sshll.u32 [#allocation2], 4
      %s4030 = int_to_ptr.vmem [resolvable:$true] %s4029
      %4035 = dma.vmem_to_hbm [thread:$0]  %s4030, 256, %s14, [#allocation3], 128, 128, 8
    $region61: #{tpu_custom_call.1} parent=1 // pred_fallthru
      _
    // Predicated region
    $region62: #{tpu_custom_call.1} parent=1 // pred_check
      _
    $region63: #{tpu_custom_call.1} parent=1 // pred_check_branch
      %4037 = sbr.rel (0) target = $region65
    $region64: #{tpu_custom_call.1} parent=1 // pred_region
      %4038 = dma.done [#allocation3], 256
    $region65: #{tpu_custom_call.1} parent=1 // pred_fallthru
      _
    %4039 = vsyncpa [#allocation3], 1

</llo_original>
